<compile_context>
chip_gen: v7x
topology: tpu7x:2x2x1
jax: 0.10.0
libtpu: 0.0.40
codegen_flags: <defaults>
</compile_context>

<pallas_src>
import functools

import jax
import jax.numpy as jnp
from jax import lax
from jax.experimental import pallas as pl
from jax.experimental.pallas import tpu as pltpu


# ----------------------------------------------------------------------------
# Fused Pallas kernel (one batch sample per grid step)
# ----------------------------------------------------------------------------
def _make_fused_kernel(h, w, c, eps):
    hw = h * w

    def reflect_pad_store(img, pad_ref):
        # img: (h, w, c) value.  Writes the ReflectionPad2d(1) image into
        # pad_ref (h+2, w+2, c) with one aligned full-ref store; every border
        # row/col comes from in-register values (no store->load round trip).
        rows = jnp.concatenate(
            [img[1:2, :, :], img, img[h - 2:h - 1, :, :]], axis=0)      # (h+2, w, c)
        full = jnp.concatenate(
            [rows[:, 1:2, :], rows, rows[:, w - 2:w - 1, :]], axis=1)   # (h+2, w+2, c)
        pad_ref[...] = full.astype(pad_ref.dtype)

    def conv3x3(src_ref, w_ref):
        # 3x3 conv as 3 MXU matmuls (one per kernel row kh), each
        # (HW, 3C) x (3C, C), f32 accumulation.  Per kh the padded row slab is
        # read once (aligned leading-axis slice of the scratch); the 3 kw
        # shifts are register-level slices concatenated on the channel axis.
        acc = jnp.zeros((hw, c), jnp.float32)
        for kh in range(3):
            slab = src_ref[kh:kh + h, :, :]                               # (h, w+2, c)
            patch = jnp.concatenate(
                [slab[:, kw:kw + w, :] for kw in range(3)], axis=-1)      # (h, w, 3c)
            acc = acc + jnp.dot(patch.reshape(hw, 3 * c), w_ref[kh],
                                preferred_element_type=jnp.float32)
        return acc

    def adailn_scale_shift(y, bias, rho, gamma, beta):
        # y: (hw, c) f32 conv output WITHOUT bias.  Returns per-channel (A, B)
        # such that AdaILN(y + bias, gamma, beta) == y * A + B.
        # (bias cancels in the IN term; LN stats are derived from the IN
        #  stats; ddof=1 denominators match torch.var's unbiased default.)
        # NOTE(perf): centered sum-of-squares kept (one extra (hw,c) temp) for
        # numerical safety vs. sum(y*y) - hw*mu^2.
        mu = jnp.mean(y, axis=0, keepdims=True)                    # (1, c)
        cen = y - mu
        css = jnp.sum(cen * cen, axis=0, keepdims=True)            # (1, c)
        rin = lax.rsqrt(css * (1.0 / (hw - 1)) + eps)              # (1, c)
        mu_z = mu + bias                                           # means incl. bias
        ln_mu = jnp.mean(mu_z, axis=1, keepdims=True)              # (1, 1)
        d = mu_z - ln_mu
        ln_css = jnp.sum(css + hw * d * d, axis=1, keepdims=True)  # (1, 1)
        rln = lax.rsqrt(ln_css * (1.0 / (hw * c - 1)) + eps)       # (1, 1)
        a = gamma * (rho * rin + (1.0 - rho) * rln)
        b_shift = gamma * ((1.0 - rho) * rln * (bias - ln_mu)
                           - rho * rin * mu) + beta
        return a, b_shift

    def kernel(x_ref, w1_ref, b1_ref, rho1_ref, w2_ref, b2_ref, rho2_ref,
               gamma_ref, beta_ref, out_ref, pad_ref):
        gamma = gamma_ref[...]                                     # (1, c)
        beta = beta_ref[...]                                       # (1, c)

        # ---- stage 0: reflect-pad x into the VMEM scratch (MXU dtype) ----
        reflect_pad_store(x_ref[...], pad_ref)

        # ---- stage 1: conv1 + AdaILN + ReLU (stays in VMEM) ----
        y1 = conv3x3(pad_ref, w1_ref)                              # (hw, c) f32
        a1, s1 = adailn_scale_shift(y1, b1_ref[...], rho1_ref[...], gamma, beta)
        h1 = jnp.maximum(y1 * a1 + s1, 0.0)                        # (hw, c) f32

        # ---- reflect-pad h1, reusing the SAME scratch (conv1 reads done) ----
        reflect_pad_store(h1.reshape(h, w, c), pad_ref)

        # ---- stage 2: conv2 + AdaILN + residual (residual in f32) ----
        y2 = conv3x3(pad_ref, w2_ref)
        a2, s2 = adailn_scale_shift(y2, b2_ref[...], rho2_ref[...], gamma, beta)
        out = (y2 * a2 + s2).reshape(h, w, c) + x_ref[...]
        out_ref[...] = out.astype(out_ref.dtype)

    return kernel


def _weights_grouped(w_oihw):
    # torch conv weight (O, I, 3, 3) -> (3, 3*I, O); row kh, column kw*I + ci.
    o, i, _, _ = w_oihw.shape
    return jnp.transpose(w_oihw, (2, 3, 1, 0)).reshape(3, 3 * i, o)


def resnet_adailn_block(x, gamma, beta, params, eps=1e-5,
                        mxu_dtype=jnp.bfloat16):
    """x: (B, H, W, C) NHWC.  gamma, beta: (B, C).  Returns (B, H, W, C) f32.

    mxu_dtype is the MXU-feed / activation-staging dtype (bf16 by default for
    v5e/v6e/v7x peak); accumulation, statistics and the residual stay f32.
    """
    b, h, w, c = x.shape
    assert h >= 2 and w >= 2, "reflection pad of width 1 needs H, W >= 2"
    hw = h * w
    hp, wp = h + 2, w + 2

    w1 = _weights_grouped(params["w1"]).astype(mxu_dtype)     # (3, 3c, c)
    w2 = _weights_grouped(params["w2"]).astype(mxu_dtype)
    b1 = params["b1"].reshape(1, c).astype(jnp.float32)
    b2 = params["b2"].reshape(1, c).astype(jnp.float32)
    rho1 = params["rho1"].reshape(1, c).astype(jnp.float32)
    rho2 = params["rho2"].reshape(1, c).astype(jnp.float32)
    gamma3 = gamma.reshape(b, 1, c).astype(jnp.float32)
    beta3 = beta.reshape(b, 1, c).astype(jnp.float32)
    x32 = x.astype(jnp.float32)

    kernel = _make_fused_kernel(h, w, c, eps)

    act_bytes = int(jnp.dtype(mxu_dtype).itemsize)
    # Per-grid-step VMEM working set: padded-activation scratch + double
    # buffered x/out/weight blocks + in-flight f32 value temporaries.
    need = (hp * wp * c * act_bytes
            + 2 * 2 * hw * c * 4
            + 2 * 2 * 9 * c * c * act_bytes
            + 8 * hw * c * 4
            + (1 << 20))
    try:
        vmem_cap = int(getattr(pltpu.get_tpu_info(), "vmem_capacity_bytes",
                               64 * 2 ** 20))
    except Exception:
        vmem_cap = 64 * 2 ** 20                  # conservative (v7x) fallback
    vmem_limit = int(min(int(0.9 * vmem_cap), max(32 * 2 ** 20, need)))

    flops = 2 * 2 * 9 * b * hw * c * c           # two 3x3 convs
    bytes_accessed = (2 * b * hw * c * 4         # x in + out
                      + 2 * 9 * c * c * act_bytes
                      + (4 * c + 2 * b * c) * 4)

    grid_spec = pltpu.PrefetchScalarGridSpec(
        num_scalar_prefetch=0,
        grid=(b,),
        in_specs=[
            pl.BlockSpec((None, h, w, c), lambda i: (i, 0, 0, 0)),   # x (f32)
            pl.BlockSpec((3, 3 * c, c), lambda i: (0, 0, 0)),        # w1 (per-kh)
            pl.BlockSpec((1, c), lambda i: (0, 0)),                  # b1
            pl.BlockSpec((1, c), lambda i: (0, 0)),                  # rho1
            pl.BlockSpec((3, 3 * c, c), lambda i: (0, 0, 0)),        # w2
            pl.BlockSpec((1, c), lambda i: (0, 0)),                  # b2
            pl.BlockSpec((1, c), lambda i: (0, 0)),                  # rho2
            pl.BlockSpec((None, 1, c), lambda i: (i, 0, 0)),         # gamma
            pl.BlockSpec((None, 1, c), lambda i: (i, 0, 0)),         # beta
        ],
        out_specs=pl.BlockSpec((None, h, w, c), lambda i: (i, 0, 0, 0)),
        scratch_shapes=[pltpu.VMEM((hp, wp, c), mxu_dtype)],         # padded act
    )

    out = pl.pallas_call(
        kernel,
        out_shape=jax.ShapeDtypeStruct((b, h, w, c), jnp.float32),
        grid_spec=grid_spec,
        compiler_params=pltpu.CompilerParams(
            dimension_semantics=("parallel",),
            vmem_limit_bytes=vmem_limit),
        cost_estimate=pl.CostEstimate(
            flops=flops, transcendentals=4 * b * c,
            bytes_accessed=bytes_accessed),
    )(x32, w1, b1, rho1, w2, b2, rho2, gamma3, beta3)

    return out


# ----------------------------------------------------------------------------
# Pure-JAX reference (mirrors the PyTorch module) for verification
# ----------------------------------------------------------------------------
def _ref_adailn(x, gamma, beta, rho, eps):
    in_mean = x.mean(axis=(1, 2), keepdims=True)
    in_var = x.var(axis=(1, 2), keepdims=True, ddof=1)
    ln_mean = x.mean(axis=(1, 2, 3), keepdims=True)
    ln_var = x.var(axis=(1, 2, 3), keepdims=True, ddof=1)
    in_val = (x - in_mean) / jnp.sqrt(in_var + eps)
    ln_val = (x - ln_mean) / jnp.sqrt(ln_var + eps)
    r = rho.reshape(1, 1, 1, -1)
    out = r * in_val + (1.0 - r) * ln_val
    return out * gamma[:, None, None, :] + beta[:, None, None, :]


def _ref_conv3x3_reflect(x, w_oihw, bias):
    xp = jnp.pad(x, ((0, 0), (1, 1), (1, 1), (0, 0)), mode="reflect")
    w_hwio = jnp.transpose(w_oihw, (2, 3, 1, 0))
    y = jax.lax.conv_general_dilated(
        xp, w_hwio, window_strides=(1, 1), padding="VALID",
        dimension_numbers=("NHWC", "HWIO", "NHWC"))
    return y + bias.reshape(1, 1, 1, -1)


def ref_forward(x, gamma, beta, params, eps=1e-5):
    out = _ref_conv3x3_reflect(x, params["w1"], params["b1"])
    out = _ref_adailn(out, gamma, beta, params["rho1"], eps)
    out = jnp.maximum(out, 0.0)
    out = _ref_conv3x3_reflect(out, params["w2"], params["b2"])
    out = _ref_adailn(out, gamma, beta, params["rho2"], eps)
    return x + out


# ----------------------------------------------------------------------------
if __name__ == "__main__":
    B, C, H, W = 2, 4, 16, 16
    key = jax.random.PRNGKey(0)
    kx, kg, kb, kw1, kb1, kw2, kb2 = jax.random.split(key, 7)

    # inputs (NHWC); the PyTorch-equivalent NCHW input would be (B, C, H, W)
    x = jax.random.normal(kx, (B, H, W, C), dtype=jnp.float32)
    gamma = jax.random.normal(kg, (B, C), dtype=jnp.float32)
    beta = jax.random.normal(kb, (B, C), dtype=jnp.float32)

    # deterministic parameters (torch conv weight layout: (Cout, Cin, 3, 3))
    params = {
        "w1": 0.1 * jax.random.normal(kw1, (C, C, 3, 3), dtype=jnp.float32),
        "b1": 0.05 * jax.random.normal(kb1, (C,), dtype=jnp.float32),
        "w2": 0.1 * jax.random.normal(kw2, (C, C, 3, 3), dtype=jnp.float32),
        "b2": 0.05 * jax.random.normal(kb2, (C,), dtype=jnp.float32),
        "rho1": jnp.full((C,), 0.9, dtype=jnp.float32),
        "rho2": jnp.full((C,), 0.9, dtype=jnp.float32),
    }

    ref = jax.block_until_ready(ref_forward(x, gamma, beta, params))

    # (1) f32 MXU path: strict check of the fused conv/AdaILN/residual math.
    fwd_f32 = jax.jit(functools.partial(resnet_adailn_block, eps=1e-5,
                                        mxu_dtype=jnp.float32))
    out_f32 = jax.block_until_ready(fwd_f32(x, gamma, beta, params))
    assert out_f32.shape == (B, H, W, C)
    assert jnp.allclose(out_f32, ref, rtol=2e-4, atol=2e-4), (
        float(jnp.max(jnp.abs(out_f32 - ref))))

    # (2) default bf16 MXU-feed path (production config): loose tolerance,
    #     since inputs/weights are quantized to bf16 before the MXU.
    fwd_bf16 = jax.jit(functools.partial(resnet_adailn_block, eps=1e-5))
    out_bf16 = jax.block_until_ready(fwd_bf16(x, gamma, beta, params))
    assert out_bf16.shape == (B, H, W, C)
    max_err = float(jnp.max(jnp.abs(out_bf16 - ref)))
    assert max_err < 0.25, max_err

    print("KERNEL_OK")
</pallas_src>

<mosaic_0001>
module attributes {stable_mosaic.version = 11 : i64} {
  func.func @kernel(%arg0: i32, %arg1: memref<1x16x16x4xf32, #tpu.memory_space<vmem>>, %arg2: memref<3x12x4xf32, #tpu.memory_space<vmem>>, %arg3: memref<1x4xf32, #tpu.memory_space<vmem>>, %arg4: memref<1x4xf32, #tpu.memory_space<vmem>>, %arg5: memref<3x12x4xf32, #tpu.memory_space<vmem>>, %arg6: memref<1x4xf32, #tpu.memory_space<vmem>>, %arg7: memref<1x4xf32, #tpu.memory_space<vmem>>, %arg8: memref<1x1x4xf32, #tpu.memory_space<vmem>>, %arg9: memref<1x1x4xf32, #tpu.memory_space<vmem>>, %arg10: memref<1x16x16x4xf32, #tpu.memory_space<vmem>>, %arg11: memref<18x18x4xf32, #tpu.memory_space<vmem>>) attributes {dimension_semantics = [#tpu.dimension_semantics<parallel>], iteration_bounds = array<i64: 2>, scalar_prefetch = 0 : i64, scratch_operands = 1 : i64, tpu.core_type = #tpu.core_type<tc>, window_params = [{transform_indices = @transform_0, window_bounds = array<i64: 1, 16, 16, 4>}, {pipeline_mode = #tpu.pipeline_mode<synchronous>, transform_indices = @transform_1, window_bounds = array<i64: 3, 12, 4>}, {pipeline_mode = #tpu.pipeline_mode<synchronous>, transform_indices = @transform_2, window_bounds = array<i64: 1, 4>}, {pipeline_mode = #tpu.pipeline_mode<synchronous>, transform_indices = @transform_3, window_bounds = array<i64: 1, 4>}, {pipeline_mode = #tpu.pipeline_mode<synchronous>, transform_indices = @transform_4, window_bounds = array<i64: 3, 12, 4>}, {pipeline_mode = #tpu.pipeline_mode<synchronous>, transform_indices = @transform_5, window_bounds = array<i64: 1, 4>}, {pipeline_mode = #tpu.pipeline_mode<synchronous>, transform_indices = @transform_6, window_bounds = array<i64: 1, 4>}, {transform_indices = @transform_7, window_bounds = array<i64: 1, 1, 4>}, {transform_indices = @transform_8, window_bounds = array<i64: 1, 1, 4>}, {transform_indices = @transform_9, window_bounds = array<i64: 1, 16, 16, 4>}]} {
    %c0 = arith.constant 0 : index
    %c0_0 = arith.constant 0 : index
    %c0_1 = arith.constant 0 : index
    %0 = vector.load %arg8[%c0, %c0_0, %c0_1] : memref<1x1x4xf32, #tpu.memory_space<vmem>>, vector<1x1x4xf32>
    %1 = vector.shape_cast %0 : vector<1x1x4xf32> to vector<1x4xf32>
    %c0_2 = arith.constant 0 : index
    %c0_3 = arith.constant 0 : index
    %c0_4 = arith.constant 0 : index
    %2 = vector.load %arg9[%c0_2, %c0_3, %c0_4] : memref<1x1x4xf32, #tpu.memory_space<vmem>>, vector<1x1x4xf32>
    %3 = vector.shape_cast %2 : vector<1x1x4xf32> to vector<1x4xf32>
    %c0_5 = arith.constant 0 : index
    %c0_6 = arith.constant 0 : index
    %c0_7 = arith.constant 0 : index
    %c0_8 = arith.constant 0 : index
    %4 = vector.load %arg1[%c0_5, %c0_6, %c0_7, %c0_8] : memref<1x16x16x4xf32, #tpu.memory_space<vmem>>, vector<1x16x16x4xf32>
    %5 = vector.shape_cast %4 : vector<1x16x16x4xf32> to vector<16x16x4xf32>
    %6 = vector.extract_strided_slice %5 {offsets = [1, 0, 0], sizes = [1, 16, 4], strides = [1, 1, 1]} : vector<16x16x4xf32> to vector<1x16x4xf32>
    %7 = vector.extract_strided_slice %5 {offsets = [14, 0, 0], sizes = [1, 16, 4], strides = [1, 1, 1]} : vector<16x16x4xf32> to vector<1x16x4xf32>
    %8 = tpu.concatenate %6, %5, %7 in 0 : vector<1x16x4xf32>, vector<16x16x4xf32>, vector<1x16x4xf32> -> vector<18x16x4xf32>
    %9 = vector.extract_strided_slice %8 {offsets = [0, 1, 0], sizes = [18, 1, 4], strides = [1, 1, 1]} : vector<18x16x4xf32> to vector<18x1x4xf32>
    %10 = vector.extract_strided_slice %8 {offsets = [0, 14, 0], sizes = [18, 1, 4], strides = [1, 1, 1]} : vector<18x16x4xf32> to vector<18x1x4xf32>
    %11 = tpu.concatenate %9, %8, %10 in 1 : vector<18x1x4xf32>, vector<18x16x4xf32>, vector<18x1x4xf32> -> vector<18x18x4xf32>
    %c0_9 = arith.constant 0 : index
    %c0_10 = arith.constant 0 : index
    %c0_11 = arith.constant 0 : index
    %12 = vector.load %arg11[%c0_9, %c0_10, %c0_11] : memref<18x18x4xf32, #tpu.memory_space<vmem>>, vector<18x18x4xf32>
    tpu.vector_store %arg11[%c0_9, %c0_10, %c0_11], %11 {strides = array<i32>} : memref<18x18x4xf32, #tpu.memory_space<vmem>>, vector<18x18x4xf32>,
    %cst = arith.constant 0.000000e+00 : f32
    %13 = vector.broadcast %cst : f32 to vector<256x4xf32>
    %c0_12 = arith.constant 0 : index
    %c0_13 = arith.constant 0 : index
    %c0_14 = arith.constant 0 : index
    %14 = vector.load %arg11[%c0_12, %c0_13, %c0_14] : memref<18x18x4xf32, #tpu.memory_space<vmem>>, vector<16x18x4xf32>
    %15 = vector.extract_strided_slice %14 {offsets = [0, 0, 0], sizes = [16, 16, 4], strides = [1, 1, 1]} : vector<16x18x4xf32> to vector<16x16x4xf32>
    %16 = vector.extract_strided_slice %14 {offsets = [0, 1, 0], sizes = [16, 16, 4], strides = [1, 1, 1]} : vector<16x18x4xf32> to vector<16x16x4xf32>
    %17 = vector.extract_strided_slice %14 {offsets = [0, 2, 0], sizes = [16, 16, 4], strides = [1, 1, 1]} : vector<16x18x4xf32> to vector<16x16x4xf32>
    %18 = tpu.concatenate %15, %16, %17 in 2 : vector<16x16x4xf32>, vector<16x16x4xf32>, vector<16x16x4xf32> -> vector<16x16x12xf32>
    %19 = vector.shape_cast %18 : vector<16x16x12xf32> to vector<256x12xf32>
    %c0_15 = arith.constant 0 : index
    %c0_16 = arith.constant 0 : index
    %c0_17 = arith.constant 0 : index
    %20 = vector.load %arg2[%c0_15, %c0_16, %c0_17] : memref<3x12x4xf32, #tpu.memory_space<vmem>>, vector<1x12x4xf32>
    %21 = vector.shape_cast %20 : vector<1x12x4xf32> to vector<12x4xf32>
    %cst_18 = arith.constant dense<0.000000e+00> : vector<256x4xf32>
    %22 = tpu.matmul %19, %21, %cst_18 {dimension_numbers = #tpu.dot_dimension_numbers<[1], [0], [0], [1], [0, 0, 1, 1], [], []>} : vector<256x12xf32>, vector<12x4xf32>, vector<256x4xf32> -> vector<256x4xf32>
    %23 = arith.addf %13, %22 : vector<256x4xf32>
    %c1 = arith.constant 1 : index
    %c0_19 = arith.constant 0 : index
    %c0_20 = arith.constant 0 : index
    %24 = vector.load %arg11[%c1, %c0_19, %c0_20] : memref<18x18x4xf32, #tpu.memory_space<vmem>>, vector<16x18x4xf32>
    %25 = vector.extract_strided_slice %24 {offsets = [0, 0, 0], sizes = [16, 16, 4], strides = [1, 1, 1]} : vector<16x18x4xf32> to vector<16x16x4xf32>
    %26 = vector.extract_strided_slice %24 {offsets = [0, 1, 0], sizes = [16, 16, 4], strides = [1, 1, 1]} : vector<16x18x4xf32> to vector<16x16x4xf32>
    %27 = vector.extract_strided_slice %24 {offsets = [0, 2, 0], sizes = [16, 16, 4], strides = [1, 1, 1]} : vector<16x18x4xf32> to vector<16x16x4xf32>
    %28 = tpu.concatenate %25, %26, %27 in 2 : vector<16x16x4xf32>, vector<16x16x4xf32>, vector<16x16x4xf32> -> vector<16x16x12xf32>
    %29 = vector.shape_cast %28 : vector<16x16x12xf32> to vector<256x12xf32>
    %c1_21 = arith.constant 1 : index
    %c0_22 = arith.constant 0 : index
    %c0_23 = arith.constant 0 : index
    %30 = vector.load %arg2[%c1_21, %c0_22, %c0_23] : memref<3x12x4xf32, #tpu.memory_space<vmem>>, vector<1x12x4xf32>
    %31 = vector.shape_cast %30 : vector<1x12x4xf32> to vector<12x4xf32>
    %cst_24 = arith.constant dense<0.000000e+00> : vector<256x4xf32>
    %32 = tpu.matmul %29, %31, %cst_24 {dimension_numbers = #tpu.dot_dimension_numbers<[1], [0], [0], [1], [0, 0, 1, 1], [], []>} : vector<256x12xf32>, vector<12x4xf32>, vector<256x4xf32> -> vector<256x4xf32>
    %33 = arith.addf %23, %32 : vector<256x4xf32>
    %c2 = arith.constant 2 : index
    %c0_25 = arith.constant 0 : index
    %c0_26 = arith.constant 0 : index
    %34 = vector.load %arg11[%c2, %c0_25, %c0_26] : memref<18x18x4xf32, #tpu.memory_space<vmem>>, vector<16x18x4xf32>
    %35 = vector.extract_strided_slice %34 {offsets = [0, 0, 0], sizes = [16, 16, 4], strides = [1, 1, 1]} : vector<16x18x4xf32> to vector<16x16x4xf32>
    %36 = vector.extract_strided_slice %34 {offsets = [0, 1, 0], sizes = [16, 16, 4], strides = [1, 1, 1]} : vector<16x18x4xf32> to vector<16x16x4xf32>
    %37 = vector.extract_strided_slice %34 {offsets = [0, 2, 0], sizes = [16, 16, 4], strides = [1, 1, 1]} : vector<16x18x4xf32> to vector<16x16x4xf32>
    %38 = tpu.concatenate %35, %36, %37 in 2 : vector<16x16x4xf32>, vector<16x16x4xf32>, vector<16x16x4xf32> -> vector<16x16x12xf32>
    %39 = vector.shape_cast %38 : vector<16x16x12xf32> to vector<256x12xf32>
    %c2_27 = arith.constant 2 : index
    %c0_28 = arith.constant 0 : index
    %c0_29 = arith.constant 0 : index
    %40 = vector.load %arg2[%c2_27, %c0_28, %c0_29] : memref<3x12x4xf32, #tpu.memory_space<vmem>>, vector<1x12x4xf32>
    %41 = vector.shape_cast %40 : vector<1x12x4xf32> to vector<12x4xf32>
    %cst_30 = arith.constant dense<0.000000e+00> : vector<256x4xf32>
    %42 = tpu.matmul %39, %41, %cst_30 {dimension_numbers = #tpu.dot_dimension_numbers<[1], [0], [0], [1], [0, 0, 1, 1], [], []>} : vector<256x12xf32>, vector<12x4xf32>, vector<256x4xf32> -> vector<256x4xf32>
    %43 = arith.addf %33, %42 : vector<256x4xf32>
    %c0_31 = arith.constant 0 : index
    %c0_32 = arith.constant 0 : index
    %44 = vector.load %arg3[%c0_31, %c0_32] : memref<1x4xf32, #tpu.memory_space<vmem>>, vector<1x4xf32>
    %c0_33 = arith.constant 0 : index
    %c0_34 = arith.constant 0 : index
    %45 = vector.load %arg4[%c0_33, %c0_34] : memref<1x4xf32, #tpu.memory_space<vmem>>, vector<1x4xf32>
    %cst_35 = arith.constant dense<0.000000e+00> : vector<4xf32>
    %46 = vector.multi_reduction <add>, %43, %cst_35 [0] : vector<256x4xf32> to vector<4xf32>
    %47 = vector.shape_cast %46 : vector<4xf32> to vector<1x4xf32>
    %cst_36 = arith.constant 2.560000e+02 : f32
    %48 = vector.broadcast %cst_36 : f32 to vector<1x4xf32>
    %49 = arith.divf %47, %48 : vector<1x4xf32>
    %50 = vector.broadcast %49 : vector<1x4xf32> to vector<256x4xf32>
    %51 = arith.subf %43, %50 : vector<256x4xf32>
    %52 = arith.mulf %51, %51 : vector<256x4xf32>
    %cst_37 = arith.constant dense<0.000000e+00> : vector<4xf32>
    %53 = vector.multi_reduction <add>, %52, %cst_37 [0] : vector<256x4xf32> to vector<4xf32>
    %54 = vector.shape_cast %53 : vector<4xf32> to vector<1x4xf32>
    %cst_38 = arith.constant 0.00392156886 : f32
    %55 = vector.broadcast %cst_38 : f32 to vector<1x4xf32>
    %56 = arith.mulf %54, %55 : vector<1x4xf32>
    %cst_39 = arith.constant 9.99999974E-6 : f32
    %57 = vector.broadcast %cst_39 : f32 to vector<1x4xf32>
    %58 = arith.addf %56, %57 : vector<1x4xf32>
    %59 = math.rsqrt %58 : vector<1x4xf32>
    %60 = arith.addf %49, %44 : vector<1x4xf32>
    %cst_40 = arith.constant dense<0.000000e+00> : vector<1xf32>
    %61 = vector.multi_reduction <add>, %60, %cst_40 [1] : vector<1x4xf32> to vector<1xf32>
    %62 = vector.shape_cast %61 : vector<1xf32> to vector<1x1xf32>
    %cst_41 = arith.constant 4.000000e+00 : f32
    %63 = vector.broadcast %cst_41 : f32 to vector<1x1xf32>
    %64 = arith.divf %62, %63 : vector<1x1xf32>
    %65 = vector.broadcast %64 : vector<1x1xf32> to vector<1x4xf32>
    %66 = arith.subf %60, %65 : vector<1x4xf32>
    %cst_42 = arith.constant 2.560000e+02 : f32
    %67 = vector.broadcast %cst_42 : f32 to vector<1x4xf32>
    %68 = arith.mulf %67, %66 : vector<1x4xf32>
    %69 = arith.mulf %68, %66 : vector<1x4xf32>
    %70 = arith.addf %54, %69 : vector<1x4xf32>
    %cst_43 = arith.constant dense<0.000000e+00> : vector<1xf32>
    %71 = vector.multi_reduction <add>, %70, %cst_43 [1] : vector<1x4xf32> to vector<1xf32>
    %72 = vector.shape_cast %71 : vector<1xf32> to vector<1x1xf32>
    %cst_44 = arith.constant 9.77517105E-4 : f32
    %73 = vector.broadcast %cst_44 : f32 to vector<1x1xf32>
    %74 = arith.mulf %72, %73 : vector<1x1xf32>
    %cst_45 = arith.constant 9.99999974E-6 : f32
    %75 = vector.broadcast %cst_45 : f32 to vector<1x1xf32>
    %76 = arith.addf %74, %75 : vector<1x1xf32>
    %77 = math.rsqrt %76 : vector<1x1xf32>
    %78 = arith.mulf %45, %59 : vector<1x4xf32>
    %cst_46 = arith.constant 1.000000e+00 : f32
    %79 = vector.broadcast %cst_46 : f32 to vector<1x4xf32>
    %80 = arith.subf %79, %45 : vector<1x4xf32>
    %81 = vector.broadcast %77 : vector<1x1xf32> to vector<1x4xf32>
    %82 = arith.mulf %80, %81 : vector<1x4xf32>
    %83 = arith.addf %78, %82 : vector<1x4xf32>
    %84 = arith.mulf %1, %83 : vector<1x4xf32>
    %cst_47 = arith.constant 1.000000e+00 : f32
    %85 = vector.broadcast %cst_47 : f32 to vector<1x4xf32>
    %86 = arith.subf %85, %45 : vector<1x4xf32>
    %87 = vector.broadcast %77 : vector<1x1xf32> to vector<1x4xf32>
    %88 = arith.mulf %86, %87 : vector<1x4xf32>
    %89 = vector.broadcast %64 : vector<1x1xf32> to vector<1x4xf32>
    %90 = arith.subf %44, %89 : vector<1x4xf32>
    %91 = arith.mulf %88, %90 : vector<1x4xf32>
    %92 = arith.mulf %45, %59 : vector<1x4xf32>
    %93 = arith.mulf %92, %49 : vector<1x4xf32>
    %94 = arith.subf %91, %93 : vector<1x4xf32>
    %95 = arith.mulf %1, %94 : vector<1x4xf32>
    %96 = arith.addf %95, %3 : vector<1x4xf32>
    %97 = vector.broadcast %84 : vector<1x4xf32> to vector<256x4xf32>
    %98 = arith.mulf %43, %97 : vector<256x4xf32>
    %99 = vector.broadcast %96 : vector<1x4xf32> to vector<256x4xf32>
    %100 = arith.addf %98, %99 : vector<256x4xf32>
    %cst_48 = arith.constant 0.000000e+00 : f32
    %101 = vector.broadcast %cst_48 : f32 to vector<256x4xf32>
    %102 = arith.maximumf %100, %101 : vector<256x4xf32>
    %103 = vector.shape_cast %102 : vector<256x4xf32> to vector<16x16x4xf32>
    %104 = vector.extract_strided_slice %103 {offsets = [1, 0, 0], sizes = [1, 16, 4], strides = [1, 1, 1]} : vector<16x16x4xf32> to vector<1x16x4xf32>
    %105 = vector.extract_strided_slice %103 {offsets = [14, 0, 0], sizes = [1, 16, 4], strides = [1, 1, 1]} : vector<16x16x4xf32> to vector<1x16x4xf32>
    %106 = tpu.concatenate %104, %103, %105 in 0 : vector<1x16x4xf32>, vector<16x16x4xf32>, vector<1x16x4xf32> -> vector<18x16x4xf32>
    %107 = vector.extract_strided_slice %106 {offsets = [0, 1, 0], sizes = [18, 1, 4], strides = [1, 1, 1]} : vector<18x16x4xf32> to vector<18x1x4xf32>
    %108 = vector.extract_strided_slice %106 {offsets = [0, 14, 0], sizes = [18, 1, 4], strides = [1, 1, 1]} : vector<18x16x4xf32> to vector<18x1x4xf32>
    %109 = tpu.concatenate %107, %106, %108 in 1 : vector<18x1x4xf32>, vector<18x16x4xf32>, vector<18x1x4xf32> -> vector<18x18x4xf32>
    %c0_49 = arith.constant 0 : index
    %c0_50 = arith.constant 0 : index
    %c0_51 = arith.constant 0 : index
    %110 = vector.load %arg11[%c0_49, %c0_50, %c0_51] : memref<18x18x4xf32, #tpu.memory_space<vmem>>, vector<18x18x4xf32>
    tpu.vector_store %arg11[%c0_49, %c0_50, %c0_51], %109 {strides = array<i32>} : memref<18x18x4xf32, #tpu.memory_space<vmem>>, vector<18x18x4xf32>,
    %cst_52 = arith.constant 0.000000e+00 : f32
    %111 = vector.broadcast %cst_52 : f32 to vector<256x4xf32>
    %c0_53 = arith.constant 0 : index
    %c0_54 = arith.constant 0 : index
    %c0_55 = arith.constant 0 : index
    %112 = vector.load %arg11[%c0_53, %c0_54, %c0_55] : memref<18x18x4xf32, #tpu.memory_space<vmem>>, vector<16x18x4xf32>
    %113 = vector.extract_strided_slice %112 {offsets = [0, 0, 0], sizes = [16, 16, 4], strides = [1, 1, 1]} : vector<16x18x4xf32> to vector<16x16x4xf32>
    %114 = vector.extract_strided_slice %112 {offsets = [0, 1, 0], sizes = [16, 16, 4], strides = [1, 1, 1]} : vector<16x18x4xf32> to vector<16x16x4xf32>
    %115 = vector.extract_strided_slice %112 {offsets = [0, 2, 0], sizes = [16, 16, 4], strides = [1, 1, 1]} : vector<16x18x4xf32> to vector<16x16x4xf32>
    %116 = tpu.concatenate %113, %114, %115 in 2 : vector<16x16x4xf32>, vector<16x16x4xf32>, vector<16x16x4xf32> -> vector<16x16x12xf32>
    %117 = vector.shape_cast %116 : vector<16x16x12xf32> to vector<256x12xf32>
    %c0_56 = arith.constant 0 : index
    %c0_57 = arith.constant 0 : index
    %c0_58 = arith.constant 0 : index
    %118 = vector.load %arg5[%c0_56, %c0_57, %c0_58] : memref<3x12x4xf32, #tpu.memory_space<vmem>>, vector<1x12x4xf32>
    %119 = vector.shape_cast %118 : vector<1x12x4xf32> to vector<12x4xf32>
    %cst_59 = arith.constant dense<0.000000e+00> : vector<256x4xf32>
    %120 = tpu.matmul %117, %119, %cst_59 {dimension_numbers = #tpu.dot_dimension_numbers<[1], [0], [0], [1], [0, 0, 1, 1], [], []>} : vector<256x12xf32>, vector<12x4xf32>, vector<256x4xf32> -> vector<256x4xf32>
    %121 = arith.addf %111, %120 : vector<256x4xf32>
    %c1_60 = arith.constant 1 : index
    %c0_61 = arith.constant 0 : index
    %c0_62 = arith.constant 0 : index
    %122 = vector.load %arg11[%c1_60, %c0_61, %c0_62] : memref<18x18x4xf32, #tpu.memory_space<vmem>>, vector<16x18x4xf32>
    %123 = vector.extract_strided_slice %122 {offsets = [0, 0, 0], sizes = [16, 16, 4], strides = [1, 1, 1]} : vector<16x18x4xf32> to vector<16x16x4xf32>
    %124 = vector.extract_strided_slice %122 {offsets = [0, 1, 0], sizes = [16, 16, 4], strides = [1, 1, 1]} : vector<16x18x4xf32> to vector<16x16x4xf32>
    %125 = vector.extract_strided_slice %122 {offsets = [0, 2, 0], sizes = [16, 16, 4], strides = [1, 1, 1]} : vector<16x18x4xf32> to vector<16x16x4xf32>
    %126 = tpu.concatenate %123, %124, %125 in 2 : vector<16x16x4xf32>, vector<16x16x4xf32>, vector<16x16x4xf32> -> vector<16x16x12xf32>
    %127 = vector.shape_cast %126 : vector<16x16x12xf32> to vector<256x12xf32>
    %c1_63 = arith.constant 1 : index
    %c0_64 = arith.constant 0 : index
    %c0_65 = arith.constant 0 : index
    %128 = vector.load %arg5[%c1_63, %c0_64, %c0_65] : memref<3x12x4xf32, #tpu.memory_space<vmem>>, vector<1x12x4xf32>
    %129 = vector.shape_cast %128 : vector<1x12x4xf32> to vector<12x4xf32>
    %cst_66 = arith.constant dense<0.000000e+00> : vector<256x4xf32>
    %130 = tpu.matmul %127, %129, %cst_66 {dimension_numbers = #tpu.dot_dimension_numbers<[1], [0], [0], [1], [0, 0, 1, 1], [], []>} : vector<256x12xf32>, vector<12x4xf32>, vector<256x4xf32> -> vector<256x4xf32>
    %131 = arith.addf %121, %130 : vector<256x4xf32>
    %c2_67 = arith.constant 2 : index
    %c0_68 = arith.constant 0 : index
    %c0_69 = arith.constant 0 : index
    %132 = vector.load %arg11[%c2_67, %c0_68, %c0_69] : memref<18x18x4xf32, #tpu.memory_space<vmem>>, vector<16x18x4xf32>
    %133 = vector.extract_strided_slice %132 {offsets = [0, 0, 0], sizes = [16, 16, 4], strides = [1, 1, 1]} : vector<16x18x4xf32> to vector<16x16x4xf32>
    %134 = vector.extract_strided_slice %132 {offsets = [0, 1, 0], sizes = [16, 16, 4], strides = [1, 1, 1]} : vector<16x18x4xf32> to vector<16x16x4xf32>
    %135 = vector.extract_strided_slice %132 {offsets = [0, 2, 0], sizes = [16, 16, 4], strides = [1, 1, 1]} : vector<16x18x4xf32> to vector<16x16x4xf32>
    %136 = tpu.concatenate %133, %134, %135 in 2 : vector<16x16x4xf32>, vector<16x16x4xf32>, vector<16x16x4xf32> -> vector<16x16x12xf32>
    %137 = vector.shape_cast %136 : vector<16x16x12xf32> to vector<256x12xf32>
    %c2_70 = arith.constant 2 : index
    %c0_71 = arith.constant 0 : index
    %c0_72 = arith.constant 0 : index
    %138 = vector.load %arg5[%c2_70, %c0_71, %c0_72] : memref<3x12x4xf32, #tpu.memory_space<vmem>>, vector<1x12x4xf32>
    %139 = vector.shape_cast %138 : vector<1x12x4xf32> to vector<12x4xf32>
    %cst_73 = arith.constant dense<0.000000e+00> : vector<256x4xf32>
    %140 = tpu.matmul %137, %139, %cst_73 {dimension_numbers = #tpu.dot_dimension_numbers<[1], [0], [0], [1], [0, 0, 1, 1], [], []>} : vector<256x12xf32>, vector<12x4xf32>, vector<256x4xf32> -> vector<256x4xf32>
    %141 = arith.addf %131, %140 : vector<256x4xf32>
    %c0_74 = arith.constant 0 : index
    %c0_75 = arith.constant 0 : index
    %142 = vector.load %arg6[%c0_74, %c0_75] : memref<1x4xf32, #tpu.memory_space<vmem>>, vector<1x4xf32>
    %c0_76 = arith.constant 0 : index
    %c0_77 = arith.constant 0 : index
    %143 = vector.load %arg7[%c0_76, %c0_77] : memref<1x4xf32, #tpu.memory_space<vmem>>, vector<1x4xf32>
    %cst_78 = arith.constant dense<0.000000e+00> : vector<4xf32>
    %144 = vector.multi_reduction <add>, %141, %cst_78 [0] : vector<256x4xf32> to vector<4xf32>
    %145 = vector.shape_cast %144 : vector<4xf32> to vector<1x4xf32>
    %cst_79 = arith.constant 2.560000e+02 : f32
    %146 = vector.broadcast %cst_79 : f32 to vector<1x4xf32>
    %147 = arith.divf %145, %146 : vector<1x4xf32>
    %148 = vector.broadcast %147 : vector<1x4xf32> to vector<256x4xf32>
    %149 = arith.subf %141, %148 : vector<256x4xf32>
    %150 = arith.mulf %149, %149 : vector<256x4xf32>
    %cst_80 = arith.constant dense<0.000000e+00> : vector<4xf32>
    %151 = vector.multi_reduction <add>, %150, %cst_80 [0] : vector<256x4xf32> to vector<4xf32>
    %152 = vector.shape_cast %151 : vector<4xf32> to vector<1x4xf32>
    %cst_81 = arith.constant 0.00392156886 : f32
    %153 = vector.broadcast %cst_81 : f32 to vector<1x4xf32>
    %154 = arith.mulf %152, %153 : vector<1x4xf32>
    %cst_82 = arith.constant 9.99999974E-6 : f32
    %155 = vector.broadcast %cst_82 : f32 to vector<1x4xf32>
    %156 = arith.addf %154, %155 : vector<1x4xf32>
    %157 = math.rsqrt %156 : vector<1x4xf32>
    %158 = arith.addf %147, %142 : vector<1x4xf32>
    %cst_83 = arith.constant dense<0.000000e+00> : vector<1xf32>
    %159 = vector.multi_reduction <add>, %158, %cst_83 [1] : vector<1x4xf32> to vector<1xf32>
    %160 = vector.shape_cast %159 : vector<1xf32> to vector<1x1xf32>
    %cst_84 = arith.constant 4.000000e+00 : f32
    %161 = vector.broadcast %cst_84 : f32 to vector<1x1xf32>
    %162 = arith.divf %160, %161 : vector<1x1xf32>
    %163 = vector.broadcast %162 : vector<1x1xf32> to vector<1x4xf32>
    %164 = arith.subf %158, %163 : vector<1x4xf32>
    %cst_85 = arith.constant 2.560000e+02 : f32
    %165 = vector.broadcast %cst_85 : f32 to vector<1x4xf32>
    %166 = arith.mulf %165, %164 : vector<1x4xf32>
    %167 = arith.mulf %166, %164 : vector<1x4xf32>
    %168 = arith.addf %152, %167 : vector<1x4xf32>
    %cst_86 = arith.constant dense<0.000000e+00> : vector<1xf32>
    %169 = vector.multi_reduction <add>, %168, %cst_86 [1] : vector<1x4xf32> to vector<1xf32>
    %170 = vector.shape_cast %169 : vector<1xf32> to vector<1x1xf32>
    %cst_87 = arith.constant 9.77517105E-4 : f32
    %171 = vector.broadcast %cst_87 : f32 to vector<1x1xf32>
    %172 = arith.mulf %170, %171 : vector<1x1xf32>
    %cst_88 = arith.constant 9.99999974E-6 : f32
    %173 = vector.broadcast %cst_88 : f32 to vector<1x1xf32>
    %174 = arith.addf %172, %173 : vector<1x1xf32>
    %175 = math.rsqrt %174 : vector<1x1xf32>
    %176 = arith.mulf %143, %157 : vector<1x4xf32>
    %cst_89 = arith.constant 1.000000e+00 : f32
    %177 = vector.broadcast %cst_89 : f32 to vector<1x4xf32>
    %178 = arith.subf %177, %143 : vector<1x4xf32>
    %179 = vector.broadcast %175 : vector<1x1xf32> to vector<1x4xf32>
    %180 = arith.mulf %178, %179 : vector<1x4xf32>
    %181 = arith.addf %176, %180 : vector<1x4xf32>
    %182 = arith.mulf %1, %181 : vector<1x4xf32>
    %cst_90 = arith.constant 1.000000e+00 : f32
    %183 = vector.broadcast %cst_90 : f32 to vector<1x4xf32>
    %184 = arith.subf %183, %143 : vector<1x4xf32>
    %185 = vector.broadcast %175 : vector<1x1xf32> to vector<1x4xf32>
    %186 = arith.mulf %184, %185 : vector<1x4xf32>
    %187 = vector.broadcast %162 : vector<1x1xf32> to vector<1x4xf32>
    %188 = arith.subf %142, %187 : vector<1x4xf32>
    %189 = arith.mulf %186, %188 : vector<1x4xf32>
    %190 = arith.mulf %143, %157 : vector<1x4xf32>
    %191 = arith.mulf %190, %147 : vector<1x4xf32>
    %192 = arith.subf %189, %191 : vector<1x4xf32>
    %193 = arith.mulf %1, %192 : vector<1x4xf32>
    %194 = arith.addf %193, %3 : vector<1x4xf32>
    %195 = vector.broadcast %182 : vector<1x4xf32> to vector<256x4xf32>
    %196 = arith.mulf %141, %195 : vector<256x4xf32>
    %197 = vector.broadcast %194 : vector<1x4xf32> to vector<256x4xf32>
    %198 = arith.addf %196, %197 : vector<256x4xf32>
    %199 = vector.shape_cast %198 : vector<256x4xf32> to vector<16x16x4xf32>
    %c0_91 = arith.constant 0 : index
    %c0_92 = arith.constant 0 : index
    %c0_93 = arith.constant 0 : index
    %c0_94 = arith.constant 0 : index
    %200 = vector.load %arg1[%c0_91, %c0_92, %c0_93, %c0_94] : memref<1x16x16x4xf32, #tpu.memory_space<vmem>>, vector<1x16x16x4xf32>
    %201 = vector.shape_cast %200 : vector<1x16x16x4xf32> to vector<16x16x4xf32>
    %202 = arith.addf %199, %201 : vector<16x16x4xf32>
    %c0_95 = arith.constant 0 : index
    %c0_96 = arith.constant 0 : index
    %c0_97 = arith.constant 0 : index
    %c0_98 = arith.constant 0 : index
    %203 = vector.load %arg10[%c0_95, %c0_96, %c0_97, %c0_98] : memref<1x16x16x4xf32, #tpu.memory_space<vmem>>, vector<1x16x16x4xf32>
    %204 = vector.shape_cast %203 : vector<1x16x16x4xf32> to vector<16x16x4xf32>
    %205 = vector.shape_cast %202 : vector<16x16x4xf32> to vector<1x16x16x4xf32>
    tpu.vector_store %arg10[%c0_95, %c0_96, %c0_97, %c0_98], %205 {strides = array<i32>} : memref<1x16x16x4xf32, #tpu.memory_space<vmem>>, vector<1x16x16x4xf32>,
    return
  }
  func.func @transform_0(%arg0: i32) -> (i32, i32, i32, i32) {
    %c0_i32 = arith.constant 0 : i32
    %c0_i32_0 = arith.constant 0 : i32
    %c0_i32_1 = arith.constant 0 : i32
    %c0_i32_2 = arith.constant 0 : i32
    return %arg0, %c0_i32, %c0_i32_0, %c0_i32_1 : i32, i32, i32, i32
  }
  func.func @transform_1(%arg0: i32) -> (i32, i32, i32) {
    %c0_i32 = arith.constant 0 : i32
    %c0_i32_0 = arith.constant 0 : i32
    %c0_i32_1 = arith.constant 0 : i32
    %c0_i32_2 = arith.constant 0 : i32
    return %c0_i32, %c0_i32_0, %c0_i32_1 : i32, i32, i32
  }
  func.func @transform_2(%arg0: i32) -> (i32, i32) {
    %c0_i32 = arith.constant 0 : i32
    %c0_i32_0 = arith.constant 0 : i32
    %c0_i32_1 = arith.constant 0 : i32
    return %c0_i32, %c0_i32_0 : i32, i32
  }
  func.func @transform_3(%arg0: i32) -> (i32, i32) {
    %c0_i32 = arith.constant 0 : i32
    %c0_i32_0 = arith.constant 0 : i32
    %c0_i32_1 = arith.constant 0 : i32
    return %c0_i32, %c0_i32_0 : i32, i32
  }
  func.func @transform_4(%arg0: i32) -> (i32, i32, i32) {
    %c0_i32 = arith.constant 0 : i32
    %c0_i32_0 = arith.constant 0 : i32
    %c0_i32_1 = arith.constant 0 : i32
    %c0_i32_2 = arith.constant 0 : i32
    return %c0_i32, %c0_i32_0, %c0_i32_1 : i32, i32, i32
  }
  func.func @transform_5(%arg0: i32) -> (i32, i32) {
    %c0_i32 = arith.constant 0 : i32
    %c0_i32_0 = arith.constant 0 : i32
    %c0_i32_1 = arith.constant 0 : i32
    return %c0_i32, %c0_i32_0 : i32, i32
  }
  func.func @transform_6(%arg0: i32) -> (i32, i32) {
    %c0_i32 = arith.constant 0 : i32
    %c0_i32_0 = arith.constant 0 : i32
    %c0_i32_1 = arith.constant 0 : i32
    return %c0_i32, %c0_i32_0 : i32, i32
  }
  func.func @transform_7(%arg0: i32) -> (i32, i32, i32) {
    %c0_i32 = arith.constant 0 : i32
    %c0_i32_0 = arith.constant 0 : i32
    %c0_i32_1 = arith.constant 0 : i32
    return %arg0, %c0_i32, %c0_i32_0 : i32, i32, i32
  }
  func.func @transform_8(%arg0: i32) -> (i32, i32, i32) {
    %c0_i32 = arith.constant 0 : i32
    %c0_i32_0 = arith.constant 0 : i32
    %c0_i32_1 = arith.constant 0 : i32
    return %arg0, %c0_i32, %c0_i32_0 : i32, i32, i32
  }
  func.func @transform_9(%arg0: i32) -> (i32, i32, i32, i32) {
    %c0_i32 = arith.constant 0 : i32
    %c0_i32_0 = arith.constant 0 : i32
    %c0_i32_1 = arith.constant 0 : i32
    %c0_i32_2 = arith.constant 0 : i32
    return %arg0, %c0_i32, %c0_i32_0, %c0_i32_1 : i32, i32, i32, i32
  }
}

</mosaic_0001>

<llo_original>
// kernel: resnet_adailn_block.1
$region0: #{resnet_adailn_block.1}
  #allocation0 [shape = 'u32[]', space=smem, size = 0x4, offset = 0x4, fixed_abs, tag = 'smem constant byte address 0x4 - core index']
  #allocation1 [shape = 'u32[144,128]{1,0:T(1,128)}', space=vmem, size = 0x12000, scoped, tag = 'internal scratch']
  #allocation2 [shape = 'f32[18,18,4]{2,1,0:T(8,128)}', space=vmem, size = 0x36000, scoped, tag = 'scratch operand']
  %s0 = inlined_call_operand.vmem [shape: f32[2,16,16,4], index: 0, kind: input, shape index: {}]
  %s1 = inlined_call_operand.vmem [shape: f32[3,12,4], index: 1, kind: input, shape index: {}]
  %s2 = inlined_call_operand.vmem [shape: f32[1,4], index: 2, kind: input, shape index: {}]
  %s3 = inlined_call_operand.vmem [shape: f32[1,4], index: 3, kind: input, shape index: {}]
  %s4 = inlined_call_operand.vmem [shape: f32[3,12,4], index: 4, kind: input, shape index: {}]
  %s5 = inlined_call_operand.vmem [shape: f32[1,4], index: 5, kind: input, shape index: {}]
  %s6 = inlined_call_operand.vmem [shape: f32[1,4], index: 6, kind: input, shape index: {}]
  %s7 = inlined_call_operand.vmem [shape: f32[2,1,4], index: 7, kind: input, shape index: {}]
  %s8 = inlined_call_operand.vmem [shape: f32[2,1,4], index: 8, kind: input, shape index: {}]
  %s9 = inlined_call_operand.vmem [shape: f32[2,16,16,4], index: 9, kind: output, shape index: {}]
  %s10 = sld [smem:[#allocation0]]
  $region69: #{resnet_adailn_block.1} parent=0
    _
  %s12 = ssub.s32 1, %s10
  %s13 = scalar_select 0, %s12, %s10
  loop: start=0, step=1, limit=4
  $region2: #{resnet_adailn_block.1} parent=0 // loop_pre_header
    _
  $region3: #{resnet_adailn_block.1} parent=0 // loop_header
    %s15 = sphi 0, %s19
    %p16 = scmp.ge.s32.totalorder %s15, 4
    %s25 = sphi 0, %s27
    %s28 = sphi 0, %s25
    %s29 = sphi 0, %s28
    %s45 = sphi 0, %s29
    %s49 = sphi 0, %s49
    %s51 = sphi 0, %s49
    %s52 = sphi 0, %s51
    %s66 = sphi 0, %s52
    %s70 = sphi 0, %s70
    %s72 = sphi 0, %s70
    %s73 = sphi 0, %s72
    %s87 = sphi 0, %s73
    %s91 = sphi 0, %s91
    %s93 = sphi 0, %s91
    %s94 = sphi 0, %s93
    %s108 = sphi 0, %s94
    %s112 = sphi 0, %s112
    %s114 = sphi 0, %s112
    %s115 = sphi 0, %s114
    %s129 = sphi 0, %s115
    %s133 = sphi 0, %s133
    %s135 = sphi 0, %s133
    %s136 = sphi 0, %s135
    %s150 = sphi 0, %s136
    %s154 = sphi 0, %s154
    %s156 = sphi 0, %s154
    %s157 = sphi 0, %s156
    %s171 = sphi 0, %s157
    %s177 = sphi 0, %s179
    %s180 = sphi 0, %s177
    %s181 = sphi 0, %s180
    %s197 = sphi 0, %s181
    %s203 = sphi 0, %s205
    %s206 = sphi 0, %s203
    %s207 = sphi 0, %s206
    %s223 = sphi 0, %s207
    %s229 = sphi 0, %s231
    %s232 = sphi 0, %s229
    %s233 = sphi 0, %s232
    %s249 = sphi 0, %s233
  $region4: #{resnet_adailn_block.1} parent=0 // loop_header_branch
    %18 = sbr.rel (%p16) target = $region8
  $region5: #{resnet_adailn_block.1} parent=0 // loop_body
    %s20 = ssub.s32 %s15, 1
    %s21 = ssub.s32 %s15, 2
    %s22 = sadd.s32 %s15, 1
    %s23 = ssub.s32 %s15, %s22
    %p24 = scmp.eq.s32.totalorder %s23, 0
    %s26 = sadd.s32 %s25, 1
    %s27 = scalar_select %p24, %s25, %s26
    %p30 = pneg %p24
    %p31 = scmp.eq.s32.totalorder %s15, 1
    %p32 = por %p30, %p31
    %p33 = scmp.ne.s32.totalorder %s25, %s28
    %p34 = scmp.eq.s32.totalorder %s15, 0
    %p35 = por %p33, %p34
    %p36 = scmp.ne.s32.totalorder %s25, %s28
    %p37 = scmp.eq.s32.totalorder %s20, 1
    %p38 = por %p36, %p37
    %p39 = scmp.ne.s32.totalorder %s28, %s29
    %p40 = scmp.eq.s32.totalorder %s20, 0
    %p41 = por %p39, %p40
    %p42 = scmp.ne.s32.totalorder %s28, %s29
    %p43 = scmp.eq.s32.totalorder %s21, 1
    %p44 = por %p42, %p43
    %p46 = scmp.ne.s32.totalorder %s29, %s45
    %p47 = scmp.eq.s32.totalorder %s21, 0
    %p48 = por %p46, %p47
    %s50 = sadd.s32 %s49, 1
    %p53 = scmp.eq.s32.totalorder %s15, 1
    %p54 = scmp.ne.s32.totalorder %s49, %s51
    %p55 = scmp.eq.s32.totalorder %s15, 0
    %p56 = por %p54, %p55
    %p57 = scmp.ne.s32.totalorder %s49, %s51
    %p58 = scmp.eq.s32.totalorder %s20, 1
    %p59 = por %p57, %p58
    %p60 = scmp.ne.s32.totalorder %s51, %s52
    %p61 = scmp.eq.s32.totalorder %s20, 0
    %p62 = por %p60, %p61
    %p63 = scmp.ne.s32.totalorder %s51, %s52
    %p64 = scmp.eq.s32.totalorder %s21, 1
    %p65 = por %p63, %p64
    %p67 = scmp.ne.s32.totalorder %s52, %s66
    %p68 = scmp.eq.s32.totalorder %s21, 0
    %p69 = por %p67, %p68
    %s71 = sadd.s32 %s70, 1
    %p74 = scmp.eq.s32.totalorder %s15, 1
    %p75 = scmp.ne.s32.totalorder %s70, %s72
    %p76 = scmp.eq.s32.totalorder %s15, 0
    %p77 = por %p75, %p76
    %p78 = scmp.ne.s32.totalorder %s70, %s72
    %p79 = scmp.eq.s32.totalorder %s20, 1
    %p80 = por %p78, %p79
    %p81 = scmp.ne.s32.totalorder %s72, %s73
    %p82 = scmp.eq.s32.totalorder %s20, 0
    %p83 = por %p81, %p82
    %p84 = scmp.ne.s32.totalorder %s72, %s73
    %p85 = scmp.eq.s32.totalorder %s21, 1
    %p86 = por %p84, %p85
    %p88 = scmp.ne.s32.totalorder %s73, %s87
    %p89 = scmp.eq.s32.totalorder %s21, 0
    %p90 = por %p88, %p89
    %s92 = sadd.s32 %s91, 1
    %p95 = scmp.eq.s32.totalorder %s15, 1
    %p96 = scmp.ne.s32.totalorder %s91, %s93
    %p97 = scmp.eq.s32.totalorder %s15, 0
    %p98 = por %p96, %p97
    %p99 = scmp.ne.s32.totalorder %s91, %s93
    %p100 = scmp.eq.s32.totalorder %s20, 1
    %p101 = por %p99, %p100
    %p102 = scmp.ne.s32.totalorder %s93, %s94
    %p103 = scmp.eq.s32.totalorder %s20, 0
    %p104 = por %p102, %p103
    %p105 = scmp.ne.s32.totalorder %s93, %s94
    %p106 = scmp.eq.s32.totalorder %s21, 1
    %p107 = por %p105, %p106
    %p109 = scmp.ne.s32.totalorder %s94, %s108
    %p110 = scmp.eq.s32.totalorder %s21, 0
    %p111 = por %p109, %p110
    %s113 = sadd.s32 %s112, 1
    %p116 = scmp.eq.s32.totalorder %s15, 1
    %p117 = scmp.ne.s32.totalorder %s112, %s114
    %p118 = scmp.eq.s32.totalorder %s15, 0
    %p119 = por %p117, %p118
    %p120 = scmp.ne.s32.totalorder %s112, %s114
    %p121 = scmp.eq.s32.totalorder %s20, 1
    %p122 = por %p120, %p121
    %p123 = scmp.ne.s32.totalorder %s114, %s115
    %p124 = scmp.eq.s32.totalorder %s20, 0
    %p125 = por %p123, %p124
    %p126 = scmp.ne.s32.totalorder %s114, %s115
    %p127 = scmp.eq.s32.totalorder %s21, 1
    %p128 = por %p126, %p127
    %p130 = scmp.ne.s32.totalorder %s115, %s129
    %p131 = scmp.eq.s32.totalorder %s21, 0
    %p132 = por %p130, %p131
    %s134 = sadd.s32 %s133, 1
    %p137 = scmp.eq.s32.totalorder %s15, 1
    %p138 = scmp.ne.s32.totalorder %s133, %s135
    %p139 = scmp.eq.s32.totalorder %s15, 0
    %p140 = por %p138, %p139
    %p141 = scmp.ne.s32.totalorder %s133, %s135
    %p142 = scmp.eq.s32.totalorder %s20, 1
    %p143 = por %p141, %p142
    %p144 = scmp.ne.s32.totalorder %s135, %s136
    %p145 = scmp.eq.s32.totalorder %s20, 0
    %p146 = por %p144, %p145
    %p147 = scmp.ne.s32.totalorder %s135, %s136
    %p148 = scmp.eq.s32.totalorder %s21, 1
    %p149 = por %p147, %p148
    %p151 = scmp.ne.s32.totalorder %s136, %s150
    %p152 = scmp.eq.s32.totalorder %s21, 0
    %p153 = por %p151, %p152
    %s155 = sadd.s32 %s154, 1
    %p158 = scmp.eq.s32.totalorder %s15, 1
    %p159 = scmp.ne.s32.totalorder %s154, %s156
    %p160 = scmp.eq.s32.totalorder %s15, 0
    %p161 = por %p159, %p160
    %p162 = scmp.ne.s32.totalorder %s154, %s156
    %p163 = scmp.eq.s32.totalorder %s20, 1
    %p164 = por %p162, %p163
    %p165 = scmp.ne.s32.totalorder %s156, %s157
    %p166 = scmp.eq.s32.totalorder %s20, 0
    %p167 = por %p165, %p166
    %p168 = scmp.ne.s32.totalorder %s156, %s157
    %p169 = scmp.eq.s32.totalorder %s21, 1
    %p170 = por %p168, %p169
    %p172 = scmp.ne.s32.totalorder %s157, %s171
    %p173 = scmp.eq.s32.totalorder %s21, 0
    %p174 = por %p172, %p173
    %s175 = ssub.s32 %s15, %s22
    %p176 = scmp.eq.s32.totalorder %s175, 0
    %s178 = sadd.s32 %s177, 1
    %s179 = scalar_select %p176, %s177, %s178
    %p182 = pneg %p176
    %p183 = scmp.eq.s32.totalorder %s15, 1
    %p184 = por %p182, %p183
    %p185 = scmp.ne.s32.totalorder %s177, %s180
    %p186 = scmp.eq.s32.totalorder %s15, 0
    %p187 = por %p185, %p186
    %p188 = scmp.ne.s32.totalorder %s177, %s180
    %p189 = scmp.eq.s32.totalorder %s20, 1
    %p190 = por %p188, %p189
    %p191 = scmp.ne.s32.totalorder %s180, %s181
    %p192 = scmp.eq.s32.totalorder %s20, 0
    %p193 = por %p191, %p192
    %p194 = scmp.ne.s32.totalorder %s180, %s181
    %p195 = scmp.eq.s32.totalorder %s21, 1
    %p196 = por %p194, %p195
    %p198 = scmp.ne.s32.totalorder %s181, %s197
    %p199 = scmp.eq.s32.totalorder %s21, 0
    %p200 = por %p198, %p199
    %s201 = ssub.s32 %s15, %s22
    %p202 = scmp.eq.s32.totalorder %s201, 0
    %s204 = sadd.s32 %s203, 1
    %s205 = scalar_select %p202, %s203, %s204
    %p208 = pneg %p202
    %p209 = scmp.eq.s32.totalorder %s15, 1
    %p210 = por %p208, %p209
    %p211 = scmp.ne.s32.totalorder %s203, %s206
    %p212 = scmp.eq.s32.totalorder %s15, 0
    %p213 = por %p211, %p212
    %p214 = scmp.ne.s32.totalorder %s203, %s206
    %p215 = scmp.eq.s32.totalorder %s20, 1
    %p216 = por %p214, %p215
    %p217 = scmp.ne.s32.totalorder %s206, %s207
    %p218 = scmp.eq.s32.totalorder %s20, 0
    %p219 = por %p217, %p218
    %p220 = scmp.ne.s32.totalorder %s206, %s207
    %p221 = scmp.eq.s32.totalorder %s21, 1
    %p222 = por %p220, %p221
    %p224 = scmp.ne.s32.totalorder %s207, %s223
    %p225 = scmp.eq.s32.totalorder %s21, 0
    %p226 = por %p224, %p225
    %s227 = ssub.s32 %s15, %s22
    %p228 = scmp.eq.s32.totalorder %s227, 0
    %s230 = sadd.s32 %s229, 1
    %s231 = scalar_select %p228, %s229, %s230
    %p234 = pneg %p228
    %p235 = scmp.eq.s32.totalorder %s15, 1
    %p236 = por %p234, %p235
    %p237 = scmp.ne.s32.totalorder %s229, %s232
    %p238 = scmp.eq.s32.totalorder %s15, 0
    %p239 = por %p237, %p238
    %p240 = scmp.ne.s32.totalorder %s229, %s232
    %p241 = scmp.eq.s32.totalorder %s20, 1
    %p242 = por %p240, %p241
    %p243 = scmp.ne.s32.totalorder %s232, %s233
    %p244 = scmp.eq.s32.totalorder %s20, 0
    %p245 = por %p243, %p244
    %p246 = scmp.ne.s32.totalorder %s232, %s233
    %p247 = scmp.eq.s32.totalorder %s21, 1
    %p248 = por %p246, %p247
    %p250 = scmp.ne.s32.totalorder %s233, %s249
    %p251 = scmp.eq.s32.totalorder %s21, 0
    %p252 = por %p250, %p251
    %p253 = scmp.le.s32.totalorder 1, %s15
    %p254 = scmp.lt.s32.totalorder %s15, 3
    %p255 = pnand %p253, %p254
    %p256 = pneg %p255
    // Predicated region
    $region9: #{resnet_adailn_block.1} parent=5 // pred_check
      _
    $region10: #{resnet_adailn_block.1} parent=5 // pred_check_branch
      %258 = sbr.rel (%p255) target = $region12
    $region11: #{resnet_adailn_block.1} parent=5 // pred_region
      %s259 = ssub.s32 %s15, 1
      // Predicated region
      $region13: #{resnet_adailn_block.1} parent=11 // pred_check
        %p260 = pneg %p62
      $region14: #{resnet_adailn_block.1} parent=11 // pred_check_branch
        %262 = sbr.rel (%p260) target = $region16
      $region15: #{resnet_adailn_block.1} parent=11 // pred_region
        _
      $region16: #{resnet_adailn_block.1} parent=11 // pred_fallthru
        _
      // Predicated region
      $region17: #{resnet_adailn_block.1} parent=11 // pred_check
        %p263 = pneg %p83
      $region18: #{resnet_adailn_block.1} parent=11 // pred_check_branch
        %265 = sbr.rel (%p263) target = $region20
      $region19: #{resnet_adailn_block.1} parent=11 // pred_region
        _
      $region20: #{resnet_adailn_block.1} parent=11 // pred_fallthru
        _
      // Predicated region
      $region21: #{resnet_adailn_block.1} parent=11 // pred_check
        %p266 = pneg %p104
      $region22: #{resnet_adailn_block.1} parent=11 // pred_check_branch
        %268 = sbr.rel (%p266) target = $region24
      $region23: #{resnet_adailn_block.1} parent=11 // pred_region
        _
      $region24: #{resnet_adailn_block.1} parent=11 // pred_fallthru
        _
      // Predicated region
      $region25: #{resnet_adailn_block.1} parent=11 // pred_check
        %p269 = pneg %p125
      $region26: #{resnet_adailn_block.1} parent=11 // pred_check_branch
        %271 = sbr.rel (%p269) target = $region28
      $region27: #{resnet_adailn_block.1} parent=11 // pred_region
        _
      $region28: #{resnet_adailn_block.1} parent=11 // pred_fallthru
        _
      // Predicated region
      $region29: #{resnet_adailn_block.1} parent=11 // pred_check
        %p272 = pneg %p146
      $region30: #{resnet_adailn_block.1} parent=11 // pred_check_branch
        %274 = sbr.rel (%p272) target = $region32
      $region31: #{resnet_adailn_block.1} parent=11 // pred_region
        _
      $region32: #{resnet_adailn_block.1} parent=11 // pred_fallthru
        _
      // Predicated region
      $region33: #{resnet_adailn_block.1} parent=11 // pred_check
        %p275 = pneg %p167
      $region34: #{resnet_adailn_block.1} parent=11 // pred_check_branch
        %277 = sbr.rel (%p275) target = $region36
      $region35: #{resnet_adailn_block.1} parent=11 // pred_region
        _
      $region36: #{resnet_adailn_block.1} parent=11 // pred_fallthru
        _
    $region12: #{resnet_adailn_block.1} parent=5 // pred_fallthru
      _
    %p278 = scmp.lt.s32.totalorder %s15, 2
    // Predicated region
    $region37: #{resnet_adailn_block.1} parent=5 // pred_check
      %p279 = pneg %p278
    $region38: #{resnet_adailn_block.1} parent=5 // pred_check_branch
      %281 = sbr.rel (%p279) target = $region40
    $region39: #{resnet_adailn_block.1} parent=5 // pred_region
      // Predicated region
      $region41: #{resnet_adailn_block.1} parent=39 // pred_check
        %p282 = pneg %p35
      $region42: #{resnet_adailn_block.1} parent=39 // pred_check_branch
        %284 = sbr.rel (%p282) target = $region44
      $region43: #{resnet_adailn_block.1} parent=39 // pred_region
        %p285 = scmp.lt.s32.totalorder %s15, 1
        %s286 = scalar_select %p285, %s15, 1
        %s287 = smul.addr %s286, 32
        %s288 = smul.addr %s287, 8
        %s289 = scalar_lea.vmem %s0, %s288
      $region44: #{resnet_adailn_block.1} parent=39 // pred_fallthru
        _
      // Predicated region
      $region45: #{resnet_adailn_block.1} parent=39 // pred_check
        %p290 = pneg %p187
      $region46: #{resnet_adailn_block.1} parent=39 // pred_check_branch
        %292 = sbr.rel (%p290) target = $region48
      $region47: #{resnet_adailn_block.1} parent=39 // pred_region
        %p293 = scmp.lt.s32.totalorder %s15, 1
        %s294 = scalar_select %p293, %s15, 1
        %s295 = scalar_lea.vmem %s7, %s294
      $region48: #{resnet_adailn_block.1} parent=39 // pred_fallthru
        _
      // Predicated region
      $region49: #{resnet_adailn_block.1} parent=39 // pred_check
        %p296 = pneg %p213
      $region50: #{resnet_adailn_block.1} parent=39 // pred_check_branch
        %298 = sbr.rel (%p296) target = $region52
      $region51: #{resnet_adailn_block.1} parent=39 // pred_region
        %p299 = scmp.lt.s32.totalorder %s15, 1
        %s300 = scalar_select %p299, %s15, 1
        %s301 = scalar_lea.vmem %s8, %s300
      $region52: #{resnet_adailn_block.1} parent=39 // pred_fallthru
        _
    $region40: #{resnet_adailn_block.1} parent=5 // pred_fallthru
      _
    %p302 = scmp.le.s32.totalorder 1, %s15
    %p303 = scmp.lt.s32.totalorder %s15, 3
    %p304 = pnand %p302, %p303
    %p305 = pneg %p304
    // Predicated region
    $region53: #{resnet_adailn_block.1} parent=5 // pred_check
      _
    $region54: #{resnet_adailn_block.1} parent=5 // pred_check_branch
      %307 = sbr.rel (%p304) target = $region56
    $region55: #{resnet_adailn_block.1} parent=5 // pred_region
      %s308 = ssub.s32 %s15, 1
      %p309 = scmp.lt.s32.totalorder %s20, 1
      %s310 = scalar_select %p309, %s20, 1
      %s311 = smul.addr %s310, 32
      %s312 = smul.addr %s311, 8
      %s313 = scalar_lea.vmem %s0, %s312
      %p314 = pneg %p41
      %p315 = pneg %p38
      %p316 = pneg %p62
      %p317 = pneg %p59
      %p318 = pneg %p83
      %p319 = pneg %p80
      %p320 = pneg %p104
      %p321 = pneg %p101
      %p322 = pneg %p125
      %p323 = pneg %p122
      %p324 = pneg %p146
      %p325 = pneg %p143
      %p326 = pneg %p167
      %p327 = pneg %p164
      %p328 = scmp.lt.s32.totalorder %s20, 1
      %s329 = scalar_select %p328, %s20, 1
      %s330 = scalar_lea.vmem %s7, %s329
      %p331 = pneg %p193
      %p332 = pneg %p190
      %p333 = scmp.lt.s32.totalorder %s20, 1
      %s334 = scalar_select %p333, %s20, 1
      %s335 = scalar_lea.vmem %s8, %s334
      %p336 = pneg %p219
      %p337 = pneg %p216
      %p338 = pneg %p245
      %p339 = pneg %p242
      %p340 = scmp.lt.s32.totalorder %s20, 1
      %s341 = scalar_select %p340, %s20, 1
      %s342 = smul.addr %s341, 32
      %s343 = smul.addr %s342, 8
      %s344 = scalar_lea.vmem %s9, %s343
      %p345 = scmp.lt.s32.totalorder %s20, 1
      %s346 = scalar_select %p345, %s20, 1
      %s347 = smul.addr %s346, 32
      %s348 = smul.addr %s347, 8
      %s349 = scalar_lea.vmem %s0, %s348
      %p350 = scmp.lt.s32.totalorder %s20, 1
      %s351 = scalar_select %p350, %s20, 1
      %s352 = scalar_lea.vmem %s7, %s351
      %p353 = scmp.lt.s32.totalorder %s20, 1
      %s354 = scalar_select %p353, %s20, 1
      %s355 = scalar_lea.vmem %s8, %s354
      %p356 = scmp.lt.s32.totalorder %s20, 1
      %s357 = scalar_select %p356, %s20, 1
      %s358 = smul.addr %s357, 32
      %s359 = smul.addr %s358, 8
      %s360 = scalar_lea.vmem %s9, %s359
      %v361 = vld [vmem:[%s352] sm:$0x1]
      %v362 = vld [vmem:[%s355] sm:$0x1]
      %v363 = vld [vmem:[%s349] sm:$0xff]
      %v364 = vld [vmem:[%s349 + $0x8] sm:$0xff]
      %v365 = vld [vmem:[%s349 + $0x10] sm:$0xff]
      %v366 = vld [vmem:[%s349 + $0x18] sm:$0xff]
      %v367 = vld [vmem:[%s349 + $0x20] sm:$0xff]
      %v368 = vld [vmem:[%s349 + $0x28] sm:$0xff]
      %v369 = vld [vmem:[%s349 + $0x30] sm:$0xff]
      %v370 = vld [vmem:[%s349 + $0x38] sm:$0xff]
      %v371 = vld [vmem:[%s349 + $0x40] sm:$0xff]
      %v372 = vld [vmem:[%s349 + $0x48] sm:$0xff]
      %v373 = vld [vmem:[%s349 + $0x50] sm:$0xff]
      %v374 = vld [vmem:[%s349 + $0x58] sm:$0xff]
      %v375 = vld [vmem:[%s349 + $0x60] sm:$0xff]
      %v376 = vld [vmem:[%s349 + $0x68] sm:$0xff]
      %v377 = vld [vmem:[%s349 + $0x70] sm:$0xff]
      %v378 = vld [vmem:[%s349 + $0x78] sm:$0xff]
      %v379 = vld [vmem:[%s349 + $0x80] sm:$0xff]
      %v380 = vld [vmem:[%s349 + $0x88] sm:$0xff]
      %v381 = vld [vmem:[%s349 + $0x90] sm:$0xff]
      %v382 = vld [vmem:[%s349 + $0x98] sm:$0xff]
      %v383 = vld [vmem:[%s349 + $0xa0] sm:$0xff]
      %v384 = vld [vmem:[%s349 + $0xa8] sm:$0xff]
      %v385 = vld [vmem:[%s349 + $0xb0] sm:$0xff]
      %v386 = vld [vmem:[%s349 + $0xb8] sm:$0xff]
      %v387 = vld [vmem:[%s349 + $0xc0] sm:$0xff]
      %v388 = vld [vmem:[%s349 + $0xc8] sm:$0xff]
      %v389 = vld [vmem:[%s349 + $0xd0] sm:$0xff]
      %v390 = vld [vmem:[%s349 + $0xd8] sm:$0xff]
      %v391 = vld [vmem:[%s349 + $0xe0] sm:$0xff]
      %v392 = vld [vmem:[%s349 + $0xe8] sm:$0xff]
      %v393 = vld [vmem:[%s349 + $0xf0] sm:$0xff]
      %v394 = vld [vmem:[%s349 + $0xf8] sm:$0xff]
      %v411 = vrot.slane %v365, 1
      %v412 = vrot.slane %v363, 1
      %v413 = vrot.slane %v367, 1
      %v414 = vrot.slane %v369, 1
      %v415 = vrot.slane %v371, 1
      %v416 = vrot.slane %v373, 1
      %v417 = vrot.slane %v375, 1
      %v418 = vrot.slane %v377, 1
      %v419 = vrot.slane %v379, 1
      %v420 = vrot.slane %v381, 1
      %v421 = vrot.slane %v383, 1
      %v422 = vrot.slane %v385, 1
      %v423 = vrot.slane %v387, 1
      %v424 = vrot.slane %v389, 1
      %v425 = vrot.slane %v391, 1
      %v426 = vrot.slane %v393, 1
      %vm459 = vcmask 1040384
      %v460 = vrot.slane %v365, 7
      %v461 = vrot.slane %v366, 7
      %v462 = vsel %vm459, %v460, %v461
      %v463 = vrot.slane %v363, 7
      %v464 = vrot.slane %v364, 7
      %v465 = vsel %vm459, %v463, %v464
      %v466 = vrot.slane %v367, 7
      %v467 = vrot.slane %v368, 7
      %v468 = vsel %vm459, %v466, %v467
      %v469 = vrot.slane %v369, 7
      %v470 = vrot.slane %v370, 7
      %v471 = vsel %vm459, %v469, %v470
      %v472 = vrot.slane %v371, 7
      %v473 = vrot.slane %v372, 7
      %v474 = vsel %vm459, %v472, %v473
      %v475 = vrot.slane %v373, 7
      %v476 = vrot.slane %v374, 7
      %v477 = vsel %vm459, %v475, %v476
      %v478 = vrot.slane %v375, 7
      %v479 = vrot.slane %v376, 7
      %v480 = vsel %vm459, %v478, %v479
      %v481 = vrot.slane %v377, 7
      %v482 = vrot.slane %v378, 7
      %v483 = vsel %vm459, %v481, %v482
      %v484 = vrot.slane %v379, 7
      %v485 = vrot.slane %v380, 7
      %v486 = vsel %vm459, %v484, %v485
      %v487 = vrot.slane %v381, 7
      %v488 = vrot.slane %v382, 7
      %v489 = vsel %vm459, %v487, %v488
      %v490 = vrot.slane %v383, 7
      %v491 = vrot.slane %v384, 7
      %v492 = vsel %vm459, %v490, %v491
      %v493 = vrot.slane %v385, 7
      %v494 = vrot.slane %v386, 7
      %v495 = vsel %vm459, %v493, %v494
      %v496 = vrot.slane %v387, 7
      %v497 = vrot.slane %v388, 7
      %v498 = vsel %vm459, %v496, %v497
      %v499 = vrot.slane %v389, 7
      %v500 = vrot.slane %v390, 7
      %v501 = vsel %vm459, %v499, %v500
      %v502 = vrot.slane %v391, 7
      %v503 = vrot.slane %v392, 7
      %v504 = vsel %vm459, %v502, %v503
      %v505 = vrot.slane %v393, 7
      %v506 = vrot.slane %v394, 7
      %v507 = vsel %vm459, %v505, %v506
      %v556 = vrot.slane %v366, 5
      %v557 = vrot.slane %v364, 5
      %v558 = vrot.slane %v368, 5
      %v559 = vrot.slane %v370, 5
      %v560 = vrot.slane %v372, 5
      %v561 = vrot.slane %v374, 5
      %v562 = vrot.slane %v376, 5
      %v563 = vrot.slane %v378, 5
      %v564 = vrot.slane %v380, 5
      %v565 = vrot.slane %v382, 5
      %v566 = vrot.slane %v384, 5
      %v567 = vrot.slane %v386, 5
      %v568 = vrot.slane %v388, 5
      %v569 = vrot.slane %v390, 5
      %v570 = vrot.slane %v392, 5
      %v571 = vrot.slane %v394, 5
      %v588 = vsel %vm459, %v411, %v460
      %v589 = vsel %vm459, %v412, %v463
      %v590 = vsel %vm459, %v413, %v466
      %v591 = vsel %vm459, %v414, %v469
      %v592 = vsel %vm459, %v415, %v472
      %v593 = vsel %vm459, %v416, %v475
      %v594 = vsel %vm459, %v417, %v478
      %v595 = vsel %vm459, %v418, %v481
      %v596 = vsel %vm459, %v419, %v484
      %v597 = vsel %vm459, %v420, %v487
      %v598 = vsel %vm459, %v421, %v490
      %v599 = vsel %vm459, %v422, %v493
      %v600 = vsel %vm459, %v423, %v496
      %v601 = vsel %vm459, %v424, %v499
      %v602 = vsel %vm459, %v425, %v502
      %v603 = vsel %vm459, %v426, %v505
      %v604 = vsel %vm459, %v461, %v556
      %v605 = vsel %vm459, %v464, %v557
      %v606 = vsel %vm459, %v467, %v558
      %v607 = vsel %vm459, %v470, %v559
      %v608 = vsel %vm459, %v473, %v560
      %v609 = vsel %vm459, %v476, %v561
      %v610 = vsel %vm459, %v479, %v562
      %v611 = vsel %vm459, %v482, %v563
      %v612 = vsel %vm459, %v485, %v564
      %v613 = vsel %vm459, %v488, %v565
      %v614 = vsel %vm459, %v491, %v566
      %v615 = vsel %vm459, %v494, %v567
      %v616 = vsel %vm459, %v497, %v568
      %v617 = vsel %vm459, %v500, %v569
      %v618 = vsel %vm459, %v503, %v570
      %v619 = vsel %vm459, %v506, %v571
      %vm620 = vcmask 31744
      %621 = vst.msk [vmem:[#allocation2] sm:$0xff] %vm620, %v588
      %622 = vst.msk [vmem:[#allocation2 + $0x8] sm:$0xff] %vm620, %v462
      %vm623 = vcmask 25600
      %624 = vst.msk [vmem:[#allocation2 + $0x10] sm:$0x3] %vm623, %v604
      %625 = vst.msk [vmem:[#allocation2 + $0x18] sm:$0xff] %vm620, %v589
      %626 = vst.msk [vmem:[#allocation2 + $0x20] sm:$0xff] %vm620, %v465
      %627 = vst.msk [vmem:[#allocation2 + $0x28] sm:$0x3] %vm623, %v605
      %628 = vst.msk [vmem:[#allocation2 + $0x30] sm:$0xff] %vm620, %v588
      %629 = vst.msk [vmem:[#allocation2 + $0x38] sm:$0xff] %vm620, %v462
      %630 = vst.msk [vmem:[#allocation2 + $0x40] sm:$0x3] %vm623, %v604
      %631 = vst.msk [vmem:[#allocation2 + $0x48] sm:$0xff] %vm620, %v590
      %632 = vst.msk [vmem:[#allocation2 + $0x50] sm:$0xff] %vm620, %v468
      %633 = vst.msk [vmem:[#allocation2 + $0x58] sm:$0x3] %vm623, %v606
      %634 = vst.msk [vmem:[#allocation2 + $0x60] sm:$0xff] %vm620, %v591
      %635 = vst.msk [vmem:[#allocation2 + $0x68] sm:$0xff] %vm620, %v471
      %636 = vst.msk [vmem:[#allocation2 + $0x70] sm:$0x3] %vm623, %v607
      %637 = vst.msk [vmem:[#allocation2 + $0x78] sm:$0xff] %vm620, %v592
      %638 = vst.msk [vmem:[#allocation2 + $0x80] sm:$0xff] %vm620, %v474
      %639 = vst.msk [vmem:[#allocation2 + $0x88] sm:$0x3] %vm623, %v608
      %640 = vst.msk [vmem:[#allocation2 + $0x90] sm:$0xff] %vm620, %v593
      %641 = vst.msk [vmem:[#allocation2 + $0x98] sm:$0xff] %vm620, %v477
      %642 = vst.msk [vmem:[#allocation2 + $0xa0] sm:$0x3] %vm623, %v609
      %643 = vst.msk [vmem:[#allocation2 + $0xa8] sm:$0xff] %vm620, %v594
      %644 = vst.msk [vmem:[#allocation2 + $0xb0] sm:$0xff] %vm620, %v480
      %645 = vst.msk [vmem:[#allocation2 + $0xb8] sm:$0x3] %vm623, %v610
      %646 = vst.msk [vmem:[#allocation2 + $0xc0] sm:$0xff] %vm620, %v595
      %647 = vst.msk [vmem:[#allocation2 + $0xc8] sm:$0xff] %vm620, %v483
      %648 = vst.msk [vmem:[#allocation2 + $0xd0] sm:$0x3] %vm623, %v611
      %649 = vst.msk [vmem:[#allocation2 + $0xd8] sm:$0xff] %vm620, %v596
      %650 = vst.msk [vmem:[#allocation2 + $0xe0] sm:$0xff] %vm620, %v486
      %651 = vst.msk [vmem:[#allocation2 + $0xe8] sm:$0x3] %vm623, %v612
      %652 = vst.msk [vmem:[#allocation2 + $0xf0] sm:$0xff] %vm620, %v597
      %653 = vst.msk [vmem:[#allocation2 + $0xf8] sm:$0xff] %vm620, %v489
      %654 = vst.msk [vmem:[#allocation2 + $0x100] sm:$0x3] %vm623, %v613
      %655 = vst.msk [vmem:[#allocation2 + $0x108] sm:$0xff] %vm620, %v598
      %656 = vst.msk [vmem:[#allocation2 + $0x110] sm:$0xff] %vm620, %v492
      %657 = vst.msk [vmem:[#allocation2 + $0x118] sm:$0x3] %vm623, %v614
      %658 = vst.msk [vmem:[#allocation2 + $0x120] sm:$0xff] %vm620, %v599
      %659 = vst.msk [vmem:[#allocation2 + $0x128] sm:$0xff] %vm620, %v495
      %660 = vst.msk [vmem:[#allocation2 + $0x130] sm:$0x3] %vm623, %v615
      %661 = vst.msk [vmem:[#allocation2 + $0x138] sm:$0xff] %vm620, %v600
      %662 = vst.msk [vmem:[#allocation2 + $0x140] sm:$0xff] %vm620, %v498
      %663 = vst.msk [vmem:[#allocation2 + $0x148] sm:$0x3] %vm623, %v616
      %664 = vst.msk [vmem:[#allocation2 + $0x150] sm:$0xff] %vm620, %v601
      %665 = vst.msk [vmem:[#allocation2 + $0x158] sm:$0xff] %vm620, %v501
      %666 = vst.msk [vmem:[#allocation2 + $0x160] sm:$0x3] %vm623, %v617
      %667 = vst.msk [vmem:[#allocation2 + $0x168] sm:$0xff] %vm620, %v602
      %668 = vst.msk [vmem:[#allocation2 + $0x170] sm:$0xff] %vm620, %v504
      %669 = vst.msk [vmem:[#allocation2 + $0x178] sm:$0x3] %vm623, %v618
      %670 = vst.msk [vmem:[#allocation2 + $0x180] sm:$0xff] %vm620, %v603
      %671 = vst.msk [vmem:[#allocation2 + $0x188] sm:$0xff] %vm620, %v507
      %672 = vst.msk [vmem:[#allocation2 + $0x190] sm:$0x3] %vm623, %v619
      %673 = vst.msk [vmem:[#allocation2 + $0x198] sm:$0xff] %vm620, %v602
      %674 = vst.msk [vmem:[#allocation2 + $0x1a0] sm:$0xff] %vm620, %v504
      %675 = vst.msk [vmem:[#allocation2 + $0x1a8] sm:$0x3] %vm623, %v618
      %v676 = vld [vmem:[#allocation2] sm:$0xff]
      %v677 = vld [vmem:[#allocation2 + $0x8] sm:$0xff]
      %v678 = vld [vmem:[#allocation2 + $0x10] sm:$0x3]
      %v679 = vld [vmem:[#allocation2 + $0x18] sm:$0xff]
      %v680 = vld [vmem:[#allocation2 + $0x20] sm:$0xff]
      %v681 = vld [vmem:[#allocation2 + $0x28] sm:$0x3]
      %v682 = vld [vmem:[#allocation2 + $0x30] sm:$0xff]
      %v683 = vld [vmem:[#allocation2 + $0x38] sm:$0xff]
      %v684 = vld [vmem:[#allocation2 + $0x40] sm:$0x3]
      %v685 = vld [vmem:[#allocation2 + $0x48] sm:$0xff]
      %v686 = vld [vmem:[#allocation2 + $0x50] sm:$0xff]
      %v687 = vld [vmem:[#allocation2 + $0x58] sm:$0x3]
      %v688 = vld [vmem:[#allocation2 + $0x60] sm:$0xff]
      %v689 = vld [vmem:[#allocation2 + $0x68] sm:$0xff]
      %v690 = vld [vmem:[#allocation2 + $0x70] sm:$0x3]
      %v691 = vld [vmem:[#allocation2 + $0x78] sm:$0xff]
      %v692 = vld [vmem:[#allocation2 + $0x80] sm:$0xff]
      %v693 = vld [vmem:[#allocation2 + $0x88] sm:$0x3]
      %v694 = vld [vmem:[#allocation2 + $0x90] sm:$0xff]
      %v695 = vld [vmem:[#allocation2 + $0x98] sm:$0xff]
      %v696 = vld [vmem:[#allocation2 + $0xa0] sm:$0x3]
      %v697 = vld [vmem:[#allocation2 + $0xa8] sm:$0xff]
      %v698 = vld [vmem:[#allocation2 + $0xb0] sm:$0xff]
      %v699 = vld [vmem:[#allocation2 + $0xb8] sm:$0x3]
      %v700 = vld [vmem:[#allocation2 + $0xc0] sm:$0xff]
      %v701 = vld [vmem:[#allocation2 + $0xc8] sm:$0xff]
      %v702 = vld [vmem:[#allocation2 + $0xd0] sm:$0x3]
      %v703 = vld [vmem:[#allocation2 + $0xd8] sm:$0xff]
      %v704 = vld [vmem:[#allocation2 + $0xe0] sm:$0xff]
      %v705 = vld [vmem:[#allocation2 + $0xe8] sm:$0x3]
      %v706 = vld [vmem:[#allocation2 + $0xf0] sm:$0xff]
      %v707 = vld [vmem:[#allocation2 + $0xf8] sm:$0xff]
      %v708 = vld [vmem:[#allocation2 + $0x100] sm:$0x3]
      %v709 = vld [vmem:[#allocation2 + $0x108] sm:$0xff]
      %v710 = vld [vmem:[#allocation2 + $0x110] sm:$0xff]
      %v711 = vld [vmem:[#allocation2 + $0x118] sm:$0x3]
      %v712 = vld [vmem:[#allocation2 + $0x120] sm:$0xff]
      %v713 = vld [vmem:[#allocation2 + $0x128] sm:$0xff]
      %v714 = vld [vmem:[#allocation2 + $0x130] sm:$0x3]
      %v715 = vld [vmem:[#allocation2 + $0x138] sm:$0xff]
      %v716 = vld [vmem:[#allocation2 + $0x140] sm:$0xff]
      %v717 = vld [vmem:[#allocation2 + $0x148] sm:$0x3]
      %v718 = vld [vmem:[#allocation2 + $0x150] sm:$0xff]
      %v719 = vld [vmem:[#allocation2 + $0x158] sm:$0xff]
      %v720 = vld [vmem:[#allocation2 + $0x160] sm:$0x3]
      %v721 = vld [vmem:[#allocation2 + $0x168] sm:$0xff]
      %v722 = vld [vmem:[#allocation2 + $0x170] sm:$0xff]
      %v723 = vld [vmem:[#allocation2 + $0x178] sm:$0x3]
      %vm772 = vcmask 1046528
      %v773 = vrot.slane %v676, 1
      %v774 = vrot.slane %v677, 1
      %v775 = vsel %vm772, %v773, %v774
      %v776 = vrot.slane %v678, 1
      %v777 = vsel %vm772, %v774, %v776
      %v778 = vrot.slane %v679, 1
      %v779 = vrot.slane %v680, 1
      %v780 = vsel %vm772, %v778, %v779
      %v781 = vrot.slane %v681, 1
      %v782 = vsel %vm772, %v779, %v781
      %v783 = vrot.slane %v682, 1
      %v784 = vrot.slane %v683, 1
      %v785 = vsel %vm772, %v783, %v784
      %v786 = vrot.slane %v684, 1
      %v787 = vsel %vm772, %v784, %v786
      %v788 = vrot.slane %v685, 1
      %v789 = vrot.slane %v686, 1
      %v790 = vsel %vm772, %v788, %v789
      %v791 = vrot.slane %v687, 1
      %v792 = vsel %vm772, %v789, %v791
      %v793 = vrot.slane %v688, 1
      %v794 = vrot.slane %v689, 1
      %v795 = vsel %vm772, %v793, %v794
      %v796 = vrot.slane %v690, 1
      %v797 = vsel %vm772, %v794, %v796
      %v798 = vrot.slane %v691, 1
      %v799 = vrot.slane %v692, 1
      %v800 = vsel %vm772, %v798, %v799
      %v801 = vrot.slane %v693, 1
      %v802 = vsel %vm772, %v799, %v801
      %v803 = vrot.slane %v694, 1
      %v804 = vrot.slane %v695, 1
      %v805 = vsel %vm772, %v803, %v804
      %v806 = vrot.slane %v696, 1
      %v807 = vsel %vm772, %v804, %v806
      %v808 = vrot.slane %v697, 1
      %v809 = vrot.slane %v698, 1
      %v810 = vsel %vm772, %v808, %v809
      %v811 = vrot.slane %v699, 1
      %v812 = vsel %vm772, %v809, %v811
      %v813 = vrot.slane %v700, 1
      %v814 = vrot.slane %v701, 1
      %v815 = vsel %vm772, %v813, %v814
      %v816 = vrot.slane %v702, 1
      %v817 = vsel %vm772, %v814, %v816
      %v818 = vrot.slane %v703, 1
      %v819 = vrot.slane %v704, 1
      %v820 = vsel %vm772, %v818, %v819
      %v821 = vrot.slane %v705, 1
      %v822 = vsel %vm772, %v819, %v821
      %v823 = vrot.slane %v706, 1
      %v824 = vrot.slane %v707, 1
      %v825 = vsel %vm772, %v823, %v824
      %v826 = vrot.slane %v708, 1
      %v827 = vsel %vm772, %v824, %v826
      %v828 = vrot.slane %v709, 1
      %v829 = vrot.slane %v710, 1
      %v830 = vsel %vm772, %v828, %v829
      %v831 = vrot.slane %v711, 1
      %v832 = vsel %vm772, %v829, %v831
      %v833 = vrot.slane %v712, 1
      %v834 = vrot.slane %v713, 1
      %v835 = vsel %vm772, %v833, %v834
      %v836 = vrot.slane %v714, 1
      %v837 = vsel %vm772, %v834, %v836
      %v838 = vrot.slane %v715, 1
      %v839 = vrot.slane %v716, 1
      %v840 = vsel %vm772, %v838, %v839
      %v841 = vrot.slane %v717, 1
      %v842 = vsel %vm772, %v839, %v841
      %v843 = vrot.slane %v718, 1
      %v844 = vrot.slane %v719, 1
      %v845 = vsel %vm772, %v843, %v844
      %v846 = vrot.slane %v720, 1
      %v847 = vsel %vm772, %v844, %v846
      %v848 = vrot.slane %v721, 1
      %v849 = vrot.slane %v722, 1
      %v850 = vsel %vm772, %v848, %v849
      %v851 = vrot.slane %v723, 1
      %v852 = vsel %vm772, %v849, %v851
      %853 = vrot.lane.b32.xlu0 %v775, 4
      %v854 = vpop.permute.xlu0 %853
      %855 = vrot.lane.b32.xlu0 %v777, 4
      %v856 = vpop.permute.xlu0 %855
      %857 = vrot.lane.b32.xlu0 %v780, 4
      %v858 = vpop.permute.xlu0 %857
      %859 = vrot.lane.b32.xlu0 %v782, 4
      %v860 = vpop.permute.xlu0 %859
      %861 = vrot.lane.b32.xlu0 %v785, 4
      %v862 = vpop.permute.xlu0 %861
      %863 = vrot.lane.b32.xlu0 %v787, 4
      %v864 = vpop.permute.xlu0 %863
      %865 = vrot.lane.b32.xlu0 %v790, 4
      %v866 = vpop.permute.xlu0 %865
      %867 = vrot.lane.b32.xlu0 %v792, 4
      %v868 = vpop.permute.xlu0 %867
      %869 = vrot.lane.b32.xlu0 %v795, 4
      %v870 = vpop.permute.xlu0 %869
      %871 = vrot.lane.b32.xlu0 %v797, 4
      %v872 = vpop.permute.xlu0 %871
      %873 = vrot.lane.b32.xlu0 %v800, 4
      %v874 = vpop.permute.xlu0 %873
      %875 = vrot.lane.b32.xlu0 %v802, 4
      %v876 = vpop.permute.xlu0 %875
      %877 = vrot.lane.b32.xlu0 %v805, 4
      %v878 = vpop.permute.xlu0 %877
      %879 = vrot.lane.b32.xlu0 %v807, 4
      %v880 = vpop.permute.xlu0 %879
      %881 = vrot.lane.b32.xlu0 %v810, 4
      %v882 = vpop.permute.xlu0 %881
      %883 = vrot.lane.b32.xlu0 %v812, 4
      %v884 = vpop.permute.xlu0 %883
      %885 = vrot.lane.b32.xlu0 %v815, 4
      %v886 = vpop.permute.xlu0 %885
      %887 = vrot.lane.b32.xlu0 %v817, 4
      %v888 = vpop.permute.xlu0 %887
      %889 = vrot.lane.b32.xlu0 %v820, 4
      %v890 = vpop.permute.xlu0 %889
      %891 = vrot.lane.b32.xlu0 %v822, 4
      %v892 = vpop.permute.xlu0 %891
      %893 = vrot.lane.b32.xlu0 %v825, 4
      %v894 = vpop.permute.xlu0 %893
      %895 = vrot.lane.b32.xlu0 %v827, 4
      %v896 = vpop.permute.xlu0 %895
      %897 = vrot.lane.b32.xlu0 %v830, 4
      %v898 = vpop.permute.xlu0 %897
      %899 = vrot.lane.b32.xlu0 %v832, 4
      %v900 = vpop.permute.xlu0 %899
      %901 = vrot.lane.b32.xlu0 %v835, 4
      %v902 = vpop.permute.xlu0 %901
      %903 = vrot.lane.b32.xlu0 %v837, 4
      %v904 = vpop.permute.xlu0 %903
      %905 = vrot.lane.b32.xlu0 %v840, 4
      %v906 = vpop.permute.xlu0 %905
      %907 = vrot.lane.b32.xlu0 %v842, 4
      %v908 = vpop.permute.xlu0 %907
      %909 = vrot.lane.b32.xlu0 %v845, 4
      %v910 = vpop.permute.xlu0 %909
      %911 = vrot.lane.b32.xlu0 %v847, 4
      %v912 = vpop.permute.xlu0 %911
      %913 = vrot.lane.b32.xlu0 %v850, 4
      %v914 = vpop.permute.xlu0 %913
      %915 = vrot.lane.b32.xlu0 %v852, 4
      %v916 = vpop.permute.xlu0 %915
      %vm949 = vcmask 1045504
      %v950 = vrot.slane %v676, 2
      %v951 = vrot.slane %v677, 2
      %v952 = vsel %vm949, %v950, %v951
      %v953 = vrot.slane %v678, 2
      %v954 = vsel %vm949, %v951, %v953
      %v955 = vrot.slane %v679, 2
      %v956 = vrot.slane %v680, 2
      %v957 = vsel %vm949, %v955, %v956
      %v958 = vrot.slane %v681, 2
      %v959 = vsel %vm949, %v956, %v958
      %v960 = vrot.slane %v682, 2
      %v961 = vrot.slane %v683, 2
      %v962 = vsel %vm949, %v960, %v961
      %v963 = vrot.slane %v684, 2
      %v964 = vsel %vm949, %v961, %v963
      %v965 = vrot.slane %v685, 2
      %v966 = vrot.slane %v686, 2
      %v967 = vsel %vm949, %v965, %v966
      %v968 = vrot.slane %v687, 2
      %v969 = vsel %vm949, %v966, %v968
      %v970 = vrot.slane %v688, 2
      %v971 = vrot.slane %v689, 2
      %v972 = vsel %vm949, %v970, %v971
      %v973 = vrot.slane %v690, 2
      %v974 = vsel %vm949, %v971, %v973
      %v975 = vrot.slane %v691, 2
      %v976 = vrot.slane %v692, 2
      %v977 = vsel %vm949, %v975, %v976
      %v978 = vrot.slane %v693, 2
      %v979 = vsel %vm949, %v976, %v978
      %v980 = vrot.slane %v694, 2
      %v981 = vrot.slane %v695, 2
      %v982 = vsel %vm949, %v980, %v981
      %v983 = vrot.slane %v696, 2
      %v984 = vsel %vm949, %v981, %v983
      %v985 = vrot.slane %v697, 2
      %v986 = vrot.slane %v698, 2
      %v987 = vsel %vm949, %v985, %v986
      %v988 = vrot.slane %v699, 2
      %v989 = vsel %vm949, %v986, %v988
      %v990 = vrot.slane %v700, 2
      %v991 = vrot.slane %v701, 2
      %v992 = vsel %vm949, %v990, %v991
      %v993 = vrot.slane %v702, 2
      %v994 = vsel %vm949, %v991, %v993
      %v995 = vrot.slane %v703, 2
      %v996 = vrot.slane %v704, 2
      %v997 = vsel %vm949, %v995, %v996
      %v998 = vrot.slane %v705, 2
      %v999 = vsel %vm949, %v996, %v998
      %v1000 = vrot.slane %v706, 2
      %v1001 = vrot.slane %v707, 2
      %v1002 = vsel %vm949, %v1000, %v1001
      %v1003 = vrot.slane %v708, 2
      %v1004 = vsel %vm949, %v1001, %v1003
      %v1005 = vrot.slane %v709, 2
      %v1006 = vrot.slane %v710, 2
      %v1007 = vsel %vm949, %v1005, %v1006
      %v1008 = vrot.slane %v711, 2
      %v1009 = vsel %vm949, %v1006, %v1008
      %v1010 = vrot.slane %v712, 2
      %v1011 = vrot.slane %v713, 2
      %v1012 = vsel %vm949, %v1010, %v1011
      %v1013 = vrot.slane %v714, 2
      %v1014 = vsel %vm949, %v1011, %v1013
      %v1015 = vrot.slane %v715, 2
      %v1016 = vrot.slane %v716, 2
      %v1017 = vsel %vm949, %v1015, %v1016
      %v1018 = vrot.slane %v717, 2
      %v1019 = vsel %vm949, %v1016, %v1018
      %v1020 = vrot.slane %v718, 2
      %v1021 = vrot.slane %v719, 2
      %v1022 = vsel %vm949, %v1020, %v1021
      %v1023 = vrot.slane %v720, 2
      %v1024 = vsel %vm949, %v1021, %v1023
      %v1025 = vrot.slane %v721, 2
      %v1026 = vrot.slane %v722, 2
      %v1027 = vsel %vm949, %v1025, %v1026
      %v1028 = vrot.slane %v723, 2
      %v1029 = vsel %vm949, %v1026, %v1028
      %1030 = vrot.lane.b32.xlu0 %v952, 8
      %v1031 = vpop.permute.xlu0 %1030
      %1032 = vrot.lane.b32.xlu0 %v954, 8
      %v1033 = vpop.permute.xlu0 %1032
      %1034 = vrot.lane.b32.xlu0 %v957, 8
      %v1035 = vpop.permute.xlu0 %1034
      %1036 = vrot.lane.b32.xlu0 %v959, 8
      %v1037 = vpop.permute.xlu0 %1036
      %1038 = vrot.lane.b32.xlu0 %v962, 8
      %v1039 = vpop.permute.xlu0 %1038
      %1040 = vrot.lane.b32.xlu0 %v964, 8
      %v1041 = vpop.permute.xlu0 %1040
      %1042 = vrot.lane.b32.xlu0 %v967, 8
      %v1043 = vpop.permute.xlu0 %1042
      %1044 = vrot.lane.b32.xlu0 %v969, 8
      %v1045 = vpop.permute.xlu0 %1044
      %1046 = vrot.lane.b32.xlu0 %v972, 8
      %v1047 = vpop.permute.xlu0 %1046
      %1048 = vrot.lane.b32.xlu0 %v974, 8
      %v1049 = vpop.permute.xlu0 %1048
      %1050 = vrot.lane.b32.xlu0 %v977, 8
      %v1051 = vpop.permute.xlu0 %1050
      %1052 = vrot.lane.b32.xlu0 %v979, 8
      %v1053 = vpop.permute.xlu0 %1052
      %1054 = vrot.lane.b32.xlu0 %v982, 8
      %v1055 = vpop.permute.xlu0 %1054
      %1056 = vrot.lane.b32.xlu0 %v984, 8
      %v1057 = vpop.permute.xlu0 %1056
      %1058 = vrot.lane.b32.xlu0 %v987, 8
      %v1059 = vpop.permute.xlu0 %1058
      %1060 = vrot.lane.b32.xlu0 %v989, 8
      %v1061 = vpop.permute.xlu0 %1060
      %1062 = vrot.lane.b32.xlu0 %v992, 8
      %v1063 = vpop.permute.xlu0 %1062
      %1064 = vrot.lane.b32.xlu0 %v994, 8
      %v1065 = vpop.permute.xlu0 %1064
      %1066 = vrot.lane.b32.xlu0 %v997, 8
      %v1067 = vpop.permute.xlu0 %1066
      %1068 = vrot.lane.b32.xlu0 %v999, 8
      %v1069 = vpop.permute.xlu0 %1068
      %1070 = vrot.lane.b32.xlu0 %v1002, 8
      %v1071 = vpop.permute.xlu0 %1070
      %1072 = vrot.lane.b32.xlu0 %v1004, 8
      %v1073 = vpop.permute.xlu0 %1072
      %1074 = vrot.lane.b32.xlu0 %v1007, 8
      %v1075 = vpop.permute.xlu0 %1074
      %1076 = vrot.lane.b32.xlu0 %v1009, 8
      %v1077 = vpop.permute.xlu0 %1076
      %1078 = vrot.lane.b32.xlu0 %v1012, 8
      %v1079 = vpop.permute.xlu0 %1078
      %1080 = vrot.lane.b32.xlu0 %v1014, 8
      %v1081 = vpop.permute.xlu0 %1080
      %1082 = vrot.lane.b32.xlu0 %v1017, 8
      %v1083 = vpop.permute.xlu0 %1082
      %1084 = vrot.lane.b32.xlu0 %v1019, 8
      %v1085 = vpop.permute.xlu0 %1084
      %1086 = vrot.lane.b32.xlu0 %v1022, 8
      %v1087 = vpop.permute.xlu0 %1086
      %1088 = vrot.lane.b32.xlu0 %v1024, 8
      %v1089 = vpop.permute.xlu0 %1088
      %1090 = vrot.lane.b32.xlu0 %v1027, 8
      %v1091 = vpop.permute.xlu0 %1090
      %1092 = vrot.lane.b32.xlu0 %v1029, 8
      %v1093 = vpop.permute.xlu0 %1092
      %v1126 = vsel %vm620, %v676, %v854
      %v1127 = vsel %vm620, %v677, %v856
      %v1128 = vsel %vm620, %v679, %v858
      %v1129 = vsel %vm620, %v680, %v860
      %v1130 = vsel %vm620, %v682, %v862
      %v1131 = vsel %vm620, %v683, %v864
      %v1132 = vsel %vm620, %v685, %v866
      %v1133 = vsel %vm620, %v686, %v868
      %v1134 = vsel %vm620, %v688, %v870
      %v1135 = vsel %vm620, %v689, %v872
      %v1136 = vsel %vm620, %v691, %v874
      %v1137 = vsel %vm620, %v692, %v876
      %v1138 = vsel %vm620, %v694, %v878
      %v1139 = vsel %vm620, %v695, %v880
      %v1140 = vsel %vm620, %v697, %v882
      %v1141 = vsel %vm620, %v698, %v884
      %v1142 = vsel %vm620, %v700, %v886
      %v1143 = vsel %vm620, %v701, %v888
      %v1144 = vsel %vm620, %v703, %v890
      %v1145 = vsel %vm620, %v704, %v892
      %v1146 = vsel %vm620, %v706, %v894
      %v1147 = vsel %vm620, %v707, %v896
      %v1148 = vsel %vm620, %v709, %v898
      %v1149 = vsel %vm620, %v710, %v900
      %v1150 = vsel %vm620, %v712, %v902
      %v1151 = vsel %vm620, %v713, %v904
      %v1152 = vsel %vm620, %v715, %v906
      %v1153 = vsel %vm620, %v716, %v908
      %v1154 = vsel %vm620, %v718, %v910
      %v1155 = vsel %vm620, %v719, %v912
      %v1156 = vsel %vm620, %v721, %v914
      %v1157 = vsel %vm620, %v722, %v916
      %vm1158 = vcmask 64512
      %v1159 = vsel %vm1158, %v1126, %v1031
      %v1160 = vsel %vm1158, %v1127, %v1033
      %v1161 = vsel %vm1158, %v1128, %v1035
      %v1162 = vsel %vm1158, %v1129, %v1037
      %v1163 = vsel %vm1158, %v1130, %v1039
      %v1164 = vsel %vm1158, %v1131, %v1041
      %v1165 = vsel %vm1158, %v1132, %v1043
      %v1166 = vsel %vm1158, %v1133, %v1045
      %v1167 = vsel %vm1158, %v1134, %v1047
      %v1168 = vsel %vm1158, %v1135, %v1049
      %v1169 = vsel %vm1158, %v1136, %v1051
      %v1170 = vsel %vm1158, %v1137, %v1053
      %v1171 = vsel %vm1158, %v1138, %v1055
      %v1172 = vsel %vm1158, %v1139, %v1057
      %v1173 = vsel %vm1158, %v1140, %v1059
      %v1174 = vsel %vm1158, %v1141, %v1061
      %v1175 = vsel %vm1158, %v1142, %v1063
      %v1176 = vsel %vm1158, %v1143, %v1065
      %v1177 = vsel %vm1158, %v1144, %v1067
      %v1178 = vsel %vm1158, %v1145, %v1069
      %v1179 = vsel %vm1158, %v1146, %v1071
      %v1180 = vsel %vm1158, %v1147, %v1073
      %v1181 = vsel %vm1158, %v1148, %v1075
      %v1182 = vsel %vm1158, %v1149, %v1077
      %v1183 = vsel %vm1158, %v1150, %v1079
      %v1184 = vsel %vm1158, %v1151, %v1081
      %v1185 = vsel %vm1158, %v1152, %v1083
      %v1186 = vsel %vm1158, %v1153, %v1085
      %v1187 = vsel %vm1158, %v1154, %v1087
      %v1188 = vsel %vm1158, %v1155, %v1089
      %v1189 = vsel %vm1158, %v1156, %v1091
      %v1190 = vsel %vm1158, %v1157, %v1093
      %v1191 = vld [vmem:[%s1] sm:$0xff]
      %v1192 = vld [vmem:[%s1 + $0x8] sm:$0xf]
      %s1193 = scalar_lea.vmem [#allocation2], 24
      %v1194 = vld [vmem:[%s1193] sm:$0xff]
      %v1195 = vld [vmem:[%s1193 + $0x8] sm:$0xff]
      %v1196 = vld [vmem:[%s1193 + $0x10] sm:$0x3]
      %v1197 = vld [vmem:[%s1193 + $0x18] sm:$0xff]
      %v1198 = vld [vmem:[%s1193 + $0x20] sm:$0xff]
      %v1199 = vld [vmem:[%s1193 + $0x28] sm:$0x3]
      %v1200 = vld [vmem:[%s1193 + $0x30] sm:$0xff]
      %v1201 = vld [vmem:[%s1193 + $0x38] sm:$0xff]
      %v1202 = vld [vmem:[%s1193 + $0x40] sm:$0x3]
      %v1203 = vld [vmem:[%s1193 + $0x48] sm:$0xff]
      %v1204 = vld [vmem:[%s1193 + $0x50] sm:$0xff]
      %v1205 = vld [vmem:[%s1193 + $0x58] sm:$0x3]
      %v1206 = vld [vmem:[%s1193 + $0x60] sm:$0xff]
      %v1207 = vld [vmem:[%s1193 + $0x68] sm:$0xff]
      %v1208 = vld [vmem:[%s1193 + $0x70] sm:$0x3]
      %v1209 = vld [vmem:[%s1193 + $0x78] sm:$0xff]
      %v1210 = vld [vmem:[%s1193 + $0x80] sm:$0xff]
      %v1211 = vld [vmem:[%s1193 + $0x88] sm:$0x3]
      %v1212 = vld [vmem:[%s1193 + $0x90] sm:$0xff]
      %v1213 = vld [vmem:[%s1193 + $0x98] sm:$0xff]
      %v1214 = vld [vmem:[%s1193 + $0xa0] sm:$0x3]
      %v1215 = vld [vmem:[%s1193 + $0xa8] sm:$0xff]
      %v1216 = vld [vmem:[%s1193 + $0xb0] sm:$0xff]
      %v1217 = vld [vmem:[%s1193 + $0xb8] sm:$0x3]
      %v1218 = vld [vmem:[%s1193 + $0xc0] sm:$0xff]
      %v1219 = vld [vmem:[%s1193 + $0xc8] sm:$0xff]
      %v1220 = vld [vmem:[%s1193 + $0xd0] sm:$0x3]
      %v1221 = vld [vmem:[%s1193 + $0xd8] sm:$0xff]
      %v1222 = vld [vmem:[%s1193 + $0xe0] sm:$0xff]
      %v1223 = vld [vmem:[%s1193 + $0xe8] sm:$0x3]
      %v1224 = vld [vmem:[%s1193 + $0xf0] sm:$0xff]
      %v1225 = vld [vmem:[%s1193 + $0xf8] sm:$0xff]
      %v1226 = vld [vmem:[%s1193 + $0x100] sm:$0x3]
      %v1227 = vld [vmem:[%s1193 + $0x108] sm:$0xff]
      %v1228 = vld [vmem:[%s1193 + $0x110] sm:$0xff]
      %v1229 = vld [vmem:[%s1193 + $0x118] sm:$0x3]
      %v1230 = vld [vmem:[%s1193 + $0x120] sm:$0xff]
      %v1231 = vld [vmem:[%s1193 + $0x128] sm:$0xff]
      %v1232 = vld [vmem:[%s1193 + $0x130] sm:$0x3]
      %v1233 = vld [vmem:[%s1193 + $0x138] sm:$0xff]
      %v1234 = vld [vmem:[%s1193 + $0x140] sm:$0xff]
      %v1235 = vld [vmem:[%s1193 + $0x148] sm:$0x3]
      %v1236 = vld [vmem:[%s1193 + $0x150] sm:$0xff]
      %v1237 = vld [vmem:[%s1193 + $0x158] sm:$0xff]
      %v1238 = vld [vmem:[%s1193 + $0x160] sm:$0x3]
      %v1239 = vld [vmem:[%s1193 + $0x168] sm:$0xff]
      %v1240 = vld [vmem:[%s1193 + $0x170] sm:$0xff]
      %v1241 = vld [vmem:[%s1193 + $0x178] sm:$0x3]
      %v1290 = vrot.slane %v1194, 1
      %v1291 = vrot.slane %v1195, 1
      %v1292 = vsel %vm772, %v1290, %v1291
      %v1293 = vrot.slane %v1196, 1
      %v1294 = vsel %vm772, %v1291, %v1293
      %v1295 = vrot.slane %v1197, 1
      %v1296 = vrot.slane %v1198, 1
      %v1297 = vsel %vm772, %v1295, %v1296
      %v1298 = vrot.slane %v1199, 1
      %v1299 = vsel %vm772, %v1296, %v1298
      %v1300 = vrot.slane %v1200, 1
      %v1301 = vrot.slane %v1201, 1
      %v1302 = vsel %vm772, %v1300, %v1301
      %v1303 = vrot.slane %v1202, 1
      %v1304 = vsel %vm772, %v1301, %v1303
      %v1305 = vrot.slane %v1203, 1
      %v1306 = vrot.slane %v1204, 1
      %v1307 = vsel %vm772, %v1305, %v1306
      %v1308 = vrot.slane %v1205, 1
      %v1309 = vsel %vm772, %v1306, %v1308
      %v1310 = vrot.slane %v1206, 1
      %v1311 = vrot.slane %v1207, 1
      %v1312 = vsel %vm772, %v1310, %v1311
      %v1313 = vrot.slane %v1208, 1
      %v1314 = vsel %vm772, %v1311, %v1313
      %v1315 = vrot.slane %v1209, 1
      %v1316 = vrot.slane %v1210, 1
      %v1317 = vsel %vm772, %v1315, %v1316
      %v1318 = vrot.slane %v1211, 1
      %v1319 = vsel %vm772, %v1316, %v1318
      %v1320 = vrot.slane %v1212, 1
      %v1321 = vrot.slane %v1213, 1
      %v1322 = vsel %vm772, %v1320, %v1321
      %v1323 = vrot.slane %v1214, 1
      %v1324 = vsel %vm772, %v1321, %v1323
      %v1325 = vrot.slane %v1215, 1
      %v1326 = vrot.slane %v1216, 1
      %v1327 = vsel %vm772, %v1325, %v1326
      %v1328 = vrot.slane %v1217, 1
      %v1329 = vsel %vm772, %v1326, %v1328
      %v1330 = vrot.slane %v1218, 1
      %v1331 = vrot.slane %v1219, 1
      %v1332 = vsel %vm772, %v1330, %v1331
      %v1333 = vrot.slane %v1220, 1
      %v1334 = vsel %vm772, %v1331, %v1333
      %v1335 = vrot.slane %v1221, 1
      %v1336 = vrot.slane %v1222, 1
      %v1337 = vsel %vm772, %v1335, %v1336
      %v1338 = vrot.slane %v1223, 1
      %v1339 = vsel %vm772, %v1336, %v1338
      %v1340 = vrot.slane %v1224, 1
      %v1341 = vrot.slane %v1225, 1
      %v1342 = vsel %vm772, %v1340, %v1341
      %v1343 = vrot.slane %v1226, 1
      %v1344 = vsel %vm772, %v1341, %v1343
      %v1345 = vrot.slane %v1227, 1
      %v1346 = vrot.slane %v1228, 1
      %v1347 = vsel %vm772, %v1345, %v1346
      %v1348 = vrot.slane %v1229, 1
      %v1349 = vsel %vm772, %v1346, %v1348
      %v1350 = vrot.slane %v1230, 1
      %v1351 = vrot.slane %v1231, 1
      %v1352 = vsel %vm772, %v1350, %v1351
      %v1353 = vrot.slane %v1232, 1
      %v1354 = vsel %vm772, %v1351, %v1353
      %v1355 = vrot.slane %v1233, 1
      %v1356 = vrot.slane %v1234, 1
      %v1357 = vsel %vm772, %v1355, %v1356
      %v1358 = vrot.slane %v1235, 1
      %v1359 = vsel %vm772, %v1356, %v1358
      %v1360 = vrot.slane %v1236, 1
      %v1361 = vrot.slane %v1237, 1
      %v1362 = vsel %vm772, %v1360, %v1361
      %v1363 = vrot.slane %v1238, 1
      %v1364 = vsel %vm772, %v1361, %v1363
      %v1365 = vrot.slane %v1239, 1
      %v1366 = vrot.slane %v1240, 1
      %v1367 = vsel %vm772, %v1365, %v1366
      %v1368 = vrot.slane %v1241, 1
      %v1369 = vsel %vm772, %v1366, %v1368
      %1370 = vrot.lane.b32.xlu0 %v1292, 4
      %v1371 = vpop.permute.xlu0 %1370
      %1372 = vrot.lane.b32.xlu0 %v1294, 4
      %v1373 = vpop.permute.xlu0 %1372
      %1374 = vrot.lane.b32.xlu0 %v1297, 4
      %v1375 = vpop.permute.xlu0 %1374
      %1376 = vrot.lane.b32.xlu0 %v1299, 4
      %v1377 = vpop.permute.xlu0 %1376
      %1378 = vrot.lane.b32.xlu0 %v1302, 4
      %v1379 = vpop.permute.xlu0 %1378
      %1380 = vrot.lane.b32.xlu0 %v1304, 4
      %v1381 = vpop.permute.xlu0 %1380
      %1382 = vrot.lane.b32.xlu0 %v1307, 4
      %v1383 = vpop.permute.xlu0 %1382
      %1384 = vrot.lane.b32.xlu0 %v1309, 4
      %v1385 = vpop.permute.xlu0 %1384
      %1386 = vrot.lane.b32.xlu0 %v1312, 4
      %v1387 = vpop.permute.xlu0 %1386
      %1388 = vrot.lane.b32.xlu0 %v1314, 4
      %v1389 = vpop.permute.xlu0 %1388
      %1390 = vrot.lane.b32.xlu0 %v1317, 4
      %v1391 = vpop.permute.xlu0 %1390
      %1392 = vrot.lane.b32.xlu0 %v1319, 4
      %v1393 = vpop.permute.xlu0 %1392
      %1394 = vrot.lane.b32.xlu0 %v1322, 4
      %v1395 = vpop.permute.xlu0 %1394
      %1396 = vrot.lane.b32.xlu0 %v1324, 4
      %v1397 = vpop.permute.xlu0 %1396
      %1398 = vrot.lane.b32.xlu0 %v1327, 4
      %v1399 = vpop.permute.xlu0 %1398
      %1400 = vrot.lane.b32.xlu0 %v1329, 4
      %v1401 = vpop.permute.xlu0 %1400
      %1402 = vrot.lane.b32.xlu0 %v1332, 4
      %v1403 = vpop.permute.xlu0 %1402
      %1404 = vrot.lane.b32.xlu0 %v1334, 4
      %v1405 = vpop.permute.xlu0 %1404
      %1406 = vrot.lane.b32.xlu0 %v1337, 4
      %v1407 = vpop.permute.xlu0 %1406
      %1408 = vrot.lane.b32.xlu0 %v1339, 4
      %v1409 = vpop.permute.xlu0 %1408
      %1410 = vrot.lane.b32.xlu0 %v1342, 4
      %v1411 = vpop.permute.xlu0 %1410
      %1412 = vrot.lane.b32.xlu0 %v1344, 4
      %v1413 = vpop.permute.xlu0 %1412
      %1414 = vrot.lane.b32.xlu0 %v1347, 4
      %v1415 = vpop.permute.xlu0 %1414
      %1416 = vrot.lane.b32.xlu0 %v1349, 4
      %v1417 = vpop.permute.xlu0 %1416
      %1418 = vrot.lane.b32.xlu0 %v1352, 4
      %v1419 = vpop.permute.xlu0 %1418
      %1420 = vrot.lane.b32.xlu0 %v1354, 4
      %v1421 = vpop.permute.xlu0 %1420
      %1422 = vrot.lane.b32.xlu0 %v1357, 4
      %v1423 = vpop.permute.xlu0 %1422
      %1424 = vrot.lane.b32.xlu0 %v1359, 4
      %v1425 = vpop.permute.xlu0 %1424
      %1426 = vrot.lane.b32.xlu0 %v1362, 4
      %v1427 = vpop.permute.xlu0 %1426
      %1428 = vrot.lane.b32.xlu0 %v1364, 4
      %v1429 = vpop.permute.xlu0 %1428
      %1430 = vrot.lane.b32.xlu0 %v1367, 4
      %v1431 = vpop.permute.xlu0 %1430
      %1432 = vrot.lane.b32.xlu0 %v1369, 4
      %v1433 = vpop.permute.xlu0 %1432
      %v1466 = vrot.slane %v1194, 2
      %v1467 = vrot.slane %v1195, 2
      %v1468 = vsel %vm949, %v1466, %v1467
      %v1469 = vrot.slane %v1196, 2
      %v1470 = vsel %vm949, %v1467, %v1469
      %v1471 = vrot.slane %v1197, 2
      %v1472 = vrot.slane %v1198, 2
      %v1473 = vsel %vm949, %v1471, %v1472
      %v1474 = vrot.slane %v1199, 2
      %v1475 = vsel %vm949, %v1472, %v1474
      %v1476 = vrot.slane %v1200, 2
      %v1477 = vrot.slane %v1201, 2
      %v1478 = vsel %vm949, %v1476, %v1477
      %v1479 = vrot.slane %v1202, 2
      %v1480 = vsel %vm949, %v1477, %v1479
      %v1481 = vrot.slane %v1203, 2
      %v1482 = vrot.slane %v1204, 2
      %v1483 = vsel %vm949, %v1481, %v1482
      %v1484 = vrot.slane %v1205, 2
      %v1485 = vsel %vm949, %v1482, %v1484
      %v1486 = vrot.slane %v1206, 2
      %v1487 = vrot.slane %v1207, 2
      %v1488 = vsel %vm949, %v1486, %v1487
      %v1489 = vrot.slane %v1208, 2
      %v1490 = vsel %vm949, %v1487, %v1489
      %v1491 = vrot.slane %v1209, 2
      %v1492 = vrot.slane %v1210, 2
      %v1493 = vsel %vm949, %v1491, %v1492
      %v1494 = vrot.slane %v1211, 2
      %v1495 = vsel %vm949, %v1492, %v1494
      %v1496 = vrot.slane %v1212, 2
      %v1497 = vrot.slane %v1213, 2
      %v1498 = vsel %vm949, %v1496, %v1497
      %v1499 = vrot.slane %v1214, 2
      %v1500 = vsel %vm949, %v1497, %v1499
      %v1501 = vrot.slane %v1215, 2
      %v1502 = vrot.slane %v1216, 2
      %v1503 = vsel %vm949, %v1501, %v1502
      %v1504 = vrot.slane %v1217, 2
      %v1505 = vsel %vm949, %v1502, %v1504
      %v1506 = vrot.slane %v1218, 2
      %v1507 = vrot.slane %v1219, 2
      %v1508 = vsel %vm949, %v1506, %v1507
      %v1509 = vrot.slane %v1220, 2
      %v1510 = vsel %vm949, %v1507, %v1509
      %v1511 = vrot.slane %v1221, 2
      %v1512 = vrot.slane %v1222, 2
      %v1513 = vsel %vm949, %v1511, %v1512
      %v1514 = vrot.slane %v1223, 2
      %v1515 = vsel %vm949, %v1512, %v1514
      %v1516 = vrot.slane %v1224, 2
      %v1517 = vrot.slane %v1225, 2
      %v1518 = vsel %vm949, %v1516, %v1517
      %v1519 = vrot.slane %v1226, 2
      %v1520 = vsel %vm949, %v1517, %v1519
      %v1521 = vrot.slane %v1227, 2
      %v1522 = vrot.slane %v1228, 2
      %v1523 = vsel %vm949, %v1521, %v1522
      %v1524 = vrot.slane %v1229, 2
      %v1525 = vsel %vm949, %v1522, %v1524
      %v1526 = vrot.slane %v1230, 2
      %v1527 = vrot.slane %v1231, 2
      %v1528 = vsel %vm949, %v1526, %v1527
      %v1529 = vrot.slane %v1232, 2
      %v1530 = vsel %vm949, %v1527, %v1529
      %v1531 = vrot.slane %v1233, 2
      %v1532 = vrot.slane %v1234, 2
      %v1533 = vsel %vm949, %v1531, %v1532
      %v1534 = vrot.slane %v1235, 2
      %v1535 = vsel %vm949, %v1532, %v1534
      %v1536 = vrot.slane %v1236, 2
      %v1537 = vrot.slane %v1237, 2
      %v1538 = vsel %vm949, %v1536, %v1537
      %v1539 = vrot.slane %v1238, 2
      %v1540 = vsel %vm949, %v1537, %v1539
      %v1541 = vrot.slane %v1239, 2
      %v1542 = vrot.slane %v1240, 2
      %v1543 = vsel %vm949, %v1541, %v1542
      %v1544 = vrot.slane %v1241, 2
      %v1545 = vsel %vm949, %v1542, %v1544
      %1546 = vrot.lane.b32.xlu0 %v1468, 8
      %v1547 = vpop.permute.xlu0 %1546
      %1548 = vrot.lane.b32.xlu0 %v1470, 8
      %v1549 = vpop.permute.xlu0 %1548
      %1550 = vrot.lane.b32.xlu0 %v1473, 8
      %v1551 = vpop.permute.xlu0 %1550
      %1552 = vrot.lane.b32.xlu0 %v1475, 8
      %v1553 = vpop.permute.xlu0 %1552
      %1554 = vrot.lane.b32.xlu0 %v1478, 8
      %v1555 = vpop.permute.xlu0 %1554
      %1556 = vrot.lane.b32.xlu0 %v1480, 8
      %v1557 = vpop.permute.xlu0 %1556
      %1558 = vrot.lane.b32.xlu0 %v1483, 8
      %v1559 = vpop.permute.xlu0 %1558
      %1560 = vrot.lane.b32.xlu0 %v1485, 8
      %v1561 = vpop.permute.xlu0 %1560
      %1562 = vrot.lane.b32.xlu0 %v1488, 8
      %v1563 = vpop.permute.xlu0 %1562
      %1564 = vrot.lane.b32.xlu0 %v1490, 8
      %v1565 = vpop.permute.xlu0 %1564
      %1566 = vrot.lane.b32.xlu0 %v1493, 8
      %v1567 = vpop.permute.xlu0 %1566
      %1568 = vrot.lane.b32.xlu0 %v1495, 8
      %v1569 = vpop.permute.xlu0 %1568
      %1570 = vrot.lane.b32.xlu0 %v1498, 8
      %v1571 = vpop.permute.xlu0 %1570
      %1572 = vrot.lane.b32.xlu0 %v1500, 8
      %v1573 = vpop.permute.xlu0 %1572
      %1574 = vrot.lane.b32.xlu0 %v1503, 8
      %v1575 = vpop.permute.xlu0 %1574
      %1576 = vrot.lane.b32.xlu0 %v1505, 8
      %v1577 = vpop.permute.xlu0 %1576
      %1578 = vrot.lane.b32.xlu0 %v1508, 8
      %v1579 = vpop.permute.xlu0 %1578
      %1580 = vrot.lane.b32.xlu0 %v1510, 8
      %v1581 = vpop.permute.xlu0 %1580
      %1582 = vrot.lane.b32.xlu0 %v1513, 8
      %v1583 = vpop.permute.xlu0 %1582
      %1584 = vrot.lane.b32.xlu0 %v1515, 8
      %v1585 = vpop.permute.xlu0 %1584
      %1586 = vrot.lane.b32.xlu0 %v1518, 8
      %v1587 = vpop.permute.xlu0 %1586
      %1588 = vrot.lane.b32.xlu0 %v1520, 8
      %v1589 = vpop.permute.xlu0 %1588
      %1590 = vrot.lane.b32.xlu0 %v1523, 8
      %v1591 = vpop.permute.xlu0 %1590
      %1592 = vrot.lane.b32.xlu0 %v1525, 8
      %v1593 = vpop.permute.xlu0 %1592
      %1594 = vrot.lane.b32.xlu0 %v1528, 8
      %v1595 = vpop.permute.xlu0 %1594
      %1596 = vrot.lane.b32.xlu0 %v1530, 8
      %v1597 = vpop.permute.xlu0 %1596
      %1598 = vrot.lane.b32.xlu0 %v1533, 8
      %v1599 = vpop.permute.xlu0 %1598
      %1600 = vrot.lane.b32.xlu0 %v1535, 8
      %v1601 = vpop.permute.xlu0 %1600
      %1602 = vrot.lane.b32.xlu0 %v1538, 8
      %v1603 = vpop.permute.xlu0 %1602
      %1604 = vrot.lane.b32.xlu0 %v1540, 8
      %v1605 = vpop.permute.xlu0 %1604
      %1606 = vrot.lane.b32.xlu0 %v1543, 8
      %v1607 = vpop.permute.xlu0 %1606
      %1608 = vrot.lane.b32.xlu0 %v1545, 8
      %v1609 = vpop.permute.xlu0 %1608
      %v1642 = vsel %vm620, %v1194, %v1371
      %v1643 = vsel %vm620, %v1195, %v1373
      %v1644 = vsel %vm620, %v1197, %v1375
      %v1645 = vsel %vm620, %v1198, %v1377
      %v1646 = vsel %vm620, %v1200, %v1379
      %v1647 = vsel %vm620, %v1201, %v1381
      %v1648 = vsel %vm620, %v1203, %v1383
      %v1649 = vsel %vm620, %v1204, %v1385
      %v1650 = vsel %vm620, %v1206, %v1387
      %v1651 = vsel %vm620, %v1207, %v1389
      %v1652 = vsel %vm620, %v1209, %v1391
      %v1653 = vsel %vm620, %v1210, %v1393
      %v1654 = vsel %vm620, %v1212, %v1395
      %v1655 = vsel %vm620, %v1213, %v1397
      %v1656 = vsel %vm620, %v1215, %v1399
      %v1657 = vsel %vm620, %v1216, %v1401
      %v1658 = vsel %vm620, %v1218, %v1403
      %v1659 = vsel %vm620, %v1219, %v1405
      %v1660 = vsel %vm620, %v1221, %v1407
      %v1661 = vsel %vm620, %v1222, %v1409
      %v1662 = vsel %vm620, %v1224, %v1411
      %v1663 = vsel %vm620, %v1225, %v1413
      %v1664 = vsel %vm620, %v1227, %v1415
      %v1665 = vsel %vm620, %v1228, %v1417
      %v1666 = vsel %vm620, %v1230, %v1419
      %v1667 = vsel %vm620, %v1231, %v1421
      %v1668 = vsel %vm620, %v1233, %v1423
      %v1669 = vsel %vm620, %v1234, %v1425
      %v1670 = vsel %vm620, %v1236, %v1427
      %v1671 = vsel %vm620, %v1237, %v1429
      %v1672 = vsel %vm620, %v1239, %v1431
      %v1673 = vsel %vm620, %v1240, %v1433
      %v1674 = vsel %vm1158, %v1642, %v1547
      %v1675 = vsel %vm1158, %v1643, %v1549
      %v1676 = vsel %vm1158, %v1644, %v1551
      %v1677 = vsel %vm1158, %v1645, %v1553
      %v1678 = vsel %vm1158, %v1646, %v1555
      %v1679 = vsel %vm1158, %v1647, %v1557
      %v1680 = vsel %vm1158, %v1648, %v1559
      %v1681 = vsel %vm1158, %v1649, %v1561
      %v1682 = vsel %vm1158, %v1650, %v1563
      %v1683 = vsel %vm1158, %v1651, %v1565
      %v1684 = vsel %vm1158, %v1652, %v1567
      %v1685 = vsel %vm1158, %v1653, %v1569
      %v1686 = vsel %vm1158, %v1654, %v1571
      %v1687 = vsel %vm1158, %v1655, %v1573
      %v1688 = vsel %vm1158, %v1656, %v1575
      %v1689 = vsel %vm1158, %v1657, %v1577
      %v1690 = vsel %vm1158, %v1658, %v1579
      %v1691 = vsel %vm1158, %v1659, %v1581
      %v1692 = vsel %vm1158, %v1660, %v1583
      %v1693 = vsel %vm1158, %v1661, %v1585
      %v1694 = vsel %vm1158, %v1662, %v1587
      %v1695 = vsel %vm1158, %v1663, %v1589
      %v1696 = vsel %vm1158, %v1664, %v1591
      %v1697 = vsel %vm1158, %v1665, %v1593
      %v1698 = vsel %vm1158, %v1666, %v1595
      %v1699 = vsel %vm1158, %v1667, %v1597
      %v1700 = vsel %vm1158, %v1668, %v1599
      %v1701 = vsel %vm1158, %v1669, %v1601
      %v1702 = vsel %vm1158, %v1670, %v1603
      %v1703 = vsel %vm1158, %v1671, %v1605
      %v1704 = vsel %vm1158, %v1672, %v1607
      %v1705 = vsel %vm1158, %v1673, %v1609
      %s1706 = scalar_lea.vmem %s1, 16
      %v1707 = vld [vmem:[%s1706] sm:$0xff]
      %v1708 = vld [vmem:[%s1706 + $0x8] sm:$0xf]
      %vm1709 = vcmask 97280
      %v1711 = vsel %vm1709, %v1674, 0
      %v1714 = vsel %vm1709, %v1675, 0
      %v1717 = vsel %vm1709, %v1676, 0
      %v1720 = vsel %vm1709, %v1677, 0
      %v1723 = vsel %vm1709, %v1678, 0
      %v1726 = vsel %vm1709, %v1679, 0
      %v1729 = vsel %vm1709, %v1680, 0
      %v1732 = vsel %vm1709, %v1681, 0
      %v1735 = vsel %vm1709, %v1682, 0
      %v1738 = vsel %vm1709, %v1683, 0
      %v1741 = vsel %vm1709, %v1684, 0
      %v1744 = vsel %vm1709, %v1685, 0
      %v1747 = vsel %vm1709, %v1686, 0
      %v1750 = vsel %vm1709, %v1687, 0
      %v1753 = vsel %vm1709, %v1688, 0
      %v1756 = vsel %vm1709, %v1689, 0
      %v1759 = vsel %vm1709, %v1690, 0
      %v1762 = vsel %vm1709, %v1691, 0
      %v1765 = vsel %vm1709, %v1692, 0
      %v1768 = vsel %vm1709, %v1693, 0
      %v1771 = vsel %vm1709, %v1694, 0
      %v1774 = vsel %vm1709, %v1695, 0
      %v1777 = vsel %vm1709, %v1696, 0
      %v1780 = vsel %vm1709, %v1697, 0
      %v1783 = vsel %vm1709, %v1698, 0
      %v1786 = vsel %vm1709, %v1699, 0
      %v1789 = vsel %vm1709, %v1700, 0
      %v1792 = vsel %vm1709, %v1701, 0
      %v1795 = vsel %vm1709, %v1702, 0
      %v1798 = vsel %vm1709, %v1703, 0
      %v1801 = vsel %vm1709, %v1704, 0
      %v1804 = vsel %vm1709, %v1705, 0
      %vm1806 = vcmask 1043456
      %v1808 = vsel %vm1806, %v1708, 0
      %1810 = vmatprep.subr.mxu0 0.0
      %1811 = vmatpush1.msra.mxu0 %v1707
      %1812 = vmatprep.subr.mxu0 0.0
      %1813 = vmatpush1.msra.mxu0 %v1808
      %1814 = vmatprep.subr.mxu0 0.0
      %1815 = vmatpush1.msra.mxu0 0.0
      %1816 = vmatprep.subr.mxu0 0.0
      %1817 = vmatpush1.msra.mxu0 0.0
      %1818 = vmatprep.subr.mxu0 0.0
      %1819 = vmatpush1.msra.mxu0 0.0
      %1820 = vmatprep.subr.mxu0 0.0
      %1821 = vmatpush1.msra.mxu0 0.0
      %1822 = vmatprep.subr.mxu0 0.0
      %1823 = vmatpush1.msra.mxu0 0.0
      %1824 = vmatprep.subr.mxu0 0.0
      %1825 = vmatpush1.msra.mxu0 0.0
      %1826 = vmatprep.subr.mxu0 0.0
      %1827 = vmatpush1.msra.mxu0 0.0
      %1828 = vmatprep.subr.mxu0 0.0
      %1829 = vmatpush1.msra.mxu0 0.0
      %1830 = vmatprep.subr.mxu0 0.0
      %1831 = vmatpush1.msra.mxu0 0.0
      %1832 = vmatprep.subr.mxu0 0.0
      %1833 = vmatpush1.msra.mxu0 0.0
      %1834 = vmatprep.subr.mxu0 0.0
      %1835 = vmatpush1.msra.mxu0 0.0
      %1836 = vmatprep.subr.mxu0 0.0
      %1837 = vmatpush1.msra.mxu0 0.0
      %1838 = vmatprep.subr.mxu0 0.0
      %1839 = vmatpush1.msra.mxu0 0.0
      %1840 = vmatprep.subr.mxu0 0.0
      %1841 = vmatpush1.msra.mxu0 0.0
      %1842 = vmatprep.subr.mxu0 0.0
      %1843 = vmatpush1.msra.mxu0 0.0
      %1844 = vmatprep.subr.mxu0 0.0
      %1845 = vmatpush1.msra.mxu0 0.0
      %1846 = vmatprep.subr.mxu0 0.0
      %1847 = vmatpush1.msra.mxu0 0.0
      %1848 = vmatprep.subr.mxu0 0.0
      %1849 = vmatpush1.msra.mxu0 0.0
      %1850 = vmatprep.subr.mxu0 0.0
      %1851 = vmatpush1.msra.mxu0 0.0
      %1852 = vmatprep.subr.mxu0 0.0
      %1853 = vmatpush1.msra.mxu0 0.0
      %1854 = vmatprep.subr.mxu0 0.0
      %1855 = vmatpush1.msra.mxu0 0.0
      %1856 = vmatprep.subr.mxu0 0.0
      %1857 = vmatpush1.msra.mxu0 0.0
      %1858 = vmatprep.subr.mxu0 0.0
      %1859 = vmatpush1.msra.mxu0 0.0
      %1860 = vmatprep.subr.mxu0 0.0
      %1861 = vmatpush1.msra.mxu0 0.0
      %1862 = vmatprep.subr.mxu0 0.0
      %1863 = vmatpush1.msra.mxu0 0.0
      %1864 = vmatprep.subr.mxu0 0.0
      %1865 = vmatpush1.msra.mxu0 0.0
      %1866 = vmatprep.subr.mxu0 0.0
      %1867 = vmatpush1.msra.mxu0 0.0
      %1868 = vmatprep.subr.mxu0 0.0
      %1869 = vmatpush1.msra.mxu0 0.0
      %1870 = vmatprep.subr.mxu0 0.0
      %1871 = vmatpush1.msra.mxu0 0.0
      %1872 = vmatprep.subr.mxu0 0.0
      %1873 = vmatpush1.msra.mxu0 0.0
      %1874 = vmatprep.mubr.f32.mxu0 0.0
      %1875 = vmatmul.mubr.f32.gmra.mrb[0].mxu0 %v1711
      %v1876 = vpop.f32.mrb[0].mxu0
      %v1877 = vadd.f32 0.0, %v1876
      %v1878 = vpop.f32.mrb[0].mxu0
      %1879 = vmatprep.mubr.f32.mxu0 0.0
      %1880 = vmatmul.mubr.f32.gmra.mrb[0].mxu0 %v1714
      %v1881 = vpop.f32.mrb[0].mxu0
      %v1882 = vadd.f32 0.0, %v1881
      %v1883 = vpop.f32.mrb[0].mxu0
      %1884 = vmatprep.mubr.f32.mxu0 0.0
      %1885 = vmatmul.mubr.f32.gmra.mrb[0].mxu0 %v1717
      %v1886 = vpop.f32.mrb[0].mxu0
      %v1887 = vadd.f32 0.0, %v1886
      %v1888 = vpop.f32.mrb[0].mxu0
      %1889 = vmatprep.mubr.f32.mxu0 0.0
      %1890 = vmatmul.mubr.f32.gmra.mrb[0].mxu0 %v1720
      %v1891 = vpop.f32.mrb[0].mxu0
      %v1892 = vadd.f32 0.0, %v1891
      %v1893 = vpop.f32.mrb[0].mxu0
      %1894 = vmatprep.mubr.f32.mxu0 0.0
      %1895 = vmatmul.mubr.f32.gmra.mrb[0].mxu0 %v1723
      %v1896 = vpop.f32.mrb[0].mxu0
      %v1897 = vadd.f32 0.0, %v1896
      %v1898 = vpop.f32.mrb[0].mxu0
      %1899 = vmatprep.mubr.f32.mxu0 0.0
      %1900 = vmatmul.mubr.f32.gmra.mrb[0].mxu0 %v1726
      %v1901 = vpop.f32.mrb[0].mxu0
      %v1902 = vadd.f32 0.0, %v1901
      %v1903 = vpop.f32.mrb[0].mxu0
      %1904 = vmatprep.mubr.f32.mxu0 0.0
      %1905 = vmatmul.mubr.f32.gmra.mrb[0].mxu0 %v1729
      %v1906 = vpop.f32.mrb[0].mxu0
      %v1907 = vadd.f32 0.0, %v1906
      %v1908 = vpop.f32.mrb[0].mxu0
      %1909 = vmatprep.mubr.f32.mxu0 0.0
      %1910 = vmatmul.mubr.f32.gmra.mrb[0].mxu0 %v1732
      %v1911 = vpop.f32.mrb[0].mxu0
      %v1912 = vadd.f32 0.0, %v1911
      %v1913 = vpop.f32.mrb[0].mxu0
      %1914 = vmatprep.mubr.f32.mxu0 0.0
      %1915 = vmatmul.mubr.f32.gmra.mrb[0].mxu0 %v1735
      %v1916 = vpop.f32.mrb[0].mxu0
      %v1917 = vadd.f32 0.0, %v1916
      %v1918 = vpop.f32.mrb[0].mxu0
      %1919 = vmatprep.mubr.f32.mxu0 0.0
      %1920 = vmatmul.mubr.f32.gmra.mrb[0].mxu0 %v1738
      %v1921 = vpop.f32.mrb[0].mxu0
      %v1922 = vadd.f32 0.0, %v1921
      %v1923 = vpop.f32.mrb[0].mxu0
      %1924 = vmatprep.mubr.f32.mxu0 0.0
      %1925 = vmatmul.mubr.f32.gmra.mrb[0].mxu0 %v1741
      %v1926 = vpop.f32.mrb[0].mxu0
      %v1927 = vadd.f32 0.0, %v1926
      %v1928 = vpop.f32.mrb[0].mxu0
      %1929 = vmatprep.mubr.f32.mxu0 0.0
      %1930 = vmatmul.mubr.f32.gmra.mrb[0].mxu0 %v1744
      %v1931 = vpop.f32.mrb[0].mxu0
      %v1932 = vadd.f32 0.0, %v1931
      %v1933 = vpop.f32.mrb[0].mxu0
      %1934 = vmatprep.mubr.f32.mxu0 0.0
      %1935 = vmatmul.mubr.f32.gmra.mrb[0].mxu0 %v1747
      %v1936 = vpop.f32.mrb[0].mxu0
      %v1937 = vadd.f32 0.0, %v1936
      %v1938 = vpop.f32.mrb[0].mxu0
      %1939 = vmatprep.mubr.f32.mxu0 0.0
      %1940 = vmatmul.mubr.f32.gmra.mrb[0].mxu0 %v1750
      %v1941 = vpop.f32.mrb[0].mxu0
      %v1942 = vadd.f32 0.0, %v1941
      %v1943 = vpop.f32.mrb[0].mxu0
      %1944 = vmatprep.mubr.f32.mxu0 0.0
      %1945 = vmatmul.mubr.f32.gmra.mrb[0].mxu0 %v1753
      %v1946 = vpop.f32.mrb[0].mxu0
      %v1947 = vadd.f32 0.0, %v1946
      %v1948 = vpop.f32.mrb[0].mxu0
      %1949 = vmatprep.mubr.f32.mxu0 0.0
      %1950 = vmatmul.mubr.f32.gmra.mrb[0].mxu0 %v1756
      %v1951 = vpop.f32.mrb[0].mxu0
      %v1952 = vadd.f32 0.0, %v1951
      %v1953 = vpop.f32.mrb[0].mxu0
      %1954 = vmatprep.mubr.f32.mxu0 0.0
      %1955 = vmatmul.mubr.f32.gmra.mrb[0].mxu0 %v1759
      %v1956 = vpop.f32.mrb[0].mxu0
      %v1957 = vadd.f32 0.0, %v1956
      %v1958 = vpop.f32.mrb[0].mxu0
      %1959 = vmatprep.mubr.f32.mxu0 0.0
      %1960 = vmatmul.mubr.f32.gmra.mrb[0].mxu0 %v1762
      %v1961 = vpop.f32.mrb[0].mxu0
      %v1962 = vadd.f32 0.0, %v1961
      %v1963 = vpop.f32.mrb[0].mxu0
      %1964 = vmatprep.mubr.f32.mxu0 0.0
      %1965 = vmatmul.mubr.f32.gmra.mrb[0].mxu0 %v1765
      %v1966 = vpop.f32.mrb[0].mxu0
      %v1967 = vadd.f32 0.0, %v1966
      %v1968 = vpop.f32.mrb[0].mxu0
      %1969 = vmatprep.mubr.f32.mxu0 0.0
      %1970 = vmatmul.mubr.f32.gmra.mrb[0].mxu0 %v1768
      %v1971 = vpop.f32.mrb[0].mxu0
      %v1972 = vadd.f32 0.0, %v1971
      %v1973 = vpop.f32.mrb[0].mxu0
      %1974 = vmatprep.mubr.f32.mxu0 0.0
      %1975 = vmatmul.mubr.f32.gmra.mrb[0].mxu0 %v1771
      %v1976 = vpop.f32.mrb[0].mxu0
      %v1977 = vadd.f32 0.0, %v1976
      %v1978 = vpop.f32.mrb[0].mxu0
      %1979 = vmatprep.mubr.f32.mxu0 0.0
      %1980 = vmatmul.mubr.f32.gmra.mrb[0].mxu0 %v1774
      %v1981 = vpop.f32.mrb[0].mxu0
      %v1982 = vadd.f32 0.0, %v1981
      %v1983 = vpop.f32.mrb[0].mxu0
      %1984 = vmatprep.mubr.f32.mxu0 0.0
      %1985 = vmatmul.mubr.f32.gmra.mrb[0].mxu0 %v1777
      %v1986 = vpop.f32.mrb[0].mxu0
      %v1987 = vadd.f32 0.0, %v1986
      %v1988 = vpop.f32.mrb[0].mxu0
      %1989 = vmatprep.mubr.f32.mxu0 0.0
      %1990 = vmatmul.mubr.f32.gmra.mrb[0].mxu0 %v1780
      %v1991 = vpop.f32.mrb[0].mxu0
      %v1992 = vadd.f32 0.0, %v1991
      %v1993 = vpop.f32.mrb[0].mxu0
      %1994 = vmatprep.mubr.f32.mxu0 0.0
      %1995 = vmatmul.mubr.f32.gmra.mrb[0].mxu0 %v1783
      %v1996 = vpop.f32.mrb[0].mxu0
      %v1997 = vadd.f32 0.0, %v1996
      %v1998 = vpop.f32.mrb[0].mxu0
      %1999 = vmatprep.mubr.f32.mxu0 0.0
      %2000 = vmatmul.mubr.f32.gmra.mrb[0].mxu0 %v1786
      %v2001 = vpop.f32.mrb[0].mxu0
      %v2002 = vadd.f32 0.0, %v2001
      %v2003 = vpop.f32.mrb[0].mxu0
      %2004 = vmatprep.mubr.f32.mxu0 0.0
      %2005 = vmatmul.mubr.f32.gmra.mrb[0].mxu0 %v1789
      %v2006 = vpop.f32.mrb[0].mxu0
      %v2007 = vadd.f32 0.0, %v2006
      %v2008 = vpop.f32.mrb[0].mxu0
      %2009 = vmatprep.mubr.f32.mxu0 0.0
      %2010 = vmatmul.mubr.f32.gmra.mrb[0].mxu0 %v1792
      %v2011 = vpop.f32.mrb[0].mxu0
      %v2012 = vadd.f32 0.0, %v2011
      %v2013 = vpop.f32.mrb[0].mxu0
      %2014 = vmatprep.mubr.f32.mxu0 0.0
      %2015 = vmatmul.mubr.f32.gmra.mrb[0].mxu0 %v1795
      %v2016 = vpop.f32.mrb[0].mxu0
      %v2017 = vadd.f32 0.0, %v2016
      %v2018 = vpop.f32.mrb[0].mxu0
      %2019 = vmatprep.mubr.f32.mxu0 0.0
      %2020 = vmatmul.mubr.f32.gmra.mrb[0].mxu0 %v1798
      %v2021 = vpop.f32.mrb[0].mxu0
      %v2022 = vadd.f32 0.0, %v2021
      %v2023 = vpop.f32.mrb[0].mxu0
      %2024 = vmatprep.mubr.f32.mxu0 0.0
      %2025 = vmatmul.mubr.f32.gmra.mrb[0].mxu0 %v1801
      %v2026 = vpop.f32.mrb[0].mxu0
      %v2027 = vadd.f32 0.0, %v2026
      %v2028 = vpop.f32.mrb[0].mxu0
      %2029 = vmatprep.mubr.f32.mxu0 0.0
      %2030 = vmatmul.mubr.f32.gmra.mrb[0].mxu0 %v1804
      %v2031 = vpop.f32.mrb[0].mxu0
      %v2032 = vadd.f32 0.0, %v2031
      %v2033 = vpop.f32.mrb[0].mxu0
      %2034 = vdwg.mxu0
      %v2036 = vsel %vm1709, %v1159, 0
      %v2039 = vsel %vm1709, %v1160, 0
      %v2042 = vsel %vm1709, %v1161, 0
      %v2045 = vsel %vm1709, %v1162, 0
      %v2048 = vsel %vm1709, %v1163, 0
      %v2051 = vsel %vm1709, %v1164, 0
      %v2054 = vsel %vm1709, %v1165, 0
      %v2057 = vsel %vm1709, %v1166, 0
      %v2060 = vsel %vm1709, %v1167, 0
      %v2063 = vsel %vm1709, %v1168, 0
      %v2066 = vsel %vm1709, %v1169, 0
      %v2069 = vsel %vm1709, %v1170, 0
      %v2072 = vsel %vm1709, %v1171, 0
      %v2075 = vsel %vm1709, %v1172, 0
      %v2078 = vsel %vm1709, %v1173, 0
      %v2081 = vsel %vm1709, %v1174, 0
      %v2084 = vsel %vm1709, %v1175, 0
      %v2087 = vsel %vm1709, %v1176, 0
      %v2090 = vsel %vm1709, %v1177, 0
      %v2093 = vsel %vm1709, %v1178, 0
      %v2096 = vsel %vm1709, %v1179, 0
      %v2099 = vsel %vm1709, %v1180, 0
      %v2102 = vsel %vm1709, %v1181, 0
      %v2105 = vsel %vm1709, %v1182, 0
      %v2108 = vsel %vm1709, %v1183, 0
      %v2111 = vsel %vm1709, %v1184, 0
      %v2114 = vsel %vm1709, %v1185, 0
      %v2117 = vsel %vm1709, %v1186, 0
      %v2120 = vsel %vm1709, %v1187, 0
      %v2123 = vsel %vm1709, %v1188, 0
      %v2126 = vsel %vm1709, %v1189, 0
      %v2129 = vsel %vm1709, %v1190, 0
      %v2132 = vsel %vm1806, %v1192, 0
      %2134 = vmatprep.subr.mxu0 0.0
      %2135 = vmatpush1.msra.mxu0 %v1191
      %2136 = vmatprep.subr.mxu0 0.0
      %2137 = vmatpush1.msra.mxu0 %v2132
      %2138 = vmatprep.subr.mxu0 0.0
      %2139 = vmatpush1.msra.mxu0 0.0
      %2140 = vmatprep.subr.mxu0 0.0
      %2141 = vmatpush1.msra.mxu0 0.0
      %2142 = vmatprep.subr.mxu0 0.0
      %2143 = vmatpush1.msra.mxu0 0.0
      %2144 = vmatprep.subr.mxu0 0.0
      %2145 = vmatpush1.msra.mxu0 0.0
      %2146 = vmatprep.subr.mxu0 0.0
      %2147 = vmatpush1.msra.mxu0 0.0
      %2148 = vmatprep.subr.mxu0 0.0
      %2149 = vmatpush1.msra.mxu0 0.0
      %2150 = vmatprep.subr.mxu0 0.0
      %2151 = vmatpush1.msra.mxu0 0.0
      %2152 = vmatprep.subr.mxu0 0.0
      %2153 = vmatpush1.msra.mxu0 0.0
      %2154 = vmatprep.subr.mxu0 0.0
      %2155 = vmatpush1.msra.mxu0 0.0
      %2156 = vmatprep.subr.mxu0 0.0
      %2157 = vmatpush1.msra.mxu0 0.0
      %2158 = vmatprep.subr.mxu0 0.0
      %2159 = vmatpush1.msra.mxu0 0.0
      %2160 = vmatprep.subr.mxu0 0.0
      %2161 = vmatpush1.msra.mxu0 0.0
      %2162 = vmatprep.subr.mxu0 0.0
      %2163 = vmatpush1.msra.mxu0 0.0
      %2164 = vmatprep.subr.mxu0 0.0
      %2165 = vmatpush1.msra.mxu0 0.0
      %2166 = vmatprep.subr.mxu0 0.0
      %2167 = vmatpush1.msra.mxu0 0.0
      %2168 = vmatprep.subr.mxu0 0.0
      %2169 = vmatpush1.msra.mxu0 0.0
      %2170 = vmatprep.subr.mxu0 0.0
      %2171 = vmatpush1.msra.mxu0 0.0
      %2172 = vmatprep.subr.mxu0 0.0
      %2173 = vmatpush1.msra.mxu0 0.0
      %2174 = vmatprep.subr.mxu0 0.0
      %2175 = vmatpush1.msra.mxu0 0.0
      %2176 = vmatprep.subr.mxu0 0.0
      %2177 = vmatpush1.msra.mxu0 0.0
      %2178 = vmatprep.subr.mxu0 0.0
      %2179 = vmatpush1.msra.mxu0 0.0
      %2180 = vmatprep.subr.mxu0 0.0
      %2181 = vmatpush1.msra.mxu0 0.0
      %2182 = vmatprep.subr.mxu0 0.0
      %2183 = vmatpush1.msra.mxu0 0.0
      %2184 = vmatprep.subr.mxu0 0.0
      %2185 = vmatpush1.msra.mxu0 0.0
      %2186 = vmatprep.subr.mxu0 0.0
      %2187 = vmatpush1.msra.mxu0 0.0
      %2188 = vmatprep.subr.mxu0 0.0
      %2189 = vmatpush1.msra.mxu0 0.0
      %2190 = vmatprep.subr.mxu0 0.0
      %2191 = vmatpush1.msra.mxu0 0.0
      %2192 = vmatprep.subr.mxu0 0.0
      %2193 = vmatpush1.msra.mxu0 0.0
      %2194 = vmatprep.subr.mxu0 0.0
      %2195 = vmatpush1.msra.mxu0 0.0
      %2196 = vmatprep.subr.mxu0 0.0
      %2197 = vmatpush1.msra.mxu0 0.0
      %2198 = vmatprep.mubr.f32.mxu0 0.0
      %2199 = vmatmul.mubr.f32.gmra.mrb[0].mxu0 %v2036
      %v2200 = vpop.f32.mrb[0].mxu0
      %v2201 = vadd.f32 %v1877, %v2200
      %v2202 = vpop.f32.mrb[0].mxu0
      %2203 = vmatprep.mubr.f32.mxu0 0.0
      %2204 = vmatmul.mubr.f32.gmra.mrb[0].mxu0 %v2039
      %v2205 = vpop.f32.mrb[0].mxu0
      %v2206 = vadd.f32 %v1882, %v2205
      %v2207 = vpop.f32.mrb[0].mxu0
      %2208 = vmatprep.mubr.f32.mxu0 0.0
      %2209 = vmatmul.mubr.f32.gmra.mrb[0].mxu0 %v2042
      %v2210 = vpop.f32.mrb[0].mxu0
      %v2211 = vadd.f32 %v1887, %v2210
      %v2212 = vpop.f32.mrb[0].mxu0
      %2213 = vmatprep.mubr.f32.mxu0 0.0
      %2214 = vmatmul.mubr.f32.gmra.mrb[0].mxu0 %v2045
      %v2215 = vpop.f32.mrb[0].mxu0
      %v2216 = vadd.f32 %v1892, %v2215
      %v2217 = vpop.f32.mrb[0].mxu0
      %2218 = vmatprep.mubr.f32.mxu0 0.0
      %2219 = vmatmul.mubr.f32.gmra.mrb[0].mxu0 %v2048
      %v2220 = vpop.f32.mrb[0].mxu0
      %v2221 = vadd.f32 %v1897, %v2220
      %v2222 = vpop.f32.mrb[0].mxu0
      %2223 = vmatprep.mubr.f32.mxu0 0.0
      %2224 = vmatmul.mubr.f32.gmra.mrb[0].mxu0 %v2051
      %v2225 = vpop.f32.mrb[0].mxu0
      %v2226 = vadd.f32 %v1902, %v2225
      %v2227 = vpop.f32.mrb[0].mxu0
      %2228 = vmatprep.mubr.f32.mxu0 0.0
      %2229 = vmatmul.mubr.f32.gmra.mrb[0].mxu0 %v2054
      %v2230 = vpop.f32.mrb[0].mxu0
      %v2231 = vadd.f32 %v1907, %v2230
      %v2232 = vpop.f32.mrb[0].mxu0
      %2233 = vmatprep.mubr.f32.mxu0 0.0
      %2234 = vmatmul.mubr.f32.gmra.mrb[0].mxu0 %v2057
      %v2235 = vpop.f32.mrb[0].mxu0
      %v2236 = vadd.f32 %v1912, %v2235
      %v2237 = vpop.f32.mrb[0].mxu0
      %2238 = vmatprep.mubr.f32.mxu0 0.0
      %2239 = vmatmul.mubr.f32.gmra.mrb[0].mxu0 %v2060
      %v2240 = vpop.f32.mrb[0].mxu0
      %v2241 = vadd.f32 %v1917, %v2240
      %v2242 = vpop.f32.mrb[0].mxu0
      %2243 = vmatprep.mubr.f32.mxu0 0.0
      %2244 = vmatmul.mubr.f32.gmra.mrb[0].mxu0 %v2063
      %v2245 = vpop.f32.mrb[0].mxu0
      %v2246 = vadd.f32 %v1922, %v2245
      %v2247 = vpop.f32.mrb[0].mxu0
      %2248 = vmatprep.mubr.f32.mxu0 0.0
      %2249 = vmatmul.mubr.f32.gmra.mrb[0].mxu0 %v2066
      %v2250 = vpop.f32.mrb[0].mxu0
      %v2251 = vadd.f32 %v1927, %v2250
      %v2252 = vpop.f32.mrb[0].mxu0
      %2253 = vmatprep.mubr.f32.mxu0 0.0
      %2254 = vmatmul.mubr.f32.gmra.mrb[0].mxu0 %v2069
      %v2255 = vpop.f32.mrb[0].mxu0
      %v2256 = vadd.f32 %v1932, %v2255
      %v2257 = vpop.f32.mrb[0].mxu0
      %2258 = vmatprep.mubr.f32.mxu0 0.0
      %2259 = vmatmul.mubr.f32.gmra.mrb[0].mxu0 %v2072
      %v2260 = vpop.f32.mrb[0].mxu0
      %v2261 = vadd.f32 %v1937, %v2260
      %v2262 = vpop.f32.mrb[0].mxu0
      %2263 = vmatprep.mubr.f32.mxu0 0.0
      %2264 = vmatmul.mubr.f32.gmra.mrb[0].mxu0 %v2075
      %v2265 = vpop.f32.mrb[0].mxu0
      %v2266 = vadd.f32 %v1942, %v2265
      %v2267 = vpop.f32.mrb[0].mxu0
      %2268 = vmatprep.mubr.f32.mxu0 0.0
      %2269 = vmatmul.mubr.f32.gmra.mrb[0].mxu0 %v2078
      %v2270 = vpop.f32.mrb[0].mxu0
      %v2271 = vadd.f32 %v1947, %v2270
      %v2272 = vpop.f32.mrb[0].mxu0
      %2273 = vmatprep.mubr.f32.mxu0 0.0
      %2274 = vmatmul.mubr.f32.gmra.mrb[0].mxu0 %v2081
      %v2275 = vpop.f32.mrb[0].mxu0
      %v2276 = vadd.f32 %v1952, %v2275
      %v2277 = vpop.f32.mrb[0].mxu0
      %2278 = vmatprep.mubr.f32.mxu0 0.0
      %2279 = vmatmul.mubr.f32.gmra.mrb[0].mxu0 %v2084
      %v2280 = vpop.f32.mrb[0].mxu0
      %v2281 = vadd.f32 %v1957, %v2280
      %v2282 = vpop.f32.mrb[0].mxu0
      %2283 = vmatprep.mubr.f32.mxu0 0.0
      %2284 = vmatmul.mubr.f32.gmra.mrb[0].mxu0 %v2087
      %v2285 = vpop.f32.mrb[0].mxu0
      %v2286 = vadd.f32 %v1962, %v2285
      %v2287 = vpop.f32.mrb[0].mxu0
      %2288 = vmatprep.mubr.f32.mxu0 0.0
      %2289 = vmatmul.mubr.f32.gmra.mrb[0].mxu0 %v2090
      %v2290 = vpop.f32.mrb[0].mxu0
      %v2291 = vadd.f32 %v1967, %v2290
      %v2292 = vpop.f32.mrb[0].mxu0
      %2293 = vmatprep.mubr.f32.mxu0 0.0
      %2294 = vmatmul.mubr.f32.gmra.mrb[0].mxu0 %v2093
      %v2295 = vpop.f32.mrb[0].mxu0
      %v2296 = vadd.f32 %v1972, %v2295
      %v2297 = vpop.f32.mrb[0].mxu0
      %2298 = vmatprep.mubr.f32.mxu0 0.0
      %2299 = vmatmul.mubr.f32.gmra.mrb[0].mxu0 %v2096
      %v2300 = vpop.f32.mrb[0].mxu0
      %v2301 = vadd.f32 %v1977, %v2300
      %v2302 = vpop.f32.mrb[0].mxu0
      %2303 = vmatprep.mubr.f32.mxu0 0.0
      %2304 = vmatmul.mubr.f32.gmra.mrb[0].mxu0 %v2099
      %v2305 = vpop.f32.mrb[0].mxu0
      %v2306 = vadd.f32 %v1982, %v2305
      %v2307 = vpop.f32.mrb[0].mxu0
      %2308 = vmatprep.mubr.f32.mxu0 0.0
      %2309 = vmatmul.mubr.f32.gmra.mrb[0].mxu0 %v2102
      %v2310 = vpop.f32.mrb[0].mxu0
      %v2311 = vadd.f32 %v1987, %v2310
      %v2312 = vpop.f32.mrb[0].mxu0
      %2313 = vmatprep.mubr.f32.mxu0 0.0
      %2314 = vmatmul.mubr.f32.gmra.mrb[0].mxu0 %v2105
      %v2315 = vpop.f32.mrb[0].mxu0
      %v2316 = vadd.f32 %v1992, %v2315
      %v2317 = vpop.f32.mrb[0].mxu0
      %2318 = vmatprep.mubr.f32.mxu0 0.0
      %2319 = vmatmul.mubr.f32.gmra.mrb[0].mxu0 %v2108
      %v2320 = vpop.f32.mrb[0].mxu0
      %v2321 = vadd.f32 %v1997, %v2320
      %v2322 = vpop.f32.mrb[0].mxu0
      %2323 = vmatprep.mubr.f32.mxu0 0.0
      %2324 = vmatmul.mubr.f32.gmra.mrb[0].mxu0 %v2111
      %v2325 = vpop.f32.mrb[0].mxu0
      %v2326 = vadd.f32 %v2002, %v2325
      %v2327 = vpop.f32.mrb[0].mxu0
      %2328 = vmatprep.mubr.f32.mxu0 0.0
      %2329 = vmatmul.mubr.f32.gmra.mrb[0].mxu0 %v2114
      %v2330 = vpop.f32.mrb[0].mxu0
      %v2331 = vadd.f32 %v2007, %v2330
      %v2332 = vpop.f32.mrb[0].mxu0
      %2333 = vmatprep.mubr.f32.mxu0 0.0
      %2334 = vmatmul.mubr.f32.gmra.mrb[0].mxu0 %v2117
      %v2335 = vpop.f32.mrb[0].mxu0
      %v2336 = vadd.f32 %v2012, %v2335
      %v2337 = vpop.f32.mrb[0].mxu0
      %2338 = vmatprep.mubr.f32.mxu0 0.0
      %2339 = vmatmul.mubr.f32.gmra.mrb[0].mxu0 %v2120
      %v2340 = vpop.f32.mrb[0].mxu0
      %v2341 = vadd.f32 %v2017, %v2340
      %v2342 = vpop.f32.mrb[0].mxu0
      %2343 = vmatprep.mubr.f32.mxu0 0.0
      %2344 = vmatmul.mubr.f32.gmra.mrb[0].mxu0 %v2123
      %v2345 = vpop.f32.mrb[0].mxu0
      %v2346 = vadd.f32 %v2022, %v2345
      %v2347 = vpop.f32.mrb[0].mxu0
      %2348 = vmatprep.mubr.f32.mxu0 0.0
      %2349 = vmatmul.mubr.f32.gmra.mrb[0].mxu0 %v2126
      %v2350 = vpop.f32.mrb[0].mxu0
      %v2351 = vadd.f32 %v2027, %v2350
      %v2352 = vpop.f32.mrb[0].mxu0
      %2353 = vmatprep.mubr.f32.mxu0 0.0
      %2354 = vmatmul.mubr.f32.gmra.mrb[0].mxu0 %v2129
      %v2355 = vpop.f32.mrb[0].mxu0
      %v2356 = vadd.f32 %v2032, %v2355
      %v2357 = vpop.f32.mrb[0].mxu0
      %2358 = vdwg.mxu0
      %s2359 = scalar_lea.vmem [#allocation2], 48
      %v2360 = vld [vmem:[%s2359] sm:$0xff]
      %v2361 = vld [vmem:[%s2359 + $0x8] sm:$0xff]
      %v2362 = vld [vmem:[%s2359 + $0x10] sm:$0x3]
      %v2363 = vld [vmem:[%s2359 + $0x18] sm:$0xff]
      %v2364 = vld [vmem:[%s2359 + $0x20] sm:$0xff]
      %v2365 = vld [vmem:[%s2359 + $0x28] sm:$0x3]
      %v2366 = vld [vmem:[%s2359 + $0x30] sm:$0xff]
      %v2367 = vld [vmem:[%s2359 + $0x38] sm:$0xff]
      %v2368 = vld [vmem:[%s2359 + $0x40] sm:$0x3]
      %v2369 = vld [vmem:[%s2359 + $0x48] sm:$0xff]
      %v2370 = vld [vmem:[%s2359 + $0x50] sm:$0xff]
      %v2371 = vld [vmem:[%s2359 + $0x58] sm:$0x3]
      %v2372 = vld [vmem:[%s2359 + $0x60] sm:$0xff]
      %v2373 = vld [vmem:[%s2359 + $0x68] sm:$0xff]
      %v2374 = vld [vmem:[%s2359 + $0x70] sm:$0x3]
      %v2375 = vld [vmem:[%s2359 + $0x78] sm:$0xff]
      %v2376 = vld [vmem:[%s2359 + $0x80] sm:$0xff]
      %v2377 = vld [vmem:[%s2359 + $0x88] sm:$0x3]
      %v2378 = vld [vmem:[%s2359 + $0x90] sm:$0xff]
      %v2379 = vld [vmem:[%s2359 + $0x98] sm:$0xff]
      %v2380 = vld [vmem:[%s2359 + $0xa0] sm:$0x3]
      %v2381 = vld [vmem:[%s2359 + $0xa8] sm:$0xff]
      %v2382 = vld [vmem:[%s2359 + $0xb0] sm:$0xff]
      %v2383 = vld [vmem:[%s2359 + $0xb8] sm:$0x3]
      %v2384 = vld [vmem:[%s2359 + $0xc0] sm:$0xff]
      %v2385 = vld [vmem:[%s2359 + $0xc8] sm:$0xff]
      %v2386 = vld [vmem:[%s2359 + $0xd0] sm:$0x3]
      %v2387 = vld [vmem:[%s2359 + $0xd8] sm:$0xff]
      %v2388 = vld [vmem:[%s2359 + $0xe0] sm:$0xff]
      %v2389 = vld [vmem:[%s2359 + $0xe8] sm:$0x3]
      %v2390 = vld [vmem:[%s2359 + $0xf0] sm:$0xff]
      %v2391 = vld [vmem:[%s2359 + $0xf8] sm:$0xff]
      %v2392 = vld [vmem:[%s2359 + $0x100] sm:$0x3]
      %v2393 = vld [vmem:[%s2359 + $0x108] sm:$0xff]
      %v2394 = vld [vmem:[%s2359 + $0x110] sm:$0xff]
      %v2395 = vld [vmem:[%s2359 + $0x118] sm:$0x3]
      %v2396 = vld [vmem:[%s2359 + $0x120] sm:$0xff]
      %v2397 = vld [vmem:[%s2359 + $0x128] sm:$0xff]
      %v2398 = vld [vmem:[%s2359 + $0x130] sm:$0x3]
      %v2399 = vld [vmem:[%s2359 + $0x138] sm:$0xff]
      %v2400 = vld [vmem:[%s2359 + $0x140] sm:$0xff]
      %v2401 = vld [vmem:[%s2359 + $0x148] sm:$0x3]
      %v2402 = vld [vmem:[%s2359 + $0x150] sm:$0xff]
      %v2403 = vld [vmem:[%s2359 + $0x158] sm:$0xff]
      %v2404 = vld [vmem:[%s2359 + $0x160] sm:$0x3]
      %v2405 = vld [vmem:[%s2359 + $0x168] sm:$0xff]
      %v2406 = vld [vmem:[%s2359 + $0x170] sm:$0xff]
      %v2407 = vld [vmem:[%s2359 + $0x178] sm:$0x3]
      %v2456 = vrot.slane %v2360, 1
      %v2457 = vrot.slane %v2361, 1
      %v2458 = vsel %vm772, %v2456, %v2457
      %v2459 = vrot.slane %v2362, 1
      %v2460 = vsel %vm772, %v2457, %v2459
      %v2461 = vrot.slane %v2363, 1
      %v2462 = vrot.slane %v2364, 1
      %v2463 = vsel %vm772, %v2461, %v2462
      %v2464 = vrot.slane %v2365, 1
      %v2465 = vsel %vm772, %v2462, %v2464
      %v2466 = vrot.slane %v2366, 1
      %v2467 = vrot.slane %v2367, 1
      %v2468 = vsel %vm772, %v2466, %v2467
      %v2469 = vrot.slane %v2368, 1
      %v2470 = vsel %vm772, %v2467, %v2469
      %v2471 = vrot.slane %v2369, 1
      %v2472 = vrot.slane %v2370, 1
      %v2473 = vsel %vm772, %v2471, %v2472
      %v2474 = vrot.slane %v2371, 1
      %v2475 = vsel %vm772, %v2472, %v2474
      %v2476 = vrot.slane %v2372, 1
      %v2477 = vrot.slane %v2373, 1
      %v2478 = vsel %vm772, %v2476, %v2477
      %v2479 = vrot.slane %v2374, 1
      %v2480 = vsel %vm772, %v2477, %v2479
      %v2481 = vrot.slane %v2375, 1
      %v2482 = vrot.slane %v2376, 1
      %v2483 = vsel %vm772, %v2481, %v2482
      %v2484 = vrot.slane %v2377, 1
      %v2485 = vsel %vm772, %v2482, %v2484
      %v2486 = vrot.slane %v2378, 1
      %v2487 = vrot.slane %v2379, 1
      %v2488 = vsel %vm772, %v2486, %v2487
      %v2489 = vrot.slane %v2380, 1
      %v2490 = vsel %vm772, %v2487, %v2489
      %v2491 = vrot.slane %v2381, 1
      %v2492 = vrot.slane %v2382, 1
      %v2493 = vsel %vm772, %v2491, %v2492
      %v2494 = vrot.slane %v2383, 1
      %v2495 = vsel %vm772, %v2492, %v2494
      %v2496 = vrot.slane %v2384, 1
      %v2497 = vrot.slane %v2385, 1
      %v2498 = vsel %vm772, %v2496, %v2497
      %v2499 = vrot.slane %v2386, 1
      %v2500 = vsel %vm772, %v2497, %v2499
      %v2501 = vrot.slane %v2387, 1
      %v2502 = vrot.slane %v2388, 1
      %v2503 = vsel %vm772, %v2501, %v2502
      %v2504 = vrot.slane %v2389, 1
      %v2505 = vsel %vm772, %v2502, %v2504
      %v2506 = vrot.slane %v2390, 1
      %v2507 = vrot.slane %v2391, 1
      %v2508 = vsel %vm772, %v2506, %v2507
      %v2509 = vrot.slane %v2392, 1
      %v2510 = vsel %vm772, %v2507, %v2509
      %v2511 = vrot.slane %v2393, 1
      %v2512 = vrot.slane %v2394, 1
      %v2513 = vsel %vm772, %v2511, %v2512
      %v2514 = vrot.slane %v2395, 1
      %v2515 = vsel %vm772, %v2512, %v2514
      %v2516 = vrot.slane %v2396, 1
      %v2517 = vrot.slane %v2397, 1
      %v2518 = vsel %vm772, %v2516, %v2517
      %v2519 = vrot.slane %v2398, 1
      %v2520 = vsel %vm772, %v2517, %v2519
      %v2521 = vrot.slane %v2399, 1
      %v2522 = vrot.slane %v2400, 1
      %v2523 = vsel %vm772, %v2521, %v2522
      %v2524 = vrot.slane %v2401, 1
      %v2525 = vsel %vm772, %v2522, %v2524
      %v2526 = vrot.slane %v2402, 1
      %v2527 = vrot.slane %v2403, 1
      %v2528 = vsel %vm772, %v2526, %v2527
      %v2529 = vrot.slane %v2404, 1
      %v2530 = vsel %vm772, %v2527, %v2529
      %v2531 = vrot.slane %v2405, 1
      %v2532 = vrot.slane %v2406, 1
      %v2533 = vsel %vm772, %v2531, %v2532
      %v2534 = vrot.slane %v2407, 1
      %v2535 = vsel %vm772, %v2532, %v2534
      %2536 = vrot.lane.b32.xlu0 %v2458, 4
      %v2537 = vpop.permute.xlu0 %2536
      %2538 = vrot.lane.b32.xlu0 %v2460, 4
      %v2539 = vpop.permute.xlu0 %2538
      %2540 = vrot.lane.b32.xlu0 %v2463, 4
      %v2541 = vpop.permute.xlu0 %2540
      %2542 = vrot.lane.b32.xlu0 %v2465, 4
      %v2543 = vpop.permute.xlu0 %2542
      %2544 = vrot.lane.b32.xlu0 %v2468, 4
      %v2545 = vpop.permute.xlu0 %2544
      %2546 = vrot.lane.b32.xlu0 %v2470, 4
      %v2547 = vpop.permute.xlu0 %2546
      %2548 = vrot.lane.b32.xlu0 %v2473, 4
      %v2549 = vpop.permute.xlu0 %2548
      %2550 = vrot.lane.b32.xlu0 %v2475, 4
      %v2551 = vpop.permute.xlu0 %2550
      %2552 = vrot.lane.b32.xlu0 %v2478, 4
      %v2553 = vpop.permute.xlu0 %2552
      %2554 = vrot.lane.b32.xlu0 %v2480, 4
      %v2555 = vpop.permute.xlu0 %2554
      %2556 = vrot.lane.b32.xlu0 %v2483, 4
      %v2557 = vpop.permute.xlu0 %2556
      %2558 = vrot.lane.b32.xlu0 %v2485, 4
      %v2559 = vpop.permute.xlu0 %2558
      %2560 = vrot.lane.b32.xlu0 %v2488, 4
      %v2561 = vpop.permute.xlu0 %2560
      %2562 = vrot.lane.b32.xlu0 %v2490, 4
      %v2563 = vpop.permute.xlu0 %2562
      %2564 = vrot.lane.b32.xlu0 %v2493, 4
      %v2565 = vpop.permute.xlu0 %2564
      %2566 = vrot.lane.b32.xlu0 %v2495, 4
      %v2567 = vpop.permute.xlu0 %2566
      %2568 = vrot.lane.b32.xlu0 %v2498, 4
      %v2569 = vpop.permute.xlu0 %2568
      %2570 = vrot.lane.b32.xlu0 %v2500, 4
      %v2571 = vpop.permute.xlu0 %2570
      %2572 = vrot.lane.b32.xlu0 %v2503, 4
      %v2573 = vpop.permute.xlu0 %2572
      %2574 = vrot.lane.b32.xlu0 %v2505, 4
      %v2575 = vpop.permute.xlu0 %2574
      %2576 = vrot.lane.b32.xlu0 %v2508, 4
      %v2577 = vpop.permute.xlu0 %2576
      %2578 = vrot.lane.b32.xlu0 %v2510, 4
      %v2579 = vpop.permute.xlu0 %2578
      %2580 = vrot.lane.b32.xlu0 %v2513, 4
      %v2581 = vpop.permute.xlu0 %2580
      %2582 = vrot.lane.b32.xlu0 %v2515, 4
      %v2583 = vpop.permute.xlu0 %2582
      %2584 = vrot.lane.b32.xlu0 %v2518, 4
      %v2585 = vpop.permute.xlu0 %2584
      %2586 = vrot.lane.b32.xlu0 %v2520, 4
      %v2587 = vpop.permute.xlu0 %2586
      %2588 = vrot.lane.b32.xlu0 %v2523, 4
      %v2589 = vpop.permute.xlu0 %2588
      %2590 = vrot.lane.b32.xlu0 %v2525, 4
      %v2591 = vpop.permute.xlu0 %2590
      %2592 = vrot.lane.b32.xlu0 %v2528, 4
      %v2593 = vpop.permute.xlu0 %2592
      %2594 = vrot.lane.b32.xlu0 %v2530, 4
      %v2595 = vpop.permute.xlu0 %2594
      %2596 = vrot.lane.b32.xlu0 %v2533, 4
      %v2597 = vpop.permute.xlu0 %2596
      %2598 = vrot.lane.b32.xlu0 %v2535, 4
      %v2599 = vpop.permute.xlu0 %2598
      %v2632 = vrot.slane %v2360, 2
      %v2633 = vrot.slane %v2361, 2
      %v2634 = vsel %vm949, %v2632, %v2633
      %v2635 = vrot.slane %v2362, 2
      %v2636 = vsel %vm949, %v2633, %v2635
      %v2637 = vrot.slane %v2363, 2
      %v2638 = vrot.slane %v2364, 2
      %v2639 = vsel %vm949, %v2637, %v2638
      %v2640 = vrot.slane %v2365, 2
      %v2641 = vsel %vm949, %v2638, %v2640
      %v2642 = vrot.slane %v2366, 2
      %v2643 = vrot.slane %v2367, 2
      %v2644 = vsel %vm949, %v2642, %v2643
      %v2645 = vrot.slane %v2368, 2
      %v2646 = vsel %vm949, %v2643, %v2645
      %v2647 = vrot.slane %v2369, 2
      %v2648 = vrot.slane %v2370, 2
      %v2649 = vsel %vm949, %v2647, %v2648
      %v2650 = vrot.slane %v2371, 2
      %v2651 = vsel %vm949, %v2648, %v2650
      %v2652 = vrot.slane %v2372, 2
      %v2653 = vrot.slane %v2373, 2
      %v2654 = vsel %vm949, %v2652, %v2653
      %v2655 = vrot.slane %v2374, 2
      %v2656 = vsel %vm949, %v2653, %v2655
      %v2657 = vrot.slane %v2375, 2
      %v2658 = vrot.slane %v2376, 2
      %v2659 = vsel %vm949, %v2657, %v2658
      %v2660 = vrot.slane %v2377, 2
      %v2661 = vsel %vm949, %v2658, %v2660
      %v2662 = vrot.slane %v2378, 2
      %v2663 = vrot.slane %v2379, 2
      %v2664 = vsel %vm949, %v2662, %v2663
      %v2665 = vrot.slane %v2380, 2
      %v2666 = vsel %vm949, %v2663, %v2665
      %v2667 = vrot.slane %v2381, 2
      %v2668 = vrot.slane %v2382, 2
      %v2669 = vsel %vm949, %v2667, %v2668
      %v2670 = vrot.slane %v2383, 2
      %v2671 = vsel %vm949, %v2668, %v2670
      %v2672 = vrot.slane %v2384, 2
      %v2673 = vrot.slane %v2385, 2
      %v2674 = vsel %vm949, %v2672, %v2673
      %v2675 = vrot.slane %v2386, 2
      %v2676 = vsel %vm949, %v2673, %v2675
      %v2677 = vrot.slane %v2387, 2
      %v2678 = vrot.slane %v2388, 2
      %v2679 = vsel %vm949, %v2677, %v2678
      %v2680 = vrot.slane %v2389, 2
      %v2681 = vsel %vm949, %v2678, %v2680
      %v2682 = vrot.slane %v2390, 2
      %v2683 = vrot.slane %v2391, 2
      %v2684 = vsel %vm949, %v2682, %v2683
      %v2685 = vrot.slane %v2392, 2
      %v2686 = vsel %vm949, %v2683, %v2685
      %v2687 = vrot.slane %v2393, 2
      %v2688 = vrot.slane %v2394, 2
      %v2689 = vsel %vm949, %v2687, %v2688
      %v2690 = vrot.slane %v2395, 2
      %v2691 = vsel %vm949, %v2688, %v2690
      %v2692 = vrot.slane %v2396, 2
      %v2693 = vrot.slane %v2397, 2
      %v2694 = vsel %vm949, %v2692, %v2693
      %v2695 = vrot.slane %v2398, 2
      %v2696 = vsel %vm949, %v2693, %v2695
      %v2697 = vrot.slane %v2399, 2
      %v2698 = vrot.slane %v2400, 2
      %v2699 = vsel %vm949, %v2697, %v2698
      %v2700 = vrot.slane %v2401, 2
      %v2701 = vsel %vm949, %v2698, %v2700
      %v2702 = vrot.slane %v2402, 2
      %v2703 = vrot.slane %v2403, 2
      %v2704 = vsel %vm949, %v2702, %v2703
      %v2705 = vrot.slane %v2404, 2
      %v2706 = vsel %vm949, %v2703, %v2705
      %v2707 = vrot.slane %v2405, 2
      %v2708 = vrot.slane %v2406, 2
      %v2709 = vsel %vm949, %v2707, %v2708
      %v2710 = vrot.slane %v2407, 2
      %v2711 = vsel %vm949, %v2708, %v2710
      %2712 = vrot.lane.b32.xlu0 %v2634, 8
      %v2713 = vpop.permute.xlu0 %2712
      %2714 = vrot.lane.b32.xlu0 %v2636, 8
      %v2715 = vpop.permute.xlu0 %2714
      %2716 = vrot.lane.b32.xlu0 %v2639, 8
      %v2717 = vpop.permute.xlu0 %2716
      %2718 = vrot.lane.b32.xlu0 %v2641, 8
      %v2719 = vpop.permute.xlu0 %2718
      %2720 = vrot.lane.b32.xlu0 %v2644, 8
      %v2721 = vpop.permute.xlu0 %2720
      %2722 = vrot.lane.b32.xlu0 %v2646, 8
      %v2723 = vpop.permute.xlu0 %2722
      %2724 = vrot.lane.b32.xlu0 %v2649, 8
      %v2725 = vpop.permute.xlu0 %2724
      %2726 = vrot.lane.b32.xlu0 %v2651, 8
      %v2727 = vpop.permute.xlu0 %2726
      %2728 = vrot.lane.b32.xlu0 %v2654, 8
      %v2729 = vpop.permute.xlu0 %2728
      %2730 = vrot.lane.b32.xlu0 %v2656, 8
      %v2731 = vpop.permute.xlu0 %2730
      %2732 = vrot.lane.b32.xlu0 %v2659, 8
      %v2733 = vpop.permute.xlu0 %2732
      %2734 = vrot.lane.b32.xlu0 %v2661, 8
      %v2735 = vpop.permute.xlu0 %2734
      %2736 = vrot.lane.b32.xlu0 %v2664, 8
      %v2737 = vpop.permute.xlu0 %2736
      %2738 = vrot.lane.b32.xlu0 %v2666, 8
      %v2739 = vpop.permute.xlu0 %2738
      %2740 = vrot.lane.b32.xlu0 %v2669, 8
      %v2741 = vpop.permute.xlu0 %2740
      %2742 = vrot.lane.b32.xlu0 %v2671, 8
      %v2743 = vpop.permute.xlu0 %2742
      %2744 = vrot.lane.b32.xlu0 %v2674, 8
      %v2745 = vpop.permute.xlu0 %2744
      %2746 = vrot.lane.b32.xlu0 %v2676, 8
      %v2747 = vpop.permute.xlu0 %2746
      %2748 = vrot.lane.b32.xlu0 %v2679, 8
      %v2749 = vpop.permute.xlu0 %2748
      %2750 = vrot.lane.b32.xlu0 %v2681, 8
      %v2751 = vpop.permute.xlu0 %2750
      %2752 = vrot.lane.b32.xlu0 %v2684, 8
      %v2753 = vpop.permute.xlu0 %2752
      %2754 = vrot.lane.b32.xlu0 %v2686, 8
      %v2755 = vpop.permute.xlu0 %2754
      %2756 = vrot.lane.b32.xlu0 %v2689, 8
      %v2757 = vpop.permute.xlu0 %2756
      %2758 = vrot.lane.b32.xlu0 %v2691, 8
      %v2759 = vpop.permute.xlu0 %2758
      %2760 = vrot.lane.b32.xlu0 %v2694, 8
      %v2761 = vpop.permute.xlu0 %2760
      %2762 = vrot.lane.b32.xlu0 %v2696, 8
      %v2763 = vpop.permute.xlu0 %2762
      %2764 = vrot.lane.b32.xlu0 %v2699, 8
      %v2765 = vpop.permute.xlu0 %2764
      %2766 = vrot.lane.b32.xlu0 %v2701, 8
      %v2767 = vpop.permute.xlu0 %2766
      %2768 = vrot.lane.b32.xlu0 %v2704, 8
      %v2769 = vpop.permute.xlu0 %2768
      %2770 = vrot.lane.b32.xlu0 %v2706, 8
      %v2771 = vpop.permute.xlu0 %2770
      %2772 = vrot.lane.b32.xlu0 %v2709, 8
      %v2773 = vpop.permute.xlu0 %2772
      %2774 = vrot.lane.b32.xlu0 %v2711, 8
      %v2775 = vpop.permute.xlu0 %2774
      %v2808 = vsel %vm620, %v2360, %v2537
      %v2809 = vsel %vm620, %v2361, %v2539
      %v2810 = vsel %vm620, %v2363, %v2541
      %v2811 = vsel %vm620, %v2364, %v2543
      %v2812 = vsel %vm620, %v2366, %v2545
      %v2813 = vsel %vm620, %v2367, %v2547
      %v2814 = vsel %vm620, %v2369, %v2549
      %v2815 = vsel %vm620, %v2370, %v2551
      %v2816 = vsel %vm620, %v2372, %v2553
      %v2817 = vsel %vm620, %v2373, %v2555
      %v2818 = vsel %vm620, %v2375, %v2557
      %v2819 = vsel %vm620, %v2376, %v2559
      %v2820 = vsel %vm620, %v2378, %v2561
      %v2821 = vsel %vm620, %v2379, %v2563
      %v2822 = vsel %vm620, %v2381, %v2565
      %v2823 = vsel %vm620, %v2382, %v2567
      %v2824 = vsel %vm620, %v2384, %v2569
      %v2825 = vsel %vm620, %v2385, %v2571
      %v2826 = vsel %vm620, %v2387, %v2573
      %v2827 = vsel %vm620, %v2388, %v2575
      %v2828 = vsel %vm620, %v2390, %v2577
      %v2829 = vsel %vm620, %v2391, %v2579
      %v2830 = vsel %vm620, %v2393, %v2581
      %v2831 = vsel %vm620, %v2394, %v2583
      %v2832 = vsel %vm620, %v2396, %v2585
      %v2833 = vsel %vm620, %v2397, %v2587
      %v2834 = vsel %vm620, %v2399, %v2589
      %v2835 = vsel %vm620, %v2400, %v2591
      %v2836 = vsel %vm620, %v2402, %v2593
      %v2837 = vsel %vm620, %v2403, %v2595
      %v2838 = vsel %vm620, %v2405, %v2597
      %v2839 = vsel %vm620, %v2406, %v2599
      %v2840 = vsel %vm1158, %v2808, %v2713
      %v2841 = vsel %vm1158, %v2809, %v2715
      %v2842 = vsel %vm1158, %v2810, %v2717
      %v2843 = vsel %vm1158, %v2811, %v2719
      %v2844 = vsel %vm1158, %v2812, %v2721
      %v2845 = vsel %vm1158, %v2813, %v2723
      %v2846 = vsel %vm1158, %v2814, %v2725
      %v2847 = vsel %vm1158, %v2815, %v2727
      %v2848 = vsel %vm1158, %v2816, %v2729
      %v2849 = vsel %vm1158, %v2817, %v2731
      %v2850 = vsel %vm1158, %v2818, %v2733
      %v2851 = vsel %vm1158, %v2819, %v2735
      %v2852 = vsel %vm1158, %v2820, %v2737
      %v2853 = vsel %vm1158, %v2821, %v2739
      %v2854 = vsel %vm1158, %v2822, %v2741
      %v2855 = vsel %vm1158, %v2823, %v2743
      %v2856 = vsel %vm1158, %v2824, %v2745
      %v2857 = vsel %vm1158, %v2825, %v2747
      %v2858 = vsel %vm1158, %v2826, %v2749
      %v2859 = vsel %vm1158, %v2827, %v2751
      %v2860 = vsel %vm1158, %v2828, %v2753
      %v2861 = vsel %vm1158, %v2829, %v2755
      %v2862 = vsel %vm1158, %v2830, %v2757
      %v2863 = vsel %vm1158, %v2831, %v2759
      %v2864 = vsel %vm1158, %v2832, %v2761
      %v2865 = vsel %vm1158, %v2833, %v2763
      %v2866 = vsel %vm1158, %v2834, %v2765
      %v2867 = vsel %vm1158, %v2835, %v2767
      %v2868 = vsel %vm1158, %v2836, %v2769
      %v2869 = vsel %vm1158, %v2837, %v2771
      %v2870 = vsel %vm1158, %v2838, %v2773
      %v2871 = vsel %vm1158, %v2839, %v2775
      %s2872 = scalar_lea.vmem %s1, 32
      %v2873 = vld [vmem:[%s2872] sm:$0xff]
      %v2874 = vld [vmem:[%s2872 + $0x8] sm:$0xf]
      %v2876 = vsel %vm1709, %v2840, 0
      %v2879 = vsel %vm1709, %v2841, 0
      %v2882 = vsel %vm1709, %v2842, 0
      %v2885 = vsel %vm1709, %v2843, 0
      %v2888 = vsel %vm1709, %v2844, 0
      %v2891 = vsel %vm1709, %v2845, 0
      %v2894 = vsel %vm1709, %v2846, 0
      %v2897 = vsel %vm1709, %v2847, 0
      %v2900 = vsel %vm1709, %v2848, 0
      %v2903 = vsel %vm1709, %v2849, 0
      %v2906 = vsel %vm1709, %v2850, 0
      %v2909 = vsel %vm1709, %v2851, 0
      %v2912 = vsel %vm1709, %v2852, 0
      %v2915 = vsel %vm1709, %v2853, 0
      %v2918 = vsel %vm1709, %v2854, 0
      %v2921 = vsel %vm1709, %v2855, 0
      %v2924 = vsel %vm1709, %v2856, 0
      %v2927 = vsel %vm1709, %v2857, 0
      %v2930 = vsel %vm1709, %v2858, 0
      %v2933 = vsel %vm1709, %v2859, 0
      %v2936 = vsel %vm1709, %v2860, 0
      %v2939 = vsel %vm1709, %v2861, 0
      %v2942 = vsel %vm1709, %v2862, 0
      %v2945 = vsel %vm1709, %v2863, 0
      %v2948 = vsel %vm1709, %v2864, 0
      %v2951 = vsel %vm1709, %v2865, 0
      %v2954 = vsel %vm1709, %v2866, 0
      %v2957 = vsel %vm1709, %v2867, 0
      %v2960 = vsel %vm1709, %v2868, 0
      %v2963 = vsel %vm1709, %v2869, 0
      %v2966 = vsel %vm1709, %v2870, 0
      %v2969 = vsel %vm1709, %v2871, 0
      %v2972 = vsel %vm1806, %v2874, 0
      %2974 = vmatprep.subr.mxu0 0.0
      %2975 = vmatpush1.msra.mxu0 %v2873
      %2976 = vmatprep.subr.mxu0 0.0
      %2977 = vmatpush1.msra.mxu0 %v2972
      %2978 = vmatprep.subr.mxu0 0.0
      %2979 = vmatpush1.msra.mxu0 0.0
      %2980 = vmatprep.subr.mxu0 0.0
      %2981 = vmatpush1.msra.mxu0 0.0
      %2982 = vmatprep.subr.mxu0 0.0
      %2983 = vmatpush1.msra.mxu0 0.0
      %2984 = vmatprep.subr.mxu0 0.0
      %2985 = vmatpush1.msra.mxu0 0.0
      %2986 = vmatprep.subr.mxu0 0.0
      %2987 = vmatpush1.msra.mxu0 0.0
      %2988 = vmatprep.subr.mxu0 0.0
      %2989 = vmatpush1.msra.mxu0 0.0
      %2990 = vmatprep.subr.mxu0 0.0
      %2991 = vmatpush1.msra.mxu0 0.0
      %2992 = vmatprep.subr.mxu0 0.0
      %2993 = vmatpush1.msra.mxu0 0.0
      %2994 = vmatprep.subr.mxu0 0.0
      %2995 = vmatpush1.msra.mxu0 0.0
      %2996 = vmatprep.subr.mxu0 0.0
      %2997 = vmatpush1.msra.mxu0 0.0
      %2998 = vmatprep.subr.mxu0 0.0
      %2999 = vmatpush1.msra.mxu0 0.0
      %3000 = vmatprep.subr.mxu0 0.0
      %3001 = vmatpush1.msra.mxu0 0.0
      %3002 = vmatprep.subr.mxu0 0.0
      %3003 = vmatpush1.msra.mxu0 0.0
      %3004 = vmatprep.subr.mxu0 0.0
      %3005 = vmatpush1.msra.mxu0 0.0
      %3006 = vmatprep.subr.mxu0 0.0
      %3007 = vmatpush1.msra.mxu0 0.0
      %3008 = vmatprep.subr.mxu0 0.0
      %3009 = vmatpush1.msra.mxu0 0.0
      %3010 = vmatprep.subr.mxu0 0.0
      %3011 = vmatpush1.msra.mxu0 0.0
      %3012 = vmatprep.subr.mxu0 0.0
      %3013 = vmatpush1.msra.mxu0 0.0
      %3014 = vmatprep.subr.mxu0 0.0
      %3015 = vmatpush1.msra.mxu0 0.0
      %3016 = vmatprep.subr.mxu0 0.0
      %3017 = vmatpush1.msra.mxu0 0.0
      %3018 = vmatprep.subr.mxu0 0.0
      %3019 = vmatpush1.msra.mxu0 0.0
      %3020 = vmatprep.subr.mxu0 0.0
      %3021 = vmatpush1.msra.mxu0 0.0
      %3022 = vmatprep.subr.mxu0 0.0
      %3023 = vmatpush1.msra.mxu0 0.0
      %3024 = vmatprep.subr.mxu0 0.0
      %3025 = vmatpush1.msra.mxu0 0.0
      %3026 = vmatprep.subr.mxu0 0.0
      %3027 = vmatpush1.msra.mxu0 0.0
      %3028 = vmatprep.subr.mxu0 0.0
      %3029 = vmatpush1.msra.mxu0 0.0
      %3030 = vmatprep.subr.mxu0 0.0
      %3031 = vmatpush1.msra.mxu0 0.0
      %3032 = vmatprep.subr.mxu0 0.0
      %3033 = vmatpush1.msra.mxu0 0.0
      %3034 = vmatprep.subr.mxu0 0.0
      %3035 = vmatpush1.msra.mxu0 0.0
      %3036 = vmatprep.subr.mxu0 0.0
      %3037 = vmatpush1.msra.mxu0 0.0
      %3038 = vmatprep.mubr.f32.mxu0 0.0
      %3039 = vmatmul.mubr.f32.gmra.mrb[0].mxu0 %v2876
      %v3040 = vpop.f32.mrb[0].mxu0
      %v3041 = vadd.f32 0.0, %v3040
      %v3042 = vpop.f32.mrb[0].mxu0
      %3043 = vmatprep.mubr.f32.mxu0 0.0
      %3044 = vmatmul.mubr.f32.gmra.mrb[0].mxu0 %v2879
      %v3045 = vpop.f32.mrb[0].mxu0
      %v3046 = vadd.f32 0.0, %v3045
      %v3047 = vpop.f32.mrb[0].mxu0
      %3048 = vmatprep.mubr.f32.mxu0 0.0
      %3049 = vmatmul.mubr.f32.gmra.mrb[0].mxu0 %v2882
      %v3050 = vpop.f32.mrb[0].mxu0
      %v3051 = vadd.f32 0.0, %v3050
      %v3052 = vpop.f32.mrb[0].mxu0
      %3053 = vmatprep.mubr.f32.mxu0 0.0
      %3054 = vmatmul.mubr.f32.gmra.mrb[0].mxu0 %v2885
      %v3055 = vpop.f32.mrb[0].mxu0
      %v3056 = vadd.f32 0.0, %v3055
      %v3057 = vpop.f32.mrb[0].mxu0
      %3058 = vmatprep.mubr.f32.mxu0 0.0
      %3059 = vmatmul.mubr.f32.gmra.mrb[0].mxu0 %v2888
      %v3060 = vpop.f32.mrb[0].mxu0
      %v3061 = vadd.f32 0.0, %v3060
      %v3062 = vpop.f32.mrb[0].mxu0
      %3063 = vmatprep.mubr.f32.mxu0 0.0
      %3064 = vmatmul.mubr.f32.gmra.mrb[0].mxu0 %v2891
      %v3065 = vpop.f32.mrb[0].mxu0
      %v3066 = vadd.f32 0.0, %v3065
      %v3067 = vpop.f32.mrb[0].mxu0
      %3068 = vmatprep.mubr.f32.mxu0 0.0
      %3069 = vmatmul.mubr.f32.gmra.mrb[0].mxu0 %v2894
      %v3070 = vpop.f32.mrb[0].mxu0
      %v3071 = vadd.f32 0.0, %v3070
      %v3072 = vpop.f32.mrb[0].mxu0
      %3073 = vmatprep.mubr.f32.mxu0 0.0
      %3074 = vmatmul.mubr.f32.gmra.mrb[0].mxu0 %v2897
      %v3075 = vpop.f32.mrb[0].mxu0
      %v3076 = vadd.f32 0.0, %v3075
      %v3077 = vpop.f32.mrb[0].mxu0
      %3078 = vmatprep.mubr.f32.mxu0 0.0
      %3079 = vmatmul.mubr.f32.gmra.mrb[0].mxu0 %v2900
      %v3080 = vpop.f32.mrb[0].mxu0
      %v3081 = vadd.f32 0.0, %v3080
      %v3082 = vpop.f32.mrb[0].mxu0
      %3083 = vmatprep.mubr.f32.mxu0 0.0
      %3084 = vmatmul.mubr.f32.gmra.mrb[0].mxu0 %v2903
      %v3085 = vpop.f32.mrb[0].mxu0
      %v3086 = vadd.f32 0.0, %v3085
      %v3087 = vpop.f32.mrb[0].mxu0
      %3088 = vmatprep.mubr.f32.mxu0 0.0
      %3089 = vmatmul.mubr.f32.gmra.mrb[0].mxu0 %v2906
      %v3090 = vpop.f32.mrb[0].mxu0
      %v3091 = vadd.f32 0.0, %v3090
      %v3092 = vpop.f32.mrb[0].mxu0
      %3093 = vmatprep.mubr.f32.mxu0 0.0
      %3094 = vmatmul.mubr.f32.gmra.mrb[0].mxu0 %v2909
      %v3095 = vpop.f32.mrb[0].mxu0
      %v3096 = vadd.f32 0.0, %v3095
      %v3097 = vpop.f32.mrb[0].mxu0
      %3098 = vmatprep.mubr.f32.mxu0 0.0
      %3099 = vmatmul.mubr.f32.gmra.mrb[0].mxu0 %v2912
      %v3100 = vpop.f32.mrb[0].mxu0
      %v3101 = vadd.f32 0.0, %v3100
      %v3102 = vpop.f32.mrb[0].mxu0
      %3103 = vmatprep.mubr.f32.mxu0 0.0
      %3104 = vmatmul.mubr.f32.gmra.mrb[0].mxu0 %v2915
      %v3105 = vpop.f32.mrb[0].mxu0
      %v3106 = vadd.f32 0.0, %v3105
      %v3107 = vpop.f32.mrb[0].mxu0
      %3108 = vmatprep.mubr.f32.mxu0 0.0
      %3109 = vmatmul.mubr.f32.gmra.mrb[0].mxu0 %v2918
      %v3110 = vpop.f32.mrb[0].mxu0
      %v3111 = vadd.f32 0.0, %v3110
      %v3112 = vpop.f32.mrb[0].mxu0
      %3113 = vmatprep.mubr.f32.mxu0 0.0
      %3114 = vmatmul.mubr.f32.gmra.mrb[0].mxu0 %v2921
      %v3115 = vpop.f32.mrb[0].mxu0
      %v3116 = vadd.f32 0.0, %v3115
      %v3117 = vpop.f32.mrb[0].mxu0
      %3118 = vmatprep.mubr.f32.mxu0 0.0
      %3119 = vmatmul.mubr.f32.gmra.mrb[0].mxu0 %v2924
      %v3120 = vpop.f32.mrb[0].mxu0
      %v3121 = vadd.f32 0.0, %v3120
      %v3122 = vpop.f32.mrb[0].mxu0
      %3123 = vmatprep.mubr.f32.mxu0 0.0
      %3124 = vmatmul.mubr.f32.gmra.mrb[0].mxu0 %v2927
      %v3125 = vpop.f32.mrb[0].mxu0
      %v3126 = vadd.f32 0.0, %v3125
      %v3127 = vpop.f32.mrb[0].mxu0
      %3128 = vmatprep.mubr.f32.mxu0 0.0
      %3129 = vmatmul.mubr.f32.gmra.mrb[0].mxu0 %v2930
      %v3130 = vpop.f32.mrb[0].mxu0
      %v3131 = vadd.f32 0.0, %v3130
      %v3132 = vpop.f32.mrb[0].mxu0
      %3133 = vmatprep.mubr.f32.mxu0 0.0
      %3134 = vmatmul.mubr.f32.gmra.mrb[0].mxu0 %v2933
      %v3135 = vpop.f32.mrb[0].mxu0
      %v3136 = vadd.f32 0.0, %v3135
      %v3137 = vpop.f32.mrb[0].mxu0
      %3138 = vmatprep.mubr.f32.mxu0 0.0
      %3139 = vmatmul.mubr.f32.gmra.mrb[0].mxu0 %v2936
      %v3140 = vpop.f32.mrb[0].mxu0
      %v3141 = vadd.f32 0.0, %v3140
      %v3142 = vpop.f32.mrb[0].mxu0
      %3143 = vmatprep.mubr.f32.mxu0 0.0
      %3144 = vmatmul.mubr.f32.gmra.mrb[0].mxu0 %v2939
      %v3145 = vpop.f32.mrb[0].mxu0
      %v3146 = vadd.f32 0.0, %v3145
      %v3147 = vpop.f32.mrb[0].mxu0
      %3148 = vmatprep.mubr.f32.mxu0 0.0
      %3149 = vmatmul.mubr.f32.gmra.mrb[0].mxu0 %v2942
      %v3150 = vpop.f32.mrb[0].mxu0
      %v3151 = vadd.f32 0.0, %v3150
      %v3152 = vpop.f32.mrb[0].mxu0
      %3153 = vmatprep.mubr.f32.mxu0 0.0
      %3154 = vmatmul.mubr.f32.gmra.mrb[0].mxu0 %v2945
      %v3155 = vpop.f32.mrb[0].mxu0
      %v3156 = vadd.f32 0.0, %v3155
      %v3157 = vpop.f32.mrb[0].mxu0
      %3158 = vmatprep.mubr.f32.mxu0 0.0
      %3159 = vmatmul.mubr.f32.gmra.mrb[0].mxu0 %v2948
      %v3160 = vpop.f32.mrb[0].mxu0
      %v3161 = vadd.f32 0.0, %v3160
      %v3162 = vpop.f32.mrb[0].mxu0
      %3163 = vmatprep.mubr.f32.mxu0 0.0
      %3164 = vmatmul.mubr.f32.gmra.mrb[0].mxu0 %v2951
      %v3165 = vpop.f32.mrb[0].mxu0
      %v3166 = vadd.f32 0.0, %v3165
      %v3167 = vpop.f32.mrb[0].mxu0
      %3168 = vmatprep.mubr.f32.mxu0 0.0
      %3169 = vmatmul.mubr.f32.gmra.mrb[0].mxu0 %v2954
      %v3170 = vpop.f32.mrb[0].mxu0
      %v3171 = vadd.f32 0.0, %v3170
      %v3172 = vpop.f32.mrb[0].mxu0
      %3173 = vmatprep.mubr.f32.mxu0 0.0
      %3174 = vmatmul.mubr.f32.gmra.mrb[0].mxu0 %v2957
      %v3175 = vpop.f32.mrb[0].mxu0
      %v3176 = vadd.f32 0.0, %v3175
      %v3177 = vpop.f32.mrb[0].mxu0
      %3178 = vmatprep.mubr.f32.mxu0 0.0
      %3179 = vmatmul.mubr.f32.gmra.mrb[0].mxu0 %v2960
      %v3180 = vpop.f32.mrb[0].mxu0
      %v3181 = vadd.f32 0.0, %v3180
      %v3182 = vpop.f32.mrb[0].mxu0
      %3183 = vmatprep.mubr.f32.mxu0 0.0
      %3184 = vmatmul.mubr.f32.gmra.mrb[0].mxu0 %v2963
      %v3185 = vpop.f32.mrb[0].mxu0
      %v3186 = vadd.f32 0.0, %v3185
      %v3187 = vpop.f32.mrb[0].mxu0
      %3188 = vmatprep.mubr.f32.mxu0 0.0
      %3189 = vmatmul.mubr.f32.gmra.mrb[0].mxu0 %v2966
      %v3190 = vpop.f32.mrb[0].mxu0
      %v3191 = vadd.f32 0.0, %v3190
      %v3192 = vpop.f32.mrb[0].mxu0
      %3193 = vmatprep.mubr.f32.mxu0 0.0
      %3194 = vmatmul.mubr.f32.gmra.mrb[0].mxu0 %v2969
      %v3195 = vpop.f32.mrb[0].mxu0
      %v3196 = vadd.f32 0.0, %v3195
      %v3197 = vpop.f32.mrb[0].mxu0
      %3198 = vdwg.mxu0
      %v3199 = vadd.f32 %v2201, %v3041
      %v3200 = vadd.f32 %v2206, %v3046
      %v3201 = vadd.f32 %v2211, %v3051
      %v3202 = vadd.f32 %v2216, %v3056
      %v3203 = vadd.f32 %v2221, %v3061
      %v3204 = vadd.f32 %v2226, %v3066
      %v3205 = vadd.f32 %v2231, %v3071
      %v3206 = vadd.f32 %v2236, %v3076
      %v3207 = vadd.f32 %v2241, %v3081
      %v3208 = vadd.f32 %v2246, %v3086
      %v3209 = vadd.f32 %v2251, %v3091
      %v3210 = vadd.f32 %v2256, %v3096
      %v3211 = vadd.f32 %v2261, %v3101
      %v3212 = vadd.f32 %v2266, %v3106
      %v3213 = vadd.f32 %v2271, %v3111
      %v3214 = vadd.f32 %v2276, %v3116
      %v3215 = vadd.f32 %v2281, %v3121
      %v3216 = vadd.f32 %v2286, %v3126
      %v3217 = vadd.f32 %v2291, %v3131
      %v3218 = vadd.f32 %v2296, %v3136
      %v3219 = vadd.f32 %v2301, %v3141
      %v3220 = vadd.f32 %v2306, %v3146
      %v3221 = vadd.f32 %v2311, %v3151
      %v3222 = vadd.f32 %v2316, %v3156
      %v3223 = vadd.f32 %v2321, %v3161
      %v3224 = vadd.f32 %v2326, %v3166
      %v3225 = vadd.f32 %v2331, %v3171
      %v3226 = vadd.f32 %v2336, %v3176
      %v3227 = vadd.f32 %v2341, %v3181
      %v3228 = vadd.f32 %v2346, %v3186
      %v3229 = vadd.f32 %v2351, %v3191
      %v3230 = vadd.f32 %v2356, %v3196
      %v3231 = vld [vmem:[%s2] sm:$0x1]
      %v3232 = vld [vmem:[%s3] sm:$0x1]
      %v3233 = vsel %vm620, %v3199, 0.0
      %v3234 = vsel %vm620, %v3200, 0.0
      %v3235 = vadd.f32 %v3233, %v3234
      %v3236 = vsel %vm620, %v3201, 0.0
      %v3237 = vadd.f32 %v3235, %v3236
      %v3238 = vsel %vm620, %v3202, 0.0
      %v3239 = vadd.f32 %v3237, %v3238
      %v3240 = vsel %vm620, %v3203, 0.0
      %v3241 = vadd.f32 %v3239, %v3240
      %v3242 = vsel %vm620, %v3204, 0.0
      %v3243 = vadd.f32 %v3241, %v3242
      %v3244 = vsel %vm620, %v3205, 0.0
      %v3245 = vadd.f32 %v3243, %v3244
      %v3246 = vsel %vm620, %v3206, 0.0
      %v3247 = vadd.f32 %v3245, %v3246
      %v3248 = vsel %vm620, %v3207, 0.0
      %v3249 = vadd.f32 %v3247, %v3248
      %v3250 = vsel %vm620, %v3208, 0.0
      %v3251 = vadd.f32 %v3249, %v3250
      %v3252 = vsel %vm620, %v3209, 0.0
      %v3253 = vadd.f32 %v3251, %v3252
      %v3254 = vsel %vm620, %v3210, 0.0
      %v3255 = vadd.f32 %v3253, %v3254
      %v3256 = vsel %vm620, %v3211, 0.0
      %v3257 = vadd.f32 %v3255, %v3256
      %v3258 = vsel %vm620, %v3212, 0.0
      %v3259 = vadd.f32 %v3257, %v3258
      %v3260 = vsel %vm620, %v3213, 0.0
      %v3261 = vadd.f32 %v3259, %v3260
      %v3262 = vsel %vm620, %v3214, 0.0
      %v3263 = vadd.f32 %v3261, %v3262
      %v3264 = vsel %vm620, %v3215, 0.0
      %v3265 = vadd.f32 %v3263, %v3264
      %v3266 = vsel %vm620, %v3216, 0.0
      %v3267 = vadd.f32 %v3265, %v3266
      %v3268 = vsel %vm620, %v3217, 0.0
      %v3269 = vadd.f32 %v3267, %v3268
      %v3270 = vsel %vm620, %v3218, 0.0
      %v3271 = vadd.f32 %v3269, %v3270
      %v3272 = vsel %vm620, %v3219, 0.0
      %v3273 = vadd.f32 %v3271, %v3272
      %v3274 = vsel %vm620, %v3220, 0.0
      %v3275 = vadd.f32 %v3273, %v3274
      %v3276 = vsel %vm620, %v3221, 0.0
      %v3277 = vadd.f32 %v3275, %v3276
      %v3278 = vsel %vm620, %v3222, 0.0
      %v3279 = vadd.f32 %v3277, %v3278
      %v3280 = vsel %vm620, %v3223, 0.0
      %v3281 = vadd.f32 %v3279, %v3280
      %v3282 = vsel %vm620, %v3224, 0.0
      %v3283 = vadd.f32 %v3281, %v3282
      %v3284 = vsel %vm620, %v3225, 0.0
      %v3285 = vadd.f32 %v3283, %v3284
      %v3286 = vsel %vm620, %v3226, 0.0
      %v3287 = vadd.f32 %v3285, %v3286
      %v3288 = vsel %vm620, %v3227, 0.0
      %v3289 = vadd.f32 %v3287, %v3288
      %v3290 = vsel %vm620, %v3228, 0.0
      %v3291 = vadd.f32 %v3289, %v3290
      %v3292 = vsel %vm620, %v3229, 0.0
      %v3293 = vadd.f32 %v3291, %v3292
      %v3294 = vsel %vm620, %v3230, 0.0
      %v3295 = vadd.f32 %v3293, %v3294
      %v3296 = vrot.slane %v3295, 4
      %v3297 = vadd.f32 %v3295, %v3296
      %v3298 = vrot.slane %v3297, 2
      %v3299 = vadd.f32 %v3297, %v3298
      %v3300 = vrot.slane %v3299, 1
      %v3301 = vadd.f32 %v3299, %v3300
      %v3302 = vrcp.pop 256.0
      %v3303 = vmul.f32 %v3301, %v3302
      %v3304 = vsub.f32 %v3199, %v3303
      %v3305 = vsub.f32 %v3200, %v3303
      %v3306 = vsub.f32 %v3201, %v3303
      %v3307 = vsub.f32 %v3202, %v3303
      %v3308 = vsub.f32 %v3203, %v3303
      %v3309 = vsub.f32 %v3204, %v3303
      %v3310 = vsub.f32 %v3205, %v3303
      %v3311 = vsub.f32 %v3206, %v3303
      %v3312 = vsub.f32 %v3207, %v3303
      %v3313 = vsub.f32 %v3208, %v3303
      %v3314 = vsub.f32 %v3209, %v3303
      %v3315 = vsub.f32 %v3210, %v3303
      %v3316 = vsub.f32 %v3211, %v3303
      %v3317 = vsub.f32 %v3212, %v3303
      %v3318 = vsub.f32 %v3213, %v3303
      %v3319 = vsub.f32 %v3214, %v3303
      %v3320 = vsub.f32 %v3215, %v3303
      %v3321 = vsub.f32 %v3216, %v3303
      %v3322 = vsub.f32 %v3217, %v3303
      %v3323 = vsub.f32 %v3218, %v3303
      %v3324 = vsub.f32 %v3219, %v3303
      %v3325 = vsub.f32 %v3220, %v3303
      %v3326 = vsub.f32 %v3221, %v3303
      %v3327 = vsub.f32 %v3222, %v3303
      %v3328 = vsub.f32 %v3223, %v3303
      %v3329 = vsub.f32 %v3224, %v3303
      %v3330 = vsub.f32 %v3225, %v3303
      %v3331 = vsub.f32 %v3226, %v3303
      %v3332 = vsub.f32 %v3227, %v3303
      %v3333 = vsub.f32 %v3228, %v3303
      %v3334 = vsub.f32 %v3229, %v3303
      %v3335 = vsub.f32 %v3230, %v3303
      %v3336 = vmul.f32 %v3304, %v3304
      %v3337 = vmul.f32 %v3305, %v3305
      %v3338 = vmul.f32 %v3306, %v3306
      %v3339 = vmul.f32 %v3307, %v3307
      %v3340 = vmul.f32 %v3308, %v3308
      %v3341 = vmul.f32 %v3309, %v3309
      %v3342 = vmul.f32 %v3310, %v3310
      %v3343 = vmul.f32 %v3311, %v3311
      %v3344 = vmul.f32 %v3312, %v3312
      %v3345 = vmul.f32 %v3313, %v3313
      %v3346 = vmul.f32 %v3314, %v3314
      %v3347 = vmul.f32 %v3315, %v3315
      %v3348 = vmul.f32 %v3316, %v3316
      %v3349 = vmul.f32 %v3317, %v3317
      %v3350 = vmul.f32 %v3318, %v3318
      %v3351 = vmul.f32 %v3319, %v3319
      %v3352 = vmul.f32 %v3320, %v3320
      %v3353 = vmul.f32 %v3321, %v3321
      %v3354 = vmul.f32 %v3322, %v3322
      %v3355 = vmul.f32 %v3323, %v3323
      %v3356 = vmul.f32 %v3324, %v3324
      %v3357 = vmul.f32 %v3325, %v3325
      %v3358 = vmul.f32 %v3326, %v3326
      %v3359 = vmul.f32 %v3327, %v3327
      %v3360 = vmul.f32 %v3328, %v3328
      %v3361 = vmul.f32 %v3329, %v3329
      %v3362 = vmul.f32 %v3330, %v3330
      %v3363 = vmul.f32 %v3331, %v3331
      %v3364 = vmul.f32 %v3332, %v3332
      %v3365 = vmul.f32 %v3333, %v3333
      %v3366 = vmul.f32 %v3334, %v3334
      %v3367 = vmul.f32 %v3335, %v3335
      %v3368 = vsel %vm620, %v3336, 0.0
      %v3369 = vsel %vm620, %v3337, 0.0
      %v3370 = vadd.f32 %v3368, %v3369
      %v3371 = vsel %vm620, %v3338, 0.0
      %v3372 = vadd.f32 %v3370, %v3371
      %v3373 = vsel %vm620, %v3339, 0.0
      %v3374 = vadd.f32 %v3372, %v3373
      %v3375 = vsel %vm620, %v3340, 0.0
      %v3376 = vadd.f32 %v3374, %v3375
      %v3377 = vsel %vm620, %v3341, 0.0
      %v3378 = vadd.f32 %v3376, %v3377
      %v3379 = vsel %vm620, %v3342, 0.0
      %v3380 = vadd.f32 %v3378, %v3379
      %v3381 = vsel %vm620, %v3343, 0.0
      %v3382 = vadd.f32 %v3380, %v3381
      %v3383 = vsel %vm620, %v3344, 0.0
      %v3384 = vadd.f32 %v3382, %v3383
      %v3385 = vsel %vm620, %v3345, 0.0
      %v3386 = vadd.f32 %v3384, %v3385
      %v3387 = vsel %vm620, %v3346, 0.0
      %v3388 = vadd.f32 %v3386, %v3387
      %v3389 = vsel %vm620, %v3347, 0.0
      %v3390 = vadd.f32 %v3388, %v3389
      %v3391 = vsel %vm620, %v3348, 0.0
      %v3392 = vadd.f32 %v3390, %v3391
      %v3393 = vsel %vm620, %v3349, 0.0
      %v3394 = vadd.f32 %v3392, %v3393
      %v3395 = vsel %vm620, %v3350, 0.0
      %v3396 = vadd.f32 %v3394, %v3395
      %v3397 = vsel %vm620, %v3351, 0.0
      %v3398 = vadd.f32 %v3396, %v3397
      %v3399 = vsel %vm620, %v3352, 0.0
      %v3400 = vadd.f32 %v3398, %v3399
      %v3401 = vsel %vm620, %v3353, 0.0
      %v3402 = vadd.f32 %v3400, %v3401
      %v3403 = vsel %vm620, %v3354, 0.0
      %v3404 = vadd.f32 %v3402, %v3403
      %v3405 = vsel %vm620, %v3355, 0.0
      %v3406 = vadd.f32 %v3404, %v3405
      %v3407 = vsel %vm620, %v3356, 0.0
      %v3408 = vadd.f32 %v3406, %v3407
      %v3409 = vsel %vm620, %v3357, 0.0
      %v3410 = vadd.f32 %v3408, %v3409
      %v3411 = vsel %vm620, %v3358, 0.0
      %v3412 = vadd.f32 %v3410, %v3411
      %v3413 = vsel %vm620, %v3359, 0.0
      %v3414 = vadd.f32 %v3412, %v3413
      %v3415 = vsel %vm620, %v3360, 0.0
      %v3416 = vadd.f32 %v3414, %v3415
      %v3417 = vsel %vm620, %v3361, 0.0
      %v3418 = vadd.f32 %v3416, %v3417
      %v3419 = vsel %vm620, %v3362, 0.0
      %v3420 = vadd.f32 %v3418, %v3419
      %v3421 = vsel %vm620, %v3363, 0.0
      %v3422 = vadd.f32 %v3420, %v3421
      %v3423 = vsel %vm620, %v3364, 0.0
      %v3424 = vadd.f32 %v3422, %v3423
      %v3425 = vsel %vm620, %v3365, 0.0
      %v3426 = vadd.f32 %v3424, %v3425
      %v3427 = vsel %vm620, %v3366, 0.0
      %v3428 = vadd.f32 %v3426, %v3427
      %v3429 = vsel %vm620, %v3367, 0.0
      %v3430 = vadd.f32 %v3428, %v3429
      %v3431 = vrot.slane %v3430, 4
      %v3432 = vadd.f32 %v3430, %v3431
      %v3433 = vrot.slane %v3432, 2
      %v3434 = vadd.f32 %v3432, %v3433
      %v3435 = vrot.slane %v3434, 1
      %v3436 = vadd.f32 %v3434, %v3435
      %v3437 = vmul.f32 %v3436, 0.003921569
      %v3438 = vadd.f32 %v3437, 1e-05
      %v3439 = vrsqrt.pop %v3438
      %v3440 = vadd.f32 %v3303, %v3231
      %vm3441 = vcmask 24576
      %v3442 = vsel %vm3441, %v3440, 0.0
      %3443 = vadd.xlane.f32.xlu0 %v3442
      %v3444 = vpop.xlane.xlu0 %3443
      %v3445 = vrcp.pop 4.0
      %v3446 = vmul.f32 %v3444, %v3445
      %v3447 = vsub.f32 %v3440, %v3446
      %v3448 = vmul.f32 %v3447, 256.0
      %v3449 = vmul.f32 %v3448, %v3447
      %v3450 = vadd.f32 %v3436, %v3449
      %v3451 = vsel %vm3441, %v3450, 0.0
      %3452 = vadd.xlane.f32.xlu0 %v3451
      %v3453 = vpop.xlane.xlu0 %3452
      %v3454 = vmul.f32 %v3453, 0.0009775171
      %v3455 = vadd.f32 %v3454, 1e-05
      %v3456 = vrsqrt.pop %v3455
      %v3457 = vmul.f32 %v3232, %v3439
      %v3458 = vsub.f32 1.0, %v3232
      %v3459 = vmul.f32 %v3458, %v3456
      %v3460 = vadd.f32 %v3457, %v3459
      %v3461 = vmul.f32 %v361, %v3460
      %v3462 = vsub.f32 %v3231, %v3446
      %v3463 = vmul.f32 %v3459, %v3462
      %v3464 = vmul.f32 %v3457, %v3303
      %v3465 = vsub.f32 %v3463, %v3464
      %v3466 = vmul.f32 %v361, %v3465
      %v3467 = vadd.f32 %v3466, %v362
      %v3469 = vlaneseq
      %v3470 = vshrl.u32 %v3469, 7
      %v3471 = vsub.s32 0, %v3470
      %v3472 = vrot.slane %v3461, %v3471
      %v3474 = vmul.f32 %v3199, %v3472
      %v3475 = vmul.f32 %v3200, %v3472
      %v3476 = vmul.f32 %v3201, %v3472
      %v3477 = vmul.f32 %v3202, %v3472
      %v3478 = vmul.f32 %v3203, %v3472
      %v3479 = vmul.f32 %v3204, %v3472
      %v3480 = vmul.f32 %v3205, %v3472
      %v3481 = vmul.f32 %v3206, %v3472
      %v3482 = vmul.f32 %v3207, %v3472
      %v3483 = vmul.f32 %v3208, %v3472
      %v3484 = vmul.f32 %v3209, %v3472
      %v3485 = vmul.f32 %v3210, %v3472
      %v3486 = vmul.f32 %v3211, %v3472
      %v3487 = vmul.f32 %v3212, %v3472
      %v3488 = vmul.f32 %v3213, %v3472
      %v3489 = vmul.f32 %v3214, %v3472
      %v3490 = vmul.f32 %v3215, %v3472
      %v3491 = vmul.f32 %v3216, %v3472
      %v3492 = vmul.f32 %v3217, %v3472
      %v3493 = vmul.f32 %v3218, %v3472
      %v3494 = vmul.f32 %v3219, %v3472
      %v3495 = vmul.f32 %v3220, %v3472
      %v3496 = vmul.f32 %v3221, %v3472
      %v3497 = vmul.f32 %v3222, %v3472
      %v3498 = vmul.f32 %v3223, %v3472
      %v3499 = vmul.f32 %v3224, %v3472
      %v3500 = vmul.f32 %v3225, %v3472
      %v3501 = vmul.f32 %v3226, %v3472
      %v3502 = vmul.f32 %v3227, %v3472
      %v3503 = vmul.f32 %v3228, %v3472
      %v3504 = vmul.f32 %v3229, %v3472
      %v3505 = vmul.f32 %v3230, %v3472
      %v3507 = vlaneseq
      %v3508 = vshrl.u32 %v3507, 7
      %v3509 = vsub.s32 0, %v3508
      %v3510 = vrot.slane %v3467, %v3509
      %v3512 = vadd.f32 %v3474, %v3510
      %v3513 = vadd.f32 %v3475, %v3510
      %v3514 = vadd.f32 %v3476, %v3510
      %v3515 = vadd.f32 %v3477, %v3510
      %v3516 = vadd.f32 %v3478, %v3510
      %v3517 = vadd.f32 %v3479, %v3510
      %v3518 = vadd.f32 %v3480, %v3510
      %v3519 = vadd.f32 %v3481, %v3510
      %v3520 = vadd.f32 %v3482, %v3510
      %v3521 = vadd.f32 %v3483, %v3510
      %v3522 = vadd.f32 %v3484, %v3510
      %v3523 = vadd.f32 %v3485, %v3510
      %v3524 = vadd.f32 %v3486, %v3510
      %v3525 = vadd.f32 %v3487, %v3510
      %v3526 = vadd.f32 %v3488, %v3510
      %v3527 = vadd.f32 %v3489, %v3510
      %v3528 = vadd.f32 %v3490, %v3510
      %v3529 = vadd.f32 %v3491, %v3510
      %v3530 = vadd.f32 %v3492, %v3510
      %v3531 = vadd.f32 %v3493, %v3510
      %v3532 = vadd.f32 %v3494, %v3510
      %v3533 = vadd.f32 %v3495, %v3510
      %v3534 = vadd.f32 %v3496, %v3510
      %v3535 = vadd.f32 %v3497, %v3510
      %v3536 = vadd.f32 %v3498, %v3510
      %v3537 = vadd.f32 %v3499, %v3510
      %v3538 = vadd.f32 %v3500, %v3510
      %v3539 = vadd.f32 %v3501, %v3510
      %v3540 = vadd.f32 %v3502, %v3510
      %v3541 = vadd.f32 %v3503, %v3510
      %v3542 = vadd.f32 %v3504, %v3510
      %v3543 = vadd.f32 %v3505, %v3510
      %v3544 = vmax.f32 %v3512, 0.0
      %v3545 = vmax.f32 %v3513, 0.0
      %v3546 = vmax.f32 %v3514, 0.0
      %v3547 = vmax.f32 %v3515, 0.0
      %v3548 = vmax.f32 %v3516, 0.0
      %v3549 = vmax.f32 %v3517, 0.0
      %v3550 = vmax.f32 %v3518, 0.0
      %v3551 = vmax.f32 %v3519, 0.0
      %v3552 = vmax.f32 %v3520, 0.0
      %v3553 = vmax.f32 %v3521, 0.0
      %v3554 = vmax.f32 %v3522, 0.0
      %v3555 = vmax.f32 %v3523, 0.0
      %v3556 = vmax.f32 %v3524, 0.0
      %v3557 = vmax.f32 %v3525, 0.0
      %v3558 = vmax.f32 %v3526, 0.0
      %v3559 = vmax.f32 %v3527, 0.0
      %v3560 = vmax.f32 %v3528, 0.0
      %v3561 = vmax.f32 %v3529, 0.0
      %v3562 = vmax.f32 %v3530, 0.0
      %v3563 = vmax.f32 %v3531, 0.0
      %v3564 = vmax.f32 %v3532, 0.0
      %v3565 = vmax.f32 %v3533, 0.0
      %v3566 = vmax.f32 %v3534, 0.0
      %v3567 = vmax.f32 %v3535, 0.0
      %v3568 = vmax.f32 %v3536, 0.0
      %v3569 = vmax.f32 %v3537, 0.0
      %v3570 = vmax.f32 %v3538, 0.0
      %v3571 = vmax.f32 %v3539, 0.0
      %v3572 = vmax.f32 %v3540, 0.0
      %v3573 = vmax.f32 %v3541, 0.0
      %v3574 = vmax.f32 %v3542, 0.0
      %v3575 = vmax.f32 %v3543, 0.0
      %v3592 = vrot.slane %v3546, 1
      %v3593 = vrot.slane %v3544, 1
      %v3594 = vrot.slane %v3548, 1
      %v3595 = vrot.slane %v3550, 1
      %v3596 = vrot.slane %v3552, 1
      %v3597 = vrot.slane %v3554, 1
      %v3598 = vrot.slane %v3556, 1
      %v3599 = vrot.slane %v3558, 1
      %v3600 = vrot.slane %v3560, 1
      %v3601 = vrot.slane %v3562, 1
      %v3602 = vrot.slane %v3564, 1
      %v3603 = vrot.slane %v3566, 1
      %v3604 = vrot.slane %v3568, 1
      %v3605 = vrot.slane %v3570, 1
      %v3606 = vrot.slane %v3572, 1
      %v3607 = vrot.slane %v3574, 1
      %v3640 = vrot.slane %v3546, 7
      %v3641 = vrot.slane %v3547, 7
      %v3642 = vsel %vm459, %v3640, %v3641
      %v3643 = vrot.slane %v3544, 7
      %v3644 = vrot.slane %v3545, 7
      %v3645 = vsel %vm459, %v3643, %v3644
      %v3646 = vrot.slane %v3548, 7
      %v3647 = vrot.slane %v3549, 7
      %v3648 = vsel %vm459, %v3646, %v3647
      %v3649 = vrot.slane %v3550, 7
      %v3650 = vrot.slane %v3551, 7
      %v3651 = vsel %vm459, %v3649, %v3650
      %v3652 = vrot.slane %v3552, 7
      %v3653 = vrot.slane %v3553, 7
      %v3654 = vsel %vm459, %v3652, %v3653
      %v3655 = vrot.slane %v3554, 7
      %v3656 = vrot.slane %v3555, 7
      %v3657 = vsel %vm459, %v3655, %v3656
      %v3658 = vrot.slane %v3556, 7
      %v3659 = vrot.slane %v3557, 7
      %v3660 = vsel %vm459, %v3658, %v3659
      %v3661 = vrot.slane %v3558, 7
      %v3662 = vrot.slane %v3559, 7
      %v3663 = vsel %vm459, %v3661, %v3662
      %v3664 = vrot.slane %v3560, 7
      %v3665 = vrot.slane %v3561, 7
      %v3666 = vsel %vm459, %v3664, %v3665
      %v3667 = vrot.slane %v3562, 7
      %v3668 = vrot.slane %v3563, 7
      %v3669 = vsel %vm459, %v3667, %v3668
      %v3670 = vrot.slane %v3564, 7
      %v3671 = vrot.slane %v3565, 7
      %v3672 = vsel %vm459, %v3670, %v3671
      %v3673 = vrot.slane %v3566, 7
      %v3674 = vrot.slane %v3567, 7
      %v3675 = vsel %vm459, %v3673, %v3674
      %v3676 = vrot.slane %v3568, 7
      %v3677 = vrot.slane %v3569, 7
      %v3678 = vsel %vm459, %v3676, %v3677
      %v3679 = vrot.slane %v3570, 7
      %v3680 = vrot.slane %v3571, 7
      %v3681 = vsel %vm459, %v3679, %v3680
      %v3682 = vrot.slane %v3572, 7
      %v3683 = vrot.slane %v3573, 7
      %v3684 = vsel %vm459, %v3682, %v3683
      %v3685 = vrot.slane %v3574, 7
      %v3686 = vrot.slane %v3575, 7
      %v3687 = vsel %vm459, %v3685, %v3686
      %v3736 = vrot.slane %v3547, 5
      %v3737 = vrot.slane %v3545, 5
      %v3738 = vrot.slane %v3549, 5
      %v3739 = vrot.slane %v3551, 5
      %v3740 = vrot.slane %v3553, 5
      %v3741 = vrot.slane %v3555, 5
      %v3742 = vrot.slane %v3557, 5
      %v3743 = vrot.slane %v3559, 5
      %v3744 = vrot.slane %v3561, 5
      %v3745 = vrot.slane %v3563, 5
      %v3746 = vrot.slane %v3565, 5
      %v3747 = vrot.slane %v3567, 5
      %v3748 = vrot.slane %v3569, 5
      %v3749 = vrot.slane %v3571, 5
      %v3750 = vrot.slane %v3573, 5
      %v3751 = vrot.slane %v3575, 5
      %v3768 = vsel %vm459, %v3592, %v3640
      %v3769 = vsel %vm459, %v3593, %v3643
      %v3770 = vsel %vm459, %v3594, %v3646
      %v3771 = vsel %vm459, %v3595, %v3649
      %v3772 = vsel %vm459, %v3596, %v3652
      %v3773 = vsel %vm459, %v3597, %v3655
      %v3774 = vsel %vm459, %v3598, %v3658
      %v3775 = vsel %vm459, %v3599, %v3661
      %v3776 = vsel %vm459, %v3600, %v3664
      %v3777 = vsel %vm459, %v3601, %v3667
      %v3778 = vsel %vm459, %v3602, %v3670
      %v3779 = vsel %vm459, %v3603, %v3673
      %v3780 = vsel %vm459, %v3604, %v3676
      %v3781 = vsel %vm459, %v3605, %v3679
      %v3782 = vsel %vm459, %v3606, %v3682
      %v3783 = vsel %vm459, %v3607, %v3685
      %v3784 = vsel %vm459, %v3641, %v3736
      %v3785 = vsel %vm459, %v3644, %v3737
      %v3786 = vsel %vm459, %v3647, %v3738
      %v3787 = vsel %vm459, %v3650, %v3739
      %v3788 = vsel %vm459, %v3653, %v3740
      %v3789 = vsel %vm459, %v3656, %v3741
      %v3790 = vsel %vm459, %v3659, %v3742
      %v3791 = vsel %vm459, %v3662, %v3743
      %v3792 = vsel %vm459, %v3665, %v3744
      %v3793 = vsel %vm459, %v3668, %v3745
      %v3794 = vsel %vm459, %v3671, %v3746
      %v3795 = vsel %vm459, %v3674, %v3747
      %v3796 = vsel %vm459, %v3677, %v3748
      %v3797 = vsel %vm459, %v3680, %v3749
      %v3798 = vsel %vm459, %v3683, %v3750
      %v3799 = vsel %vm459, %v3686, %v3751
      %3800 = vst.msk [vmem:[#allocation2] sm:$0xff] %vm620, %v3768
      %3801 = vst.msk [vmem:[#allocation2 + $0x8] sm:$0xff] %vm620, %v3642
      %3802 = vst.msk [vmem:[#allocation2 + $0x10] sm:$0x3] %vm623, %v3784
      %3803 = vst.msk [vmem:[#allocation2 + $0x18] sm:$0xff] %vm620, %v3769
      %3804 = vst.msk [vmem:[#allocation2 + $0x20] sm:$0xff] %vm620, %v3645
      %3805 = vst.msk [vmem:[#allocation2 + $0x28] sm:$0x3] %vm623, %v3785
      %3806 = vst.msk [vmem:[#allocation2 + $0x30] sm:$0xff] %vm620, %v3768
      %3807 = vst.msk [vmem:[#allocation2 + $0x38] sm:$0xff] %vm620, %v3642
      %3808 = vst.msk [vmem:[#allocation2 + $0x40] sm:$0x3] %vm623, %v3784
      %3809 = vst.msk [vmem:[#allocation2 + $0x48] sm:$0xff] %vm620, %v3770
      %3810 = vst.msk [vmem:[#allocation2 + $0x50] sm:$0xff] %vm620, %v3648
      %3811 = vst.msk [vmem:[#allocation2 + $0x58] sm:$0x3] %vm623, %v3786
      %3812 = vst.msk [vmem:[#allocation2 + $0x60] sm:$0xff] %vm620, %v3771
      %3813 = vst.msk [vmem:[#allocation2 + $0x68] sm:$0xff] %vm620, %v3651
      %3814 = vst.msk [vmem:[#allocation2 + $0x70] sm:$0x3] %vm623, %v3787
      %3815 = vst.msk [vmem:[#allocation2 + $0x78] sm:$0xff] %vm620, %v3772
      %3816 = vst.msk [vmem:[#allocation2 + $0x80] sm:$0xff] %vm620, %v3654
      %3817 = vst.msk [vmem:[#allocation2 + $0x88] sm:$0x3] %vm623, %v3788
      %3818 = vst.msk [vmem:[#allocation2 + $0x90] sm:$0xff] %vm620, %v3773
      %3819 = vst.msk [vmem:[#allocation2 + $0x98] sm:$0xff] %vm620, %v3657
      %3820 = vst.msk [vmem:[#allocation2 + $0xa0] sm:$0x3] %vm623, %v3789
      %3821 = vst.msk [vmem:[#allocation2 + $0xa8] sm:$0xff] %vm620, %v3774
      %3822 = vst.msk [vmem:[#allocation2 + $0xb0] sm:$0xff] %vm620, %v3660
      %3823 = vst.msk [vmem:[#allocation2 + $0xb8] sm:$0x3] %vm623, %v3790
      %3824 = vst.msk [vmem:[#allocation2 + $0xc0] sm:$0xff] %vm620, %v3775
      %3825 = vst.msk [vmem:[#allocation2 + $0xc8] sm:$0xff] %vm620, %v3663
      %3826 = vst.msk [vmem:[#allocation2 + $0xd0] sm:$0x3] %vm623, %v3791
      %3827 = vst.msk [vmem:[#allocation2 + $0xd8] sm:$0xff] %vm620, %v3776
      %3828 = vst.msk [vmem:[#allocation2 + $0xe0] sm:$0xff] %vm620, %v3666
      %3829 = vst.msk [vmem:[#allocation2 + $0xe8] sm:$0x3] %vm623, %v3792
      %3830 = vst.msk [vmem:[#allocation2 + $0xf0] sm:$0xff] %vm620, %v3777
      %3831 = vst.msk [vmem:[#allocation2 + $0xf8] sm:$0xff] %vm620, %v3669
      %3832 = vst.msk [vmem:[#allocation2 + $0x100] sm:$0x3] %vm623, %v3793
      %3833 = vst.msk [vmem:[#allocation2 + $0x108] sm:$0xff] %vm620, %v3778
      %3834 = vst.msk [vmem:[#allocation2 + $0x110] sm:$0xff] %vm620, %v3672
      %3835 = vst.msk [vmem:[#allocation2 + $0x118] sm:$0x3] %vm623, %v3794
      %3836 = vst.msk [vmem:[#allocation2 + $0x120] sm:$0xff] %vm620, %v3779
      %3837 = vst.msk [vmem:[#allocation2 + $0x128] sm:$0xff] %vm620, %v3675
      %3838 = vst.msk [vmem:[#allocation2 + $0x130] sm:$0x3] %vm623, %v3795
      %3839 = vst.msk [vmem:[#allocation2 + $0x138] sm:$0xff] %vm620, %v3780
      %3840 = vst.msk [vmem:[#allocation2 + $0x140] sm:$0xff] %vm620, %v3678
      %3841 = vst.msk [vmem:[#allocation2 + $0x148] sm:$0x3] %vm623, %v3796
      %3842 = vst.msk [vmem:[#allocation2 + $0x150] sm:$0xff] %vm620, %v3781
      %3843 = vst.msk [vmem:[#allocation2 + $0x158] sm:$0xff] %vm620, %v3681
      %3844 = vst.msk [vmem:[#allocation2 + $0x160] sm:$0x3] %vm623, %v3797
      %3845 = vst.msk [vmem:[#allocation2 + $0x168] sm:$0xff] %vm620, %v3782
      %3846 = vst.msk [vmem:[#allocation2 + $0x170] sm:$0xff] %vm620, %v3684
      %3847 = vst.msk [vmem:[#allocation2 + $0x178] sm:$0x3] %vm623, %v3798
      %3848 = vst.msk [vmem:[#allocation2 + $0x180] sm:$0xff] %vm620, %v3783
      %3849 = vst.msk [vmem:[#allocation2 + $0x188] sm:$0xff] %vm620, %v3687
      %3850 = vst.msk [vmem:[#allocation2 + $0x190] sm:$0x3] %vm623, %v3799
      %3851 = vst.msk [vmem:[#allocation2 + $0x198] sm:$0xff] %vm620, %v3782
      %3852 = vst.msk [vmem:[#allocation2 + $0x1a0] sm:$0xff] %vm620, %v3684
      %3853 = vst.msk [vmem:[#allocation2 + $0x1a8] sm:$0x3] %vm623, %v3798
      %v3854 = vld [vmem:[#allocation2] sm:$0xff]
      %v3855 = vld [vmem:[#allocation2 + $0x8] sm:$0xff]
      %v3856 = vld [vmem:[#allocation2 + $0x10] sm:$0x3]
      %v3857 = vld [vmem:[#allocation2 + $0x18] sm:$0xff]
      %v3858 = vld [vmem:[#allocation2 + $0x20] sm:$0xff]
      %v3859 = vld [vmem:[#allocation2 + $0x28] sm:$0x3]
      %v3860 = vld [vmem:[#allocation2 + $0x30] sm:$0xff]
      %v3861 = vld [vmem:[#allocation2 + $0x38] sm:$0xff]
      %v3862 = vld [vmem:[#allocation2 + $0x40] sm:$0x3]
      %v3863 = vld [vmem:[#allocation2 + $0x48] sm:$0xff]
      %v3864 = vld [vmem:[#allocation2 + $0x50] sm:$0xff]
      %v3865 = vld [vmem:[#allocation2 + $0x58] sm:$0x3]
      %v3866 = vld [vmem:[#allocation2 + $0x60] sm:$0xff]
      %v3867 = vld [vmem:[#allocation2 + $0x68] sm:$0xff]
      %v3868 = vld [vmem:[#allocation2 + $0x70] sm:$0x3]
      %v3869 = vld [vmem:[#allocation2 + $0x78] sm:$0xff]
      %v3870 = vld [vmem:[#allocation2 + $0x80] sm:$0xff]
      %v3871 = vld [vmem:[#allocation2 + $0x88] sm:$0x3]
      %v3872 = vld [vmem:[#allocation2 + $0x90] sm:$0xff]
      %v3873 = vld [vmem:[#allocation2 + $0x98] sm:$0xff]
      %v3874 = vld [vmem:[#allocation2 + $0xa0] sm:$0x3]
      %v3875 = vld [vmem:[#allocation2 + $0xa8] sm:$0xff]
      %v3876 = vld [vmem:[#allocation2 + $0xb0] sm:$0xff]
      %v3877 = vld [vmem:[#allocation2 + $0xb8] sm:$0x3]
      %v3878 = vld [vmem:[#allocation2 + $0xc0] sm:$0xff]
      %v3879 = vld [vmem:[#allocation2 + $0xc8] sm:$0xff]
      %v3880 = vld [vmem:[#allocation2 + $0xd0] sm:$0x3]
      %v3881 = vld [vmem:[#allocation2 + $0xd8] sm:$0xff]
      %v3882 = vld [vmem:[#allocation2 + $0xe0] sm:$0xff]
      %v3883 = vld [vmem:[#allocation2 + $0xe8] sm:$0x3]
      %v3884 = vld [vmem:[#allocation2 + $0xf0] sm:$0xff]
      %v3885 = vld [vmem:[#allocation2 + $0xf8] sm:$0xff]
      %v3886 = vld [vmem:[#allocation2 + $0x100] sm:$0x3]
      %v3887 = vld [vmem:[#allocation2 + $0x108] sm:$0xff]
      %v3888 = vld [vmem:[#allocation2 + $0x110] sm:$0xff]
      %v3889 = vld [vmem:[#allocation2 + $0x118] sm:$0x3]
      %v3890 = vld [vmem:[#allocation2 + $0x120] sm:$0xff]
      %v3891 = vld [vmem:[#allocation2 + $0x128] sm:$0xff]
      %v3892 = vld [vmem:[#allocation2 + $0x130] sm:$0x3]
      %v3893 = vld [vmem:[#allocation2 + $0x138] sm:$0xff]
      %v3894 = vld [vmem:[#allocation2 + $0x140] sm:$0xff]
      %v3895 = vld [vmem:[#allocation2 + $0x148] sm:$0x3]
      %v3896 = vld [vmem:[#allocation2 + $0x150] sm:$0xff]
      %v3897 = vld [vmem:[#allocation2 + $0x158] sm:$0xff]
      %v3898 = vld [vmem:[#allocation2 + $0x160] sm:$0x3]
      %v3899 = vld [vmem:[#allocation2 + $0x168] sm:$0xff]
      %v3900 = vld [vmem:[#allocation2 + $0x170] sm:$0xff]
      %v3901 = vld [vmem:[#allocation2 + $0x178] sm:$0x3]
      %v3950 = vrot.slane %v3854, 1
      %v3951 = vrot.slane %v3855, 1
      %v3952 = vsel %vm772, %v3950, %v3951
      %v3953 = vrot.slane %v3856, 1
      %v3954 = vsel %vm772, %v3951, %v3953
      %v3955 = vrot.slane %v3857, 1
      %v3956 = vrot.slane %v3858, 1
      %v3957 = vsel %vm772, %v3955, %v3956
      %v3958 = vrot.slane %v3859, 1
      %v3959 = vsel %vm772, %v3956, %v3958
      %v3960 = vrot.slane %v3860, 1
      %v3961 = vrot.slane %v3861, 1
      %v3962 = vsel %vm772, %v3960, %v3961
      %v3963 = vrot.slane %v3862, 1
      %v3964 = vsel %vm772, %v3961, %v3963
      %v3965 = vrot.slane %v3863, 1
      %v3966 = vrot.slane %v3864, 1
      %v3967 = vsel %vm772, %v3965, %v3966
      %v3968 = vrot.slane %v3865, 1
      %v3969 = vsel %vm772, %v3966, %v3968
      %v3970 = vrot.slane %v3866, 1
      %v3971 = vrot.slane %v3867, 1
      %v3972 = vsel %vm772, %v3970, %v3971
      %v3973 = vrot.slane %v3868, 1
      %v3974 = vsel %vm772, %v3971, %v3973
      %v3975 = vrot.slane %v3869, 1
      %v3976 = vrot.slane %v3870, 1
      %v3977 = vsel %vm772, %v3975, %v3976
      %v3978 = vrot.slane %v3871, 1
      %v3979 = vsel %vm772, %v3976, %v3978
      %v3980 = vrot.slane %v3872, 1
      %v3981 = vrot.slane %v3873, 1
      %v3982 = vsel %vm772, %v3980, %v3981
      %v3983 = vrot.slane %v3874, 1
      %v3984 = vsel %vm772, %v3981, %v3983
      %v3985 = vrot.slane %v3875, 1
      %v3986 = vrot.slane %v3876, 1
      %v3987 = vsel %vm772, %v3985, %v3986
      %v3988 = vrot.slane %v3877, 1
      %v3989 = vsel %vm772, %v3986, %v3988
      %v3990 = vrot.slane %v3878, 1
      %v3991 = vrot.slane %v3879, 1
      %v3992 = vsel %vm772, %v3990, %v3991
      %v3993 = vrot.slane %v3880, 1
      %v3994 = vsel %vm772, %v3991, %v3993
      %v3995 = vrot.slane %v3881, 1
      %v3996 = vrot.slane %v3882, 1
      %v3997 = vsel %vm772, %v3995, %v3996
      %v3998 = vrot.slane %v3883, 1
      %v3999 = vsel %vm772, %v3996, %v3998
      %v4000 = vrot.slane %v3884, 1
      %v4001 = vrot.slane %v3885, 1
      %v4002 = vsel %vm772, %v4000, %v4001
      %v4003 = vrot.slane %v3886, 1
      %v4004 = vsel %vm772, %v4001, %v4003
      %v4005 = vrot.slane %v3887, 1
      %v4006 = vrot.slane %v3888, 1
      %v4007 = vsel %vm772, %v4005, %v4006
      %v4008 = vrot.slane %v3889, 1
      %v4009 = vsel %vm772, %v4006, %v4008
      %v4010 = vrot.slane %v3890, 1
      %v4011 = vrot.slane %v3891, 1
      %v4012 = vsel %vm772, %v4010, %v4011
      %v4013 = vrot.slane %v3892, 1
      %v4014 = vsel %vm772, %v4011, %v4013
      %v4015 = vrot.slane %v3893, 1
      %v4016 = vrot.slane %v3894, 1
      %v4017 = vsel %vm772, %v4015, %v4016
      %v4018 = vrot.slane %v3895, 1
      %v4019 = vsel %vm772, %v4016, %v4018
      %v4020 = vrot.slane %v3896, 1
      %v4021 = vrot.slane %v3897, 1
      %v4022 = vsel %vm772, %v4020, %v4021
      %v4023 = vrot.slane %v3898, 1
      %v4024 = vsel %vm772, %v4021, %v4023
      %v4025 = vrot.slane %v3899, 1
      %v4026 = vrot.slane %v3900, 1
      %v4027 = vsel %vm772, %v4025, %v4026
      %v4028 = vrot.slane %v3901, 1
      %v4029 = vsel %vm772, %v4026, %v4028
      %4030 = vrot.lane.b32.xlu0 %v3952, 4
      %v4031 = vpop.permute.xlu0 %4030
      %4032 = vrot.lane.b32.xlu0 %v3954, 4
      %v4033 = vpop.permute.xlu0 %4032
      %4034 = vrot.lane.b32.xlu0 %v3957, 4
      %v4035 = vpop.permute.xlu0 %4034
      %4036 = vrot.lane.b32.xlu0 %v3959, 4
      %v4037 = vpop.permute.xlu0 %4036
      %4038 = vrot.lane.b32.xlu0 %v3962, 4
      %v4039 = vpop.permute.xlu0 %4038
      %4040 = vrot.lane.b32.xlu0 %v3964, 4
      %v4041 = vpop.permute.xlu0 %4040
      %4042 = vrot.lane.b32.xlu0 %v3967, 4
      %v4043 = vpop.permute.xlu0 %4042
      %4044 = vrot.lane.b32.xlu0 %v3969, 4
      %v4045 = vpop.permute.xlu0 %4044
      %4046 = vrot.lane.b32.xlu0 %v3972, 4
      %v4047 = vpop.permute.xlu0 %4046
      %4048 = vrot.lane.b32.xlu0 %v3974, 4
      %v4049 = vpop.permute.xlu0 %4048
      %4050 = vrot.lane.b32.xlu0 %v3977, 4
      %v4051 = vpop.permute.xlu0 %4050
      %4052 = vrot.lane.b32.xlu0 %v3979, 4
      %v4053 = vpop.permute.xlu0 %4052
      %4054 = vrot.lane.b32.xlu0 %v3982, 4
      %v4055 = vpop.permute.xlu0 %4054
      %4056 = vrot.lane.b32.xlu0 %v3984, 4
      %v4057 = vpop.permute.xlu0 %4056
      %4058 = vrot.lane.b32.xlu0 %v3987, 4
      %v4059 = vpop.permute.xlu0 %4058
      %4060 = vrot.lane.b32.xlu0 %v3989, 4
      %v4061 = vpop.permute.xlu0 %4060
      %4062 = vrot.lane.b32.xlu0 %v3992, 4
      %v4063 = vpop.permute.xlu0 %4062
      %4064 = vrot.lane.b32.xlu0 %v3994, 4
      %v4065 = vpop.permute.xlu0 %4064
      %4066 = vrot.lane.b32.xlu0 %v3997, 4
      %v4067 = vpop.permute.xlu0 %4066
      %4068 = vrot.lane.b32.xlu0 %v3999, 4
      %v4069 = vpop.permute.xlu0 %4068
      %4070 = vrot.lane.b32.xlu0 %v4002, 4
      %v4071 = vpop.permute.xlu0 %4070
      %4072 = vrot.lane.b32.xlu0 %v4004, 4
      %v4073 = vpop.permute.xlu0 %4072
      %4074 = vrot.lane.b32.xlu0 %v4007, 4
      %v4075 = vpop.permute.xlu0 %4074
      %4076 = vrot.lane.b32.xlu0 %v4009, 4
      %v4077 = vpop.permute.xlu0 %4076
      %4078 = vrot.lane.b32.xlu0 %v4012, 4
      %v4079 = vpop.permute.xlu0 %4078
      %4080 = vrot.lane.b32.xlu0 %v4014, 4
      %v4081 = vpop.permute.xlu0 %4080
      %4082 = vrot.lane.b32.xlu0 %v4017, 4
      %v4083 = vpop.permute.xlu0 %4082
      %4084 = vrot.lane.b32.xlu0 %v4019, 4
      %v4085 = vpop.permute.xlu0 %4084
      %4086 = vrot.lane.b32.xlu0 %v4022, 4
      %v4087 = vpop.permute.xlu0 %4086
      %4088 = vrot.lane.b32.xlu0 %v4024, 4
      %v4089 = vpop.permute.xlu0 %4088
      %4090 = vrot.lane.b32.xlu0 %v4027, 4
      %v4091 = vpop.permute.xlu0 %4090
      %4092 = vrot.lane.b32.xlu0 %v4029, 4
      %v4093 = vpop.permute.xlu0 %4092
      %v4126 = vrot.slane %v3854, 2
      %v4127 = vrot.slane %v3855, 2
      %v4128 = vsel %vm949, %v4126, %v4127
      %v4129 = vrot.slane %v3856, 2
      %v4130 = vsel %vm949, %v4127, %v4129
      %v4131 = vrot.slane %v3857, 2
      %v4132 = vrot.slane %v3858, 2
      %v4133 = vsel %vm949, %v4131, %v4132
      %v4134 = vrot.slane %v3859, 2
      %v4135 = vsel %vm949, %v4132, %v4134
      %v4136 = vrot.slane %v3860, 2
      %v4137 = vrot.slane %v3861, 2
      %v4138 = vsel %vm949, %v4136, %v4137
      %v4139 = vrot.slane %v3862, 2
      %v4140 = vsel %vm949, %v4137, %v4139
      %v4141 = vrot.slane %v3863, 2
      %v4142 = vrot.slane %v3864, 2
      %v4143 = vsel %vm949, %v4141, %v4142
      %v4144 = vrot.slane %v3865, 2
      %v4145 = vsel %vm949, %v4142, %v4144
      %v4146 = vrot.slane %v3866, 2
      %v4147 = vrot.slane %v3867, 2
      %v4148 = vsel %vm949, %v4146, %v4147
      %v4149 = vrot.slane %v3868, 2
      %v4150 = vsel %vm949, %v4147, %v4149
      %v4151 = vrot.slane %v3869, 2
      %v4152 = vrot.slane %v3870, 2
      %v4153 = vsel %vm949, %v4151, %v4152
      %v4154 = vrot.slane %v3871, 2
      %v4155 = vsel %vm949, %v4152, %v4154
      %v4156 = vrot.slane %v3872, 2
      %v4157 = vrot.slane %v3873, 2
      %v4158 = vsel %vm949, %v4156, %v4157
      %v4159 = vrot.slane %v3874, 2
      %v4160 = vsel %vm949, %v4157, %v4159
      %v4161 = vrot.slane %v3875, 2
      %v4162 = vrot.slane %v3876, 2
      %v4163 = vsel %vm949, %v4161, %v4162
      %v4164 = vrot.slane %v3877, 2
      %v4165 = vsel %vm949, %v4162, %v4164
      %v4166 = vrot.slane %v3878, 2
      %v4167 = vrot.slane %v3879, 2
      %v4168 = vsel %vm949, %v4166, %v4167
      %v4169 = vrot.slane %v3880, 2
      %v4170 = vsel %vm949, %v4167, %v4169
      %v4171 = vrot.slane %v3881, 2
      %v4172 = vrot.slane %v3882, 2
      %v4173 = vsel %vm949, %v4171, %v4172
      %v4174 = vrot.slane %v3883, 2
      %v4175 = vsel %vm949, %v4172, %v4174
      %v4176 = vrot.slane %v3884, 2
      %v4177 = vrot.slane %v3885, 2
      %v4178 = vsel %vm949, %v4176, %v4177
      %v4179 = vrot.slane %v3886, 2
      %v4180 = vsel %vm949, %v4177, %v4179
      %v4181 = vrot.slane %v3887, 2
      %v4182 = vrot.slane %v3888, 2
      %v4183 = vsel %vm949, %v4181, %v4182
      %v4184 = vrot.slane %v3889, 2
      %v4185 = vsel %vm949, %v4182, %v4184
      %v4186 = vrot.slane %v3890, 2
      %v4187 = vrot.slane %v3891, 2
      %v4188 = vsel %vm949, %v4186, %v4187
      %v4189 = vrot.slane %v3892, 2
      %v4190 = vsel %vm949, %v4187, %v4189
      %v4191 = vrot.slane %v3893, 2
      %v4192 = vrot.slane %v3894, 2
      %v4193 = vsel %vm949, %v4191, %v4192
      %v4194 = vrot.slane %v3895, 2
      %v4195 = vsel %vm949, %v4192, %v4194
      %v4196 = vrot.slane %v3896, 2
      %v4197 = vrot.slane %v3897, 2
      %v4198 = vsel %vm949, %v4196, %v4197
      %v4199 = vrot.slane %v3898, 2
      %v4200 = vsel %vm949, %v4197, %v4199
      %v4201 = vrot.slane %v3899, 2
      %v4202 = vrot.slane %v3900, 2
      %v4203 = vsel %vm949, %v4201, %v4202
      %v4204 = vrot.slane %v3901, 2
      %v4205 = vsel %vm949, %v4202, %v4204
      %4206 = vrot.lane.b32.xlu0 %v4128, 8
      %v4207 = vpop.permute.xlu0 %4206
      %4208 = vrot.lane.b32.xlu0 %v4130, 8
      %v4209 = vpop.permute.xlu0 %4208
      %4210 = vrot.lane.b32.xlu0 %v4133, 8
      %v4211 = vpop.permute.xlu0 %4210
      %4212 = vrot.lane.b32.xlu0 %v4135, 8
      %v4213 = vpop.permute.xlu0 %4212
      %4214 = vrot.lane.b32.xlu0 %v4138, 8
      %v4215 = vpop.permute.xlu0 %4214
      %4216 = vrot.lane.b32.xlu0 %v4140, 8
      %v4217 = vpop.permute.xlu0 %4216
      %4218 = vrot.lane.b32.xlu0 %v4143, 8
      %v4219 = vpop.permute.xlu0 %4218
      %4220 = vrot.lane.b32.xlu0 %v4145, 8
      %v4221 = vpop.permute.xlu0 %4220
      %4222 = vrot.lane.b32.xlu0 %v4148, 8
      %v4223 = vpop.permute.xlu0 %4222
      %4224 = vrot.lane.b32.xlu0 %v4150, 8
      %v4225 = vpop.permute.xlu0 %4224
      %4226 = vrot.lane.b32.xlu0 %v4153, 8
      %v4227 = vpop.permute.xlu0 %4226
      %4228 = vrot.lane.b32.xlu0 %v4155, 8
      %v4229 = vpop.permute.xlu0 %4228
      %4230 = vrot.lane.b32.xlu0 %v4158, 8
      %v4231 = vpop.permute.xlu0 %4230
      %4232 = vrot.lane.b32.xlu0 %v4160, 8
      %v4233 = vpop.permute.xlu0 %4232
      %4234 = vrot.lane.b32.xlu0 %v4163, 8
      %v4235 = vpop.permute.xlu0 %4234
      %4236 = vrot.lane.b32.xlu0 %v4165, 8
      %v4237 = vpop.permute.xlu0 %4236
      %4238 = vrot.lane.b32.xlu0 %v4168, 8
      %v4239 = vpop.permute.xlu0 %4238
      %4240 = vrot.lane.b32.xlu0 %v4170, 8
      %v4241 = vpop.permute.xlu0 %4240
      %4242 = vrot.lane.b32.xlu0 %v4173, 8
      %v4243 = vpop.permute.xlu0 %4242
      %4244 = vrot.lane.b32.xlu0 %v4175, 8
      %v4245 = vpop.permute.xlu0 %4244
      %4246 = vrot.lane.b32.xlu0 %v4178, 8
      %v4247 = vpop.permute.xlu0 %4246
      %4248 = vrot.lane.b32.xlu0 %v4180, 8
      %v4249 = vpop.permute.xlu0 %4248
      %4250 = vrot.lane.b32.xlu0 %v4183, 8
      %v4251 = vpop.permute.xlu0 %4250
      %4252 = vrot.lane.b32.xlu0 %v4185, 8
      %v4253 = vpop.permute.xlu0 %4252
      %4254 = vrot.lane.b32.xlu0 %v4188, 8
      %v4255 = vpop.permute.xlu0 %4254
      %4256 = vrot.lane.b32.xlu0 %v4190, 8
      %v4257 = vpop.permute.xlu0 %4256
      %4258 = vrot.lane.b32.xlu0 %v4193, 8
      %v4259 = vpop.permute.xlu0 %4258
      %4260 = vrot.lane.b32.xlu0 %v4195, 8
      %v4261 = vpop.permute.xlu0 %4260
      %4262 = vrot.lane.b32.xlu0 %v4198, 8
      %v4263 = vpop.permute.xlu0 %4262
      %4264 = vrot.lane.b32.xlu0 %v4200, 8
      %v4265 = vpop.permute.xlu0 %4264
      %4266 = vrot.lane.b32.xlu0 %v4203, 8
      %v4267 = vpop.permute.xlu0 %4266
      %4268 = vrot.lane.b32.xlu0 %v4205, 8
      %v4269 = vpop.permute.xlu0 %4268
      %v4302 = vsel %vm620, %v3854, %v4031
      %v4303 = vsel %vm620, %v3855, %v4033
      %v4304 = vsel %vm620, %v3857, %v4035
      %v4305 = vsel %vm620, %v3858, %v4037
      %v4306 = vsel %vm620, %v3860, %v4039
      %v4307 = vsel %vm620, %v3861, %v4041
      %v4308 = vsel %vm620, %v3863, %v4043
      %v4309 = vsel %vm620, %v3864, %v4045
      %v4310 = vsel %vm620, %v3866, %v4047
      %v4311 = vsel %vm620, %v3867, %v4049
      %v4312 = vsel %vm620, %v3869, %v4051
      %v4313 = vsel %vm620, %v3870, %v4053
      %v4314 = vsel %vm620, %v3872, %v4055
      %v4315 = vsel %vm620, %v3873, %v4057
      %v4316 = vsel %vm620, %v3875, %v4059
      %v4317 = vsel %vm620, %v3876, %v4061
      %v4318 = vsel %vm620, %v3878, %v4063
      %v4319 = vsel %vm620, %v3879, %v4065
      %v4320 = vsel %vm620, %v3881, %v4067
      %v4321 = vsel %vm620, %v3882, %v4069
      %v4322 = vsel %vm620, %v3884, %v4071
      %v4323 = vsel %vm620, %v3885, %v4073
      %v4324 = vsel %vm620, %v3887, %v4075
      %v4325 = vsel %vm620, %v3888, %v4077
      %v4326 = vsel %vm620, %v3890, %v4079
      %v4327 = vsel %vm620, %v3891, %v4081
      %v4328 = vsel %vm620, %v3893, %v4083
      %v4329 = vsel %vm620, %v3894, %v4085
      %v4330 = vsel %vm620, %v3896, %v4087
      %v4331 = vsel %vm620, %v3897, %v4089
      %v4332 = vsel %vm620, %v3899, %v4091
      %v4333 = vsel %vm620, %v3900, %v4093
      %v4334 = vsel %vm1158, %v4302, %v4207
      %v4335 = vsel %vm1158, %v4303, %v4209
      %v4336 = vsel %vm1158, %v4304, %v4211
      %v4337 = vsel %vm1158, %v4305, %v4213
      %v4338 = vsel %vm1158, %v4306, %v4215
      %v4339 = vsel %vm1158, %v4307, %v4217
      %v4340 = vsel %vm1158, %v4308, %v4219
      %v4341 = vsel %vm1158, %v4309, %v4221
      %v4342 = vsel %vm1158, %v4310, %v4223
      %v4343 = vsel %vm1158, %v4311, %v4225
      %v4344 = vsel %vm1158, %v4312, %v4227
      %v4345 = vsel %vm1158, %v4313, %v4229
      %v4346 = vsel %vm1158, %v4314, %v4231
      %v4347 = vsel %vm1158, %v4315, %v4233
      %v4348 = vsel %vm1158, %v4316, %v4235
      %v4349 = vsel %vm1158, %v4317, %v4237
      %v4350 = vsel %vm1158, %v4318, %v4239
      %v4351 = vsel %vm1158, %v4319, %v4241
      %v4352 = vsel %vm1158, %v4320, %v4243
      %v4353 = vsel %vm1158, %v4321, %v4245
      %v4354 = vsel %vm1158, %v4322, %v4247
      %v4355 = vsel %vm1158, %v4323, %v4249
      %v4356 = vsel %vm1158, %v4324, %v4251
      %v4357 = vsel %vm1158, %v4325, %v4253
      %v4358 = vsel %vm1158, %v4326, %v4255
      %v4359 = vsel %vm1158, %v4327, %v4257
      %v4360 = vsel %vm1158, %v4328, %v4259
      %v4361 = vsel %vm1158, %v4329, %v4261
      %v4362 = vsel %vm1158, %v4330, %v4263
      %v4363 = vsel %vm1158, %v4331, %v4265
      %v4364 = vsel %vm1158, %v4332, %v4267
      %v4365 = vsel %vm1158, %v4333, %v4269
      %v4366 = vld [vmem:[%s4] sm:$0xff]
      %v4367 = vld [vmem:[%s4 + $0x8] sm:$0xf]
      %v4368 = vld [vmem:[%s1193] sm:$0xff]
      %v4369 = vld [vmem:[%s1193 + $0x8] sm:$0xff]
      %v4370 = vld [vmem:[%s1193 + $0x10] sm:$0x3]
      %v4371 = vld [vmem:[%s1193 + $0x18] sm:$0xff]
      %v4372 = vld [vmem:[%s1193 + $0x20] sm:$0xff]
      %v4373 = vld [vmem:[%s1193 + $0x28] sm:$0x3]
      %v4374 = vld [vmem:[%s1193 + $0x30] sm:$0xff]
      %v4375 = vld [vmem:[%s1193 + $0x38] sm:$0xff]
      %v4376 = vld [vmem:[%s1193 + $0x40] sm:$0x3]
      %v4377 = vld [vmem:[%s1193 + $0x48] sm:$0xff]
      %v4378 = vld [vmem:[%s1193 + $0x50] sm:$0xff]
      %v4379 = vld [vmem:[%s1193 + $0x58] sm:$0x3]
      %v4380 = vld [vmem:[%s1193 + $0x60] sm:$0xff]
      %v4381 = vld [vmem:[%s1193 + $0x68] sm:$0xff]
      %v4382 = vld [vmem:[%s1193 + $0x70] sm:$0x3]
      %v4383 = vld [vmem:[%s1193 + $0x78] sm:$0xff]
      %v4384 = vld [vmem:[%s1193 + $0x80] sm:$0xff]
      %v4385 = vld [vmem:[%s1193 + $0x88] sm:$0x3]
      %v4386 = vld [vmem:[%s1193 + $0x90] sm:$0xff]
      %v4387 = vld [vmem:[%s1193 + $0x98] sm:$0xff]
      %v4388 = vld [vmem:[%s1193 + $0xa0] sm:$0x3]
      %v4389 = vld [vmem:[%s1193 + $0xa8] sm:$0xff]
      %v4390 = vld [vmem:[%s1193 + $0xb0] sm:$0xff]
      %v4391 = vld [vmem:[%s1193 + $0xb8] sm:$0x3]
      %v4392 = vld [vmem:[%s1193 + $0xc0] sm:$0xff]
      %v4393 = vld [vmem:[%s1193 + $0xc8] sm:$0xff]
      %v4394 = vld [vmem:[%s1193 + $0xd0] sm:$0x3]
      %v4395 = vld [vmem:[%s1193 + $0xd8] sm:$0xff]
      %v4396 = vld [vmem:[%s1193 + $0xe0] sm:$0xff]
      %v4397 = vld [vmem:[%s1193 + $0xe8] sm:$0x3]
      %v4398 = vld [vmem:[%s1193 + $0xf0] sm:$0xff]
      %v4399 = vld [vmem:[%s1193 + $0xf8] sm:$0xff]
      %v4400 = vld [vmem:[%s1193 + $0x100] sm:$0x3]
      %v4401 = vld [vmem:[%s1193 + $0x108] sm:$0xff]
      %v4402 = vld [vmem:[%s1193 + $0x110] sm:$0xff]
      %v4403 = vld [vmem:[%s1193 + $0x118] sm:$0x3]
      %v4404 = vld [vmem:[%s1193 + $0x120] sm:$0xff]
      %v4405 = vld [vmem:[%s1193 + $0x128] sm:$0xff]
      %v4406 = vld [vmem:[%s1193 + $0x130] sm:$0x3]
      %v4407 = vld [vmem:[%s1193 + $0x138] sm:$0xff]
      %v4408 = vld [vmem:[%s1193 + $0x140] sm:$0xff]
      %v4409 = vld [vmem:[%s1193 + $0x148] sm:$0x3]
      %v4410 = vld [vmem:[%s1193 + $0x150] sm:$0xff]
      %v4411 = vld [vmem:[%s1193 + $0x158] sm:$0xff]
      %v4412 = vld [vmem:[%s1193 + $0x160] sm:$0x3]
      %v4413 = vld [vmem:[%s1193 + $0x168] sm:$0xff]
      %v4414 = vld [vmem:[%s1193 + $0x170] sm:$0xff]
      %v4415 = vld [vmem:[%s1193 + $0x178] sm:$0x3]
      %v4464 = vrot.slane %v4368, 1
      %v4465 = vrot.slane %v4369, 1
      %v4466 = vsel %vm772, %v4464, %v4465
      %v4467 = vrot.slane %v4370, 1
      %v4468 = vsel %vm772, %v4465, %v4467
      %v4469 = vrot.slane %v4371, 1
      %v4470 = vrot.slane %v4372, 1
      %v4471 = vsel %vm772, %v4469, %v4470
      %v4472 = vrot.slane %v4373, 1
      %v4473 = vsel %vm772, %v4470, %v4472
      %v4474 = vrot.slane %v4374, 1
      %v4475 = vrot.slane %v4375, 1
      %v4476 = vsel %vm772, %v4474, %v4475
      %v4477 = vrot.slane %v4376, 1
      %v4478 = vsel %vm772, %v4475, %v4477
      %v4479 = vrot.slane %v4377, 1
      %v4480 = vrot.slane %v4378, 1
      %v4481 = vsel %vm772, %v4479, %v4480
      %v4482 = vrot.slane %v4379, 1
      %v4483 = vsel %vm772, %v4480, %v4482
      %v4484 = vrot.slane %v4380, 1
      %v4485 = vrot.slane %v4381, 1
      %v4486 = vsel %vm772, %v4484, %v4485
      %v4487 = vrot.slane %v4382, 1
      %v4488 = vsel %vm772, %v4485, %v4487
      %v4489 = vrot.slane %v4383, 1
      %v4490 = vrot.slane %v4384, 1
      %v4491 = vsel %vm772, %v4489, %v4490
      %v4492 = vrot.slane %v4385, 1
      %v4493 = vsel %vm772, %v4490, %v4492
      %v4494 = vrot.slane %v4386, 1
      %v4495 = vrot.slane %v4387, 1
      %v4496 = vsel %vm772, %v4494, %v4495
      %v4497 = vrot.slane %v4388, 1
      %v4498 = vsel %vm772, %v4495, %v4497
      %v4499 = vrot.slane %v4389, 1
      %v4500 = vrot.slane %v4390, 1
      %v4501 = vsel %vm772, %v4499, %v4500
      %v4502 = vrot.slane %v4391, 1
      %v4503 = vsel %vm772, %v4500, %v4502
      %v4504 = vrot.slane %v4392, 1
      %v4505 = vrot.slane %v4393, 1
      %v4506 = vsel %vm772, %v4504, %v4505
      %v4507 = vrot.slane %v4394, 1
      %v4508 = vsel %vm772, %v4505, %v4507
      %v4509 = vrot.slane %v4395, 1
      %v4510 = vrot.slane %v4396, 1
      %v4511 = vsel %vm772, %v4509, %v4510
      %v4512 = vrot.slane %v4397, 1
      %v4513 = vsel %vm772, %v4510, %v4512
      %v4514 = vrot.slane %v4398, 1
      %v4515 = vrot.slane %v4399, 1
      %v4516 = vsel %vm772, %v4514, %v4515
      %v4517 = vrot.slane %v4400, 1
      %v4518 = vsel %vm772, %v4515, %v4517
      %v4519 = vrot.slane %v4401, 1
      %v4520 = vrot.slane %v4402, 1
      %v4521 = vsel %vm772, %v4519, %v4520
      %v4522 = vrot.slane %v4403, 1
      %v4523 = vsel %vm772, %v4520, %v4522
      %v4524 = vrot.slane %v4404, 1
      %v4525 = vrot.slane %v4405, 1
      %v4526 = vsel %vm772, %v4524, %v4525
      %v4527 = vrot.slane %v4406, 1
      %v4528 = vsel %vm772, %v4525, %v4527
      %v4529 = vrot.slane %v4407, 1
      %v4530 = vrot.slane %v4408, 1
      %v4531 = vsel %vm772, %v4529, %v4530
      %v4532 = vrot.slane %v4409, 1
      %v4533 = vsel %vm772, %v4530, %v4532
      %v4534 = vrot.slane %v4410, 1
      %v4535 = vrot.slane %v4411, 1
      %v4536 = vsel %vm772, %v4534, %v4535
      %v4537 = vrot.slane %v4412, 1
      %v4538 = vsel %vm772, %v4535, %v4537
      %v4539 = vrot.slane %v4413, 1
      %v4540 = vrot.slane %v4414, 1
      %v4541 = vsel %vm772, %v4539, %v4540
      %v4542 = vrot.slane %v4415, 1
      %v4543 = vsel %vm772, %v4540, %v4542
      %4544 = vrot.lane.b32.xlu0 %v4466, 4
      %v4545 = vpop.permute.xlu0 %4544
      %4546 = vrot.lane.b32.xlu0 %v4468, 4
      %v4547 = vpop.permute.xlu0 %4546
      %4548 = vrot.lane.b32.xlu0 %v4471, 4
      %v4549 = vpop.permute.xlu0 %4548
      %4550 = vrot.lane.b32.xlu0 %v4473, 4
      %v4551 = vpop.permute.xlu0 %4550
      %4552 = vrot.lane.b32.xlu0 %v4476, 4
      %v4553 = vpop.permute.xlu0 %4552
      %4554 = vrot.lane.b32.xlu0 %v4478, 4
      %v4555 = vpop.permute.xlu0 %4554
      %4556 = vrot.lane.b32.xlu0 %v4481, 4
      %v4557 = vpop.permute.xlu0 %4556
      %4558 = vrot.lane.b32.xlu0 %v4483, 4
      %v4559 = vpop.permute.xlu0 %4558
      %4560 = vrot.lane.b32.xlu0 %v4486, 4
      %v4561 = vpop.permute.xlu0 %4560
      %4562 = vrot.lane.b32.xlu0 %v4488, 4
      %v4563 = vpop.permute.xlu0 %4562
      %4564 = vrot.lane.b32.xlu0 %v4491, 4
      %v4565 = vpop.permute.xlu0 %4564
      %4566 = vrot.lane.b32.xlu0 %v4493, 4
      %v4567 = vpop.permute.xlu0 %4566
      %4568 = vrot.lane.b32.xlu0 %v4496, 4
      %v4569 = vpop.permute.xlu0 %4568
      %4570 = vrot.lane.b32.xlu0 %v4498, 4
      %v4571 = vpop.permute.xlu0 %4570
      %4572 = vrot.lane.b32.xlu0 %v4501, 4
      %v4573 = vpop.permute.xlu0 %4572
      %4574 = vrot.lane.b32.xlu0 %v4503, 4
      %v4575 = vpop.permute.xlu0 %4574
      %4576 = vrot.lane.b32.xlu0 %v4506, 4
      %v4577 = vpop.permute.xlu0 %4576
      %4578 = vrot.lane.b32.xlu0 %v4508, 4
      %v4579 = vpop.permute.xlu0 %4578
      %4580 = vrot.lane.b32.xlu0 %v4511, 4
      %v4581 = vpop.permute.xlu0 %4580
      %4582 = vrot.lane.b32.xlu0 %v4513, 4
      %v4583 = vpop.permute.xlu0 %4582
      %4584 = vrot.lane.b32.xlu0 %v4516, 4
      %v4585 = vpop.permute.xlu0 %4584
      %4586 = vrot.lane.b32.xlu0 %v4518, 4
      %v4587 = vpop.permute.xlu0 %4586
      %4588 = vrot.lane.b32.xlu0 %v4521, 4
      %v4589 = vpop.permute.xlu0 %4588
      %4590 = vrot.lane.b32.xlu0 %v4523, 4
      %v4591 = vpop.permute.xlu0 %4590
      %4592 = vrot.lane.b32.xlu0 %v4526, 4
      %v4593 = vpop.permute.xlu0 %4592
      %4594 = vrot.lane.b32.xlu0 %v4528, 4
      %v4595 = vpop.permute.xlu0 %4594
      %4596 = vrot.lane.b32.xlu0 %v4531, 4
      %v4597 = vpop.permute.xlu0 %4596
      %4598 = vrot.lane.b32.xlu0 %v4533, 4
      %v4599 = vpop.permute.xlu0 %4598
      %4600 = vrot.lane.b32.xlu0 %v4536, 4
      %v4601 = vpop.permute.xlu0 %4600
      %4602 = vrot.lane.b32.xlu0 %v4538, 4
      %v4603 = vpop.permute.xlu0 %4602
      %4604 = vrot.lane.b32.xlu0 %v4541, 4
      %v4605 = vpop.permute.xlu0 %4604
      %4606 = vrot.lane.b32.xlu0 %v4543, 4
      %v4607 = vpop.permute.xlu0 %4606
      %v4640 = vrot.slane %v4368, 2
      %v4641 = vrot.slane %v4369, 2
      %v4642 = vsel %vm949, %v4640, %v4641
      %v4643 = vrot.slane %v4370, 2
      %v4644 = vsel %vm949, %v4641, %v4643
      %v4645 = vrot.slane %v4371, 2
      %v4646 = vrot.slane %v4372, 2
      %v4647 = vsel %vm949, %v4645, %v4646
      %v4648 = vrot.slane %v4373, 2
      %v4649 = vsel %vm949, %v4646, %v4648
      %v4650 = vrot.slane %v4374, 2
      %v4651 = vrot.slane %v4375, 2
      %v4652 = vsel %vm949, %v4650, %v4651
      %v4653 = vrot.slane %v4376, 2
      %v4654 = vsel %vm949, %v4651, %v4653
      %v4655 = vrot.slane %v4377, 2
      %v4656 = vrot.slane %v4378, 2
      %v4657 = vsel %vm949, %v4655, %v4656
      %v4658 = vrot.slane %v4379, 2
      %v4659 = vsel %vm949, %v4656, %v4658
      %v4660 = vrot.slane %v4380, 2
      %v4661 = vrot.slane %v4381, 2
      %v4662 = vsel %vm949, %v4660, %v4661
      %v4663 = vrot.slane %v4382, 2
      %v4664 = vsel %vm949, %v4661, %v4663
      %v4665 = vrot.slane %v4383, 2
      %v4666 = vrot.slane %v4384, 2
      %v4667 = vsel %vm949, %v4665, %v4666
      %v4668 = vrot.slane %v4385, 2
      %v4669 = vsel %vm949, %v4666, %v4668
      %v4670 = vrot.slane %v4386, 2
      %v4671 = vrot.slane %v4387, 2
      %v4672 = vsel %vm949, %v4670, %v4671
      %v4673 = vrot.slane %v4388, 2
      %v4674 = vsel %vm949, %v4671, %v4673
      %v4675 = vrot.slane %v4389, 2
      %v4676 = vrot.slane %v4390, 2
      %v4677 = vsel %vm949, %v4675, %v4676
      %v4678 = vrot.slane %v4391, 2
      %v4679 = vsel %vm949, %v4676, %v4678
      %v4680 = vrot.slane %v4392, 2
      %v4681 = vrot.slane %v4393, 2
      %v4682 = vsel %vm949, %v4680, %v4681
      %v4683 = vrot.slane %v4394, 2
      %v4684 = vsel %vm949, %v4681, %v4683
      %v4685 = vrot.slane %v4395, 2
      %v4686 = vrot.slane %v4396, 2
      %v4687 = vsel %vm949, %v4685, %v4686
      %v4688 = vrot.slane %v4397, 2
      %v4689 = vsel %vm949, %v4686, %v4688
      %v4690 = vrot.slane %v4398, 2
      %v4691 = vrot.slane %v4399, 2
      %v4692 = vsel %vm949, %v4690, %v4691
      %v4693 = vrot.slane %v4400, 2
      %v4694 = vsel %vm949, %v4691, %v4693
      %v4695 = vrot.slane %v4401, 2
      %v4696 = vrot.slane %v4402, 2
      %v4697 = vsel %vm949, %v4695, %v4696
      %v4698 = vrot.slane %v4403, 2
      %v4699 = vsel %vm949, %v4696, %v4698
      %v4700 = vrot.slane %v4404, 2
      %v4701 = vrot.slane %v4405, 2
      %v4702 = vsel %vm949, %v4700, %v4701
      %v4703 = vrot.slane %v4406, 2
      %v4704 = vsel %vm949, %v4701, %v4703
      %v4705 = vrot.slane %v4407, 2
      %v4706 = vrot.slane %v4408, 2
      %v4707 = vsel %vm949, %v4705, %v4706
      %v4708 = vrot.slane %v4409, 2
      %v4709 = vsel %vm949, %v4706, %v4708
      %v4710 = vrot.slane %v4410, 2
      %v4711 = vrot.slane %v4411, 2
      %v4712 = vsel %vm949, %v4710, %v4711
      %v4713 = vrot.slane %v4412, 2
      %v4714 = vsel %vm949, %v4711, %v4713
      %v4715 = vrot.slane %v4413, 2
      %v4716 = vrot.slane %v4414, 2
      %v4717 = vsel %vm949, %v4715, %v4716
      %v4718 = vrot.slane %v4415, 2
      %v4719 = vsel %vm949, %v4716, %v4718
      %4720 = vrot.lane.b32.xlu0 %v4642, 8
      %v4721 = vpop.permute.xlu0 %4720
      %4722 = vrot.lane.b32.xlu0 %v4644, 8
      %v4723 = vpop.permute.xlu0 %4722
      %4724 = vrot.lane.b32.xlu0 %v4647, 8
      %v4725 = vpop.permute.xlu0 %4724
      %4726 = vrot.lane.b32.xlu0 %v4649, 8
      %v4727 = vpop.permute.xlu0 %4726
      %4728 = vrot.lane.b32.xlu0 %v4652, 8
      %v4729 = vpop.permute.xlu0 %4728
      %4730 = vrot.lane.b32.xlu0 %v4654, 8
      %v4731 = vpop.permute.xlu0 %4730
      %4732 = vrot.lane.b32.xlu0 %v4657, 8
      %v4733 = vpop.permute.xlu0 %4732
      %4734 = vrot.lane.b32.xlu0 %v4659, 8
      %v4735 = vpop.permute.xlu0 %4734
      %4736 = vrot.lane.b32.xlu0 %v4662, 8
      %v4737 = vpop.permute.xlu0 %4736
      %4738 = vrot.lane.b32.xlu0 %v4664, 8
      %v4739 = vpop.permute.xlu0 %4738
      %4740 = vrot.lane.b32.xlu0 %v4667, 8
      %v4741 = vpop.permute.xlu0 %4740
      %4742 = vrot.lane.b32.xlu0 %v4669, 8
      %v4743 = vpop.permute.xlu0 %4742
      %4744 = vrot.lane.b32.xlu0 %v4672, 8
      %v4745 = vpop.permute.xlu0 %4744
      %4746 = vrot.lane.b32.xlu0 %v4674, 8
      %v4747 = vpop.permute.xlu0 %4746
      %4748 = vrot.lane.b32.xlu0 %v4677, 8
      %v4749 = vpop.permute.xlu0 %4748
      %4750 = vrot.lane.b32.xlu0 %v4679, 8
      %v4751 = vpop.permute.xlu0 %4750
      %4752 = vrot.lane.b32.xlu0 %v4682, 8
      %v4753 = vpop.permute.xlu0 %4752
      %4754 = vrot.lane.b32.xlu0 %v4684, 8
      %v4755 = vpop.permute.xlu0 %4754
      %4756 = vrot.lane.b32.xlu0 %v4687, 8
      %v4757 = vpop.permute.xlu0 %4756
      %4758 = vrot.lane.b32.xlu0 %v4689, 8
      %v4759 = vpop.permute.xlu0 %4758
      %4760 = vrot.lane.b32.xlu0 %v4692, 8
      %v4761 = vpop.permute.xlu0 %4760
      %4762 = vrot.lane.b32.xlu0 %v4694, 8
      %v4763 = vpop.permute.xlu0 %4762
      %4764 = vrot.lane.b32.xlu0 %v4697, 8
      %v4765 = vpop.permute.xlu0 %4764
      %4766 = vrot.lane.b32.xlu0 %v4699, 8
      %v4767 = vpop.permute.xlu0 %4766
      %4768 = vrot.lane.b32.xlu0 %v4702, 8
      %v4769 = vpop.permute.xlu0 %4768
      %4770 = vrot.lane.b32.xlu0 %v4704, 8
      %v4771 = vpop.permute.xlu0 %4770
      %4772 = vrot.lane.b32.xlu0 %v4707, 8
      %v4773 = vpop.permute.xlu0 %4772
      %4774 = vrot.lane.b32.xlu0 %v4709, 8
      %v4775 = vpop.permute.xlu0 %4774
      %4776 = vrot.lane.b32.xlu0 %v4712, 8
      %v4777 = vpop.permute.xlu0 %4776
      %4778 = vrot.lane.b32.xlu0 %v4714, 8
      %v4779 = vpop.permute.xlu0 %4778
      %4780 = vrot.lane.b32.xlu0 %v4717, 8
      %v4781 = vpop.permute.xlu0 %4780
      %4782 = vrot.lane.b32.xlu0 %v4719, 8
      %v4783 = vpop.permute.xlu0 %4782
      %v4816 = vsel %vm620, %v4368, %v4545
      %v4817 = vsel %vm620, %v4369, %v4547
      %v4818 = vsel %vm620, %v4371, %v4549
      %v4819 = vsel %vm620, %v4372, %v4551
      %v4820 = vsel %vm620, %v4374, %v4553
      %v4821 = vsel %vm620, %v4375, %v4555
      %v4822 = vsel %vm620, %v4377, %v4557
      %v4823 = vsel %vm620, %v4378, %v4559
      %v4824 = vsel %vm620, %v4380, %v4561
      %v4825 = vsel %vm620, %v4381, %v4563
      %v4826 = vsel %vm620, %v4383, %v4565
      %v4827 = vsel %vm620, %v4384, %v4567
      %v4828 = vsel %vm620, %v4386, %v4569
      %v4829 = vsel %vm620, %v4387, %v4571
      %v4830 = vsel %vm620, %v4389, %v4573
      %v4831 = vsel %vm620, %v4390, %v4575
      %v4832 = vsel %vm620, %v4392, %v4577
      %v4833 = vsel %vm620, %v4393, %v4579
      %v4834 = vsel %vm620, %v4395, %v4581
      %v4835 = vsel %vm620, %v4396, %v4583
      %v4836 = vsel %vm620, %v4398, %v4585
      %v4837 = vsel %vm620, %v4399, %v4587
      %v4838 = vsel %vm620, %v4401, %v4589
      %v4839 = vsel %vm620, %v4402, %v4591
      %v4840 = vsel %vm620, %v4404, %v4593
      %v4841 = vsel %vm620, %v4405, %v4595
      %v4842 = vsel %vm620, %v4407, %v4597
      %v4843 = vsel %vm620, %v4408, %v4599
      %v4844 = vsel %vm620, %v4410, %v4601
      %v4845 = vsel %vm620, %v4411, %v4603
      %v4846 = vsel %vm620, %v4413, %v4605
      %v4847 = vsel %vm620, %v4414, %v4607
      %v4848 = vsel %vm1158, %v4816, %v4721
      %v4849 = vsel %vm1158, %v4817, %v4723
      %v4850 = vsel %vm1158, %v4818, %v4725
      %v4851 = vsel %vm1158, %v4819, %v4727
      %v4852 = vsel %vm1158, %v4820, %v4729
      %v4853 = vsel %vm1158, %v4821, %v4731
      %v4854 = vsel %vm1158, %v4822, %v4733
      %v4855 = vsel %vm1158, %v4823, %v4735
      %v4856 = vsel %vm1158, %v4824, %v4737
      %v4857 = vsel %vm1158, %v4825, %v4739
      %v4858 = vsel %vm1158, %v4826, %v4741
      %v4859 = vsel %vm1158, %v4827, %v4743
      %v4860 = vsel %vm1158, %v4828, %v4745
      %v4861 = vsel %vm1158, %v4829, %v4747
      %v4862 = vsel %vm1158, %v4830, %v4749
      %v4863 = vsel %vm1158, %v4831, %v4751
      %v4864 = vsel %vm1158, %v4832, %v4753
      %v4865 = vsel %vm1158, %v4833, %v4755
      %v4866 = vsel %vm1158, %v4834, %v4757
      %v4867 = vsel %vm1158, %v4835, %v4759
      %v4868 = vsel %vm1158, %v4836, %v4761
      %v4869 = vsel %vm1158, %v4837, %v4763
      %v4870 = vsel %vm1158, %v4838, %v4765
      %v4871 = vsel %vm1158, %v4839, %v4767
      %v4872 = vsel %vm1158, %v4840, %v4769
      %v4873 = vsel %vm1158, %v4841, %v4771
      %v4874 = vsel %vm1158, %v4842, %v4773
      %v4875 = vsel %vm1158, %v4843, %v4775
      %v4876 = vsel %vm1158, %v4844, %v4777
      %v4877 = vsel %vm1158, %v4845, %v4779
      %v4878 = vsel %vm1158, %v4846, %v4781
      %v4879 = vsel %vm1158, %v4847, %v4783
      %s4880 = scalar_lea.vmem %s4, 16
      %v4881 = vld [vmem:[%s4880] sm:$0xff]
      %v4882 = vld [vmem:[%s4880 + $0x8] sm:$0xf]
      %v4884 = vsel %vm1709, %v4848, 0
      %v4887 = vsel %vm1709, %v4849, 0
      %v4890 = vsel %vm1709, %v4850, 0
      %v4893 = vsel %vm1709, %v4851, 0
      %v4896 = vsel %vm1709, %v4852, 0
      %v4899 = vsel %vm1709, %v4853, 0
      %v4902 = vsel %vm1709, %v4854, 0
      %v4905 = vsel %vm1709, %v4855, 0
      %v4908 = vsel %vm1709, %v4856, 0
      %v4911 = vsel %vm1709, %v4857, 0
      %v4914 = vsel %vm1709, %v4858, 0
      %v4917 = vsel %vm1709, %v4859, 0
      %v4920 = vsel %vm1709, %v4860, 0
      %v4923 = vsel %vm1709, %v4861, 0
      %v4926 = vsel %vm1709, %v4862, 0
      %v4929 = vsel %vm1709, %v4863, 0
      %v4932 = vsel %vm1709, %v4864, 0
      %v4935 = vsel %vm1709, %v4865, 0
      %v4938 = vsel %vm1709, %v4866, 0
      %v4941 = vsel %vm1709, %v4867, 0
      %v4944 = vsel %vm1709, %v4868, 0
      %v4947 = vsel %vm1709, %v4869, 0
      %v4950 = vsel %vm1709, %v4870, 0
      %v4953 = vsel %vm1709, %v4871, 0
      %v4956 = vsel %vm1709, %v4872, 0
      %v4959 = vsel %vm1709, %v4873, 0
      %v4962 = vsel %vm1709, %v4874, 0
      %v4965 = vsel %vm1709, %v4875, 0
      %v4968 = vsel %vm1709, %v4876, 0
      %v4971 = vsel %vm1709, %v4877, 0
      %v4974 = vsel %vm1709, %v4878, 0
      %v4977 = vsel %vm1709, %v4879, 0
      %v4980 = vsel %vm1806, %v4882, 0
      %4982 = vmatprep.subr.mxu0 0.0
      %4983 = vmatpush1.msra.mxu0 %v4881
      %4984 = vmatprep.subr.mxu0 0.0
      %4985 = vmatpush1.msra.mxu0 %v4980
      %4986 = vmatprep.subr.mxu0 0.0
      %4987 = vmatpush1.msra.mxu0 0.0
      %4988 = vmatprep.subr.mxu0 0.0
      %4989 = vmatpush1.msra.mxu0 0.0
      %4990 = vmatprep.subr.mxu0 0.0
      %4991 = vmatpush1.msra.mxu0 0.0
      %4992 = vmatprep.subr.mxu0 0.0
      %4993 = vmatpush1.msra.mxu0 0.0
      %4994 = vmatprep.subr.mxu0 0.0
      %4995 = vmatpush1.msra.mxu0 0.0
      %4996 = vmatprep.subr.mxu0 0.0
      %4997 = vmatpush1.msra.mxu0 0.0
      %4998 = vmatprep.subr.mxu0 0.0
      %4999 = vmatpush1.msra.mxu0 0.0
      %5000 = vmatprep.subr.mxu0 0.0
      %5001 = vmatpush1.msra.mxu0 0.0
      %5002 = vmatprep.subr.mxu0 0.0
      %5003 = vmatpush1.msra.mxu0 0.0
      %5004 = vmatprep.subr.mxu0 0.0
      %5005 = vmatpush1.msra.mxu0 0.0
      %5006 = vmatprep.subr.mxu0 0.0
      %5007 = vmatpush1.msra.mxu0 0.0
      %5008 = vmatprep.subr.mxu0 0.0
      %5009 = vmatpush1.msra.mxu0 0.0
      %5010 = vmatprep.subr.mxu0 0.0
      %5011 = vmatpush1.msra.mxu0 0.0
      %5012 = vmatprep.subr.mxu0 0.0
      %5013 = vmatpush1.msra.mxu0 0.0
      %5014 = vmatprep.subr.mxu0 0.0
      %5015 = vmatpush1.msra.mxu0 0.0
      %5016 = vmatprep.subr.mxu0 0.0
      %5017 = vmatpush1.msra.mxu0 0.0
      %5018 = vmatprep.subr.mxu0 0.0
      %5019 = vmatpush1.msra.mxu0 0.0
      %5020 = vmatprep.subr.mxu0 0.0
      %5021 = vmatpush1.msra.mxu0 0.0
      %5022 = vmatprep.subr.mxu0 0.0
      %5023 = vmatpush1.msra.mxu0 0.0
      %5024 = vmatprep.subr.mxu0 0.0
      %5025 = vmatpush1.msra.mxu0 0.0
      %5026 = vmatprep.subr.mxu0 0.0
      %5027 = vmatpush1.msra.mxu0 0.0
      %5028 = vmatprep.subr.mxu0 0.0
      %5029 = vmatpush1.msra.mxu0 0.0
      %5030 = vmatprep.subr.mxu0 0.0
      %5031 = vmatpush1.msra.mxu0 0.0
      %5032 = vmatprep.subr.mxu0 0.0
      %5033 = vmatpush1.msra.mxu0 0.0
      %5034 = vmatprep.subr.mxu0 0.0
      %5035 = vmatpush1.msra.mxu0 0.0
      %5036 = vmatprep.subr.mxu0 0.0
      %5037 = vmatpush1.msra.mxu0 0.0
      %5038 = vmatprep.subr.mxu0 0.0
      %5039 = vmatpush1.msra.mxu0 0.0
      %5040 = vmatprep.subr.mxu0 0.0
      %5041 = vmatpush1.msra.mxu0 0.0
      %5042 = vmatprep.subr.mxu0 0.0
      %5043 = vmatpush1.msra.mxu0 0.0
      %5044 = vmatprep.subr.mxu0 0.0
      %5045 = vmatpush1.msra.mxu0 0.0
      %5046 = vmatprep.mubr.f32.mxu0 0.0
      %5047 = vmatmul.mubr.f32.gmra.mrb[0].mxu0 %v4884
      %v5048 = vpop.f32.mrb[0].mxu0
      %v5049 = vadd.f32 0.0, %v5048
      %v5050 = vpop.f32.mrb[0].mxu0
      %5051 = vmatprep.mubr.f32.mxu0 0.0
      %5052 = vmatmul.mubr.f32.gmra.mrb[0].mxu0 %v4887
      %v5053 = vpop.f32.mrb[0].mxu0
      %v5054 = vadd.f32 0.0, %v5053
      %v5055 = vpop.f32.mrb[0].mxu0
      %5056 = vmatprep.mubr.f32.mxu0 0.0
      %5057 = vmatmul.mubr.f32.gmra.mrb[0].mxu0 %v4890
      %v5058 = vpop.f32.mrb[0].mxu0
      %v5059 = vadd.f32 0.0, %v5058
      %v5060 = vpop.f32.mrb[0].mxu0
      %5061 = vmatprep.mubr.f32.mxu0 0.0
      %5062 = vmatmul.mubr.f32.gmra.mrb[0].mxu0 %v4893
      %v5063 = vpop.f32.mrb[0].mxu0
      %v5064 = vadd.f32 0.0, %v5063
      %v5065 = vpop.f32.mrb[0].mxu0
      %5066 = vmatprep.mubr.f32.mxu0 0.0
      %5067 = vmatmul.mubr.f32.gmra.mrb[0].mxu0 %v4896
      %v5068 = vpop.f32.mrb[0].mxu0
      %v5069 = vadd.f32 0.0, %v5068
      %v5070 = vpop.f32.mrb[0].mxu0
      %5071 = vmatprep.mubr.f32.mxu0 0.0
      %5072 = vmatmul.mubr.f32.gmra.mrb[0].mxu0 %v4899
      %v5073 = vpop.f32.mrb[0].mxu0
      %v5074 = vadd.f32 0.0, %v5073
      %v5075 = vpop.f32.mrb[0].mxu0
      %5076 = vmatprep.mubr.f32.mxu0 0.0
      %5077 = vmatmul.mubr.f32.gmra.mrb[0].mxu0 %v4902
      %v5078 = vpop.f32.mrb[0].mxu0
      %v5079 = vadd.f32 0.0, %v5078
      %v5080 = vpop.f32.mrb[0].mxu0
      %5081 = vmatprep.mubr.f32.mxu0 0.0
      %5082 = vmatmul.mubr.f32.gmra.mrb[0].mxu0 %v4905
      %v5083 = vpop.f32.mrb[0].mxu0
      %v5084 = vadd.f32 0.0, %v5083
      %v5085 = vpop.f32.mrb[0].mxu0
      %5086 = vmatprep.mubr.f32.mxu0 0.0
      %5087 = vmatmul.mubr.f32.gmra.mrb[0].mxu0 %v4908
      %v5088 = vpop.f32.mrb[0].mxu0
      %v5089 = vadd.f32 0.0, %v5088
      %v5090 = vpop.f32.mrb[0].mxu0
      %5091 = vmatprep.mubr.f32.mxu0 0.0
      %5092 = vmatmul.mubr.f32.gmra.mrb[0].mxu0 %v4911
      %v5093 = vpop.f32.mrb[0].mxu0
      %v5094 = vadd.f32 0.0, %v5093
      %v5095 = vpop.f32.mrb[0].mxu0
      %5096 = vmatprep.mubr.f32.mxu0 0.0
      %5097 = vmatmul.mubr.f32.gmra.mrb[0].mxu0 %v4914
      %v5098 = vpop.f32.mrb[0].mxu0
      %v5099 = vadd.f32 0.0, %v5098
      %v5100 = vpop.f32.mrb[0].mxu0
      %5101 = vmatprep.mubr.f32.mxu0 0.0
      %5102 = vmatmul.mubr.f32.gmra.mrb[0].mxu0 %v4917
      %v5103 = vpop.f32.mrb[0].mxu0
      %v5104 = vadd.f32 0.0, %v5103
      %v5105 = vpop.f32.mrb[0].mxu0
      %5106 = vmatprep.mubr.f32.mxu0 0.0
      %5107 = vmatmul.mubr.f32.gmra.mrb[0].mxu0 %v4920
      %v5108 = vpop.f32.mrb[0].mxu0
      %v5109 = vadd.f32 0.0, %v5108
      %v5110 = vpop.f32.mrb[0].mxu0
      %5111 = vmatprep.mubr.f32.mxu0 0.0
      %5112 = vmatmul.mubr.f32.gmra.mrb[0].mxu0 %v4923
      %v5113 = vpop.f32.mrb[0].mxu0
      %v5114 = vadd.f32 0.0, %v5113
      %v5115 = vpop.f32.mrb[0].mxu0
      %5116 = vmatprep.mubr.f32.mxu0 0.0
      %5117 = vmatmul.mubr.f32.gmra.mrb[0].mxu0 %v4926
      %v5118 = vpop.f32.mrb[0].mxu0
      %v5119 = vadd.f32 0.0, %v5118
      %v5120 = vpop.f32.mrb[0].mxu0
      %5121 = vmatprep.mubr.f32.mxu0 0.0
      %5122 = vmatmul.mubr.f32.gmra.mrb[0].mxu0 %v4929
      %v5123 = vpop.f32.mrb[0].mxu0
      %v5124 = vadd.f32 0.0, %v5123
      %v5125 = vpop.f32.mrb[0].mxu0
      %5126 = vmatprep.mubr.f32.mxu0 0.0
      %5127 = vmatmul.mubr.f32.gmra.mrb[0].mxu0 %v4932
      %v5128 = vpop.f32.mrb[0].mxu0
      %v5129 = vadd.f32 0.0, %v5128
      %v5130 = vpop.f32.mrb[0].mxu0
      %5131 = vmatprep.mubr.f32.mxu0 0.0
      %5132 = vmatmul.mubr.f32.gmra.mrb[0].mxu0 %v4935
      %v5133 = vpop.f32.mrb[0].mxu0
      %v5134 = vadd.f32 0.0, %v5133
      %v5135 = vpop.f32.mrb[0].mxu0
      %5136 = vmatprep.mubr.f32.mxu0 0.0
      %5137 = vmatmul.mubr.f32.gmra.mrb[0].mxu0 %v4938
      %v5138 = vpop.f32.mrb[0].mxu0
      %v5139 = vadd.f32 0.0, %v5138
      %v5140 = vpop.f32.mrb[0].mxu0
      %5141 = vmatprep.mubr.f32.mxu0 0.0
      %5142 = vmatmul.mubr.f32.gmra.mrb[0].mxu0 %v4941
      %v5143 = vpop.f32.mrb[0].mxu0
      %v5144 = vadd.f32 0.0, %v5143
      %v5145 = vpop.f32.mrb[0].mxu0
      %5146 = vmatprep.mubr.f32.mxu0 0.0
      %5147 = vmatmul.mubr.f32.gmra.mrb[0].mxu0 %v4944
      %v5148 = vpop.f32.mrb[0].mxu0
      %v5149 = vadd.f32 0.0, %v5148
      %v5150 = vpop.f32.mrb[0].mxu0
      %5151 = vmatprep.mubr.f32.mxu0 0.0
      %5152 = vmatmul.mubr.f32.gmra.mrb[0].mxu0 %v4947
      %v5153 = vpop.f32.mrb[0].mxu0
      %v5154 = vadd.f32 0.0, %v5153
      %v5155 = vpop.f32.mrb[0].mxu0
      %5156 = vmatprep.mubr.f32.mxu0 0.0
      %5157 = vmatmul.mubr.f32.gmra.mrb[0].mxu0 %v4950
      %v5158 = vpop.f32.mrb[0].mxu0
      %v5159 = vadd.f32 0.0, %v5158
      %v5160 = vpop.f32.mrb[0].mxu0
      %5161 = vmatprep.mubr.f32.mxu0 0.0
      %5162 = vmatmul.mubr.f32.gmra.mrb[0].mxu0 %v4953
      %v5163 = vpop.f32.mrb[0].mxu0
      %v5164 = vadd.f32 0.0, %v5163
      %v5165 = vpop.f32.mrb[0].mxu0
      %5166 = vmatprep.mubr.f32.mxu0 0.0
      %5167 = vmatmul.mubr.f32.gmra.mrb[0].mxu0 %v4956
      %v5168 = vpop.f32.mrb[0].mxu0
      %v5169 = vadd.f32 0.0, %v5168
      %v5170 = vpop.f32.mrb[0].mxu0
      %5171 = vmatprep.mubr.f32.mxu0 0.0
      %5172 = vmatmul.mubr.f32.gmra.mrb[0].mxu0 %v4959
      %v5173 = vpop.f32.mrb[0].mxu0
      %v5174 = vadd.f32 0.0, %v5173
      %v5175 = vpop.f32.mrb[0].mxu0
      %5176 = vmatprep.mubr.f32.mxu0 0.0
      %5177 = vmatmul.mubr.f32.gmra.mrb[0].mxu0 %v4962
      %v5178 = vpop.f32.mrb[0].mxu0
      %v5179 = vadd.f32 0.0, %v5178
      %v5180 = vpop.f32.mrb[0].mxu0
      %5181 = vmatprep.mubr.f32.mxu0 0.0
      %5182 = vmatmul.mubr.f32.gmra.mrb[0].mxu0 %v4965
      %v5183 = vpop.f32.mrb[0].mxu0
      %v5184 = vadd.f32 0.0, %v5183
      %v5185 = vpop.f32.mrb[0].mxu0
      %5186 = vmatprep.mubr.f32.mxu0 0.0
      %5187 = vmatmul.mubr.f32.gmra.mrb[0].mxu0 %v4968
      %v5188 = vpop.f32.mrb[0].mxu0
      %v5189 = vadd.f32 0.0, %v5188
      %v5190 = vpop.f32.mrb[0].mxu0
      %5191 = vmatprep.mubr.f32.mxu0 0.0
      %5192 = vmatmul.mubr.f32.gmra.mrb[0].mxu0 %v4971
      %v5193 = vpop.f32.mrb[0].mxu0
      %v5194 = vadd.f32 0.0, %v5193
      %v5195 = vpop.f32.mrb[0].mxu0
      %5196 = vmatprep.mubr.f32.mxu0 0.0
      %5197 = vmatmul.mubr.f32.gmra.mrb[0].mxu0 %v4974
      %v5198 = vpop.f32.mrb[0].mxu0
      %v5199 = vadd.f32 0.0, %v5198
      %v5200 = vpop.f32.mrb[0].mxu0
      %5201 = vmatprep.mubr.f32.mxu0 0.0
      %5202 = vmatmul.mubr.f32.gmra.mrb[0].mxu0 %v4977
      %v5203 = vpop.f32.mrb[0].mxu0
      %v5204 = vadd.f32 0.0, %v5203
      %v5205 = vpop.f32.mrb[0].mxu0
      %5206 = vdwg.mxu0
      %v5208 = vsel %vm1709, %v4334, 0
      %v5211 = vsel %vm1709, %v4335, 0
      %v5214 = vsel %vm1709, %v4336, 0
      %v5217 = vsel %vm1709, %v4337, 0
      %v5220 = vsel %vm1709, %v4338, 0
      %v5223 = vsel %vm1709, %v4339, 0
      %v5226 = vsel %vm1709, %v4340, 0
      %v5229 = vsel %vm1709, %v4341, 0
      %v5232 = vsel %vm1709, %v4342, 0
      %v5235 = vsel %vm1709, %v4343, 0
      %v5238 = vsel %vm1709, %v4344, 0
      %v5241 = vsel %vm1709, %v4345, 0
      %v5244 = vsel %vm1709, %v4346, 0
      %v5247 = vsel %vm1709, %v4347, 0
      %v5250 = vsel %vm1709, %v4348, 0
      %v5253 = vsel %vm1709, %v4349, 0
      %v5256 = vsel %vm1709, %v4350, 0
      %v5259 = vsel %vm1709, %v4351, 0
      %v5262 = vsel %vm1709, %v4352, 0
      %v5265 = vsel %vm1709, %v4353, 0
      %v5268 = vsel %vm1709, %v4354, 0
      %v5271 = vsel %vm1709, %v4355, 0
      %v5274 = vsel %vm1709, %v4356, 0
      %v5277 = vsel %vm1709, %v4357, 0
      %v5280 = vsel %vm1709, %v4358, 0
      %v5283 = vsel %vm1709, %v4359, 0
      %v5286 = vsel %vm1709, %v4360, 0
      %v5289 = vsel %vm1709, %v4361, 0
      %v5292 = vsel %vm1709, %v4362, 0
      %v5295 = vsel %vm1709, %v4363, 0
      %v5298 = vsel %vm1709, %v4364, 0
      %v5301 = vsel %vm1709, %v4365, 0
      %v5304 = vsel %vm1806, %v4367, 0
      %5306 = vmatprep.subr.mxu0 0.0
      %5307 = vmatpush1.msra.mxu0 %v4366
      %5308 = vmatprep.subr.mxu0 0.0
      %5309 = vmatpush1.msra.mxu0 %v5304
      %5310 = vmatprep.subr.mxu0 0.0
      %5311 = vmatpush1.msra.mxu0 0.0
      %5312 = vmatprep.subr.mxu0 0.0
      %5313 = vmatpush1.msra.mxu0 0.0
      %5314 = vmatprep.subr.mxu0 0.0
      %5315 = vmatpush1.msra.mxu0 0.0
      %5316 = vmatprep.subr.mxu0 0.0
      %5317 = vmatpush1.msra.mxu0 0.0
      %5318 = vmatprep.subr.mxu0 0.0
      %5319 = vmatpush1.msra.mxu0 0.0
      %5320 = vmatprep.subr.mxu0 0.0
      %5321 = vmatpush1.msra.mxu0 0.0
      %5322 = vmatprep.subr.mxu0 0.0
      %5323 = vmatpush1.msra.mxu0 0.0
      %5324 = vmatprep.subr.mxu0 0.0
      %5325 = vmatpush1.msra.mxu0 0.0
      %5326 = vmatprep.subr.mxu0 0.0
      %5327 = vmatpush1.msra.mxu0 0.0
      %5328 = vmatprep.subr.mxu0 0.0
      %5329 = vmatpush1.msra.mxu0 0.0
      %5330 = vmatprep.subr.mxu0 0.0
      %5331 = vmatpush1.msra.mxu0 0.0
      %5332 = vmatprep.subr.mxu0 0.0
      %5333 = vmatpush1.msra.mxu0 0.0
      %5334 = vmatprep.subr.mxu0 0.0
      %5335 = vmatpush1.msra.mxu0 0.0
      %5336 = vmatprep.subr.mxu0 0.0
      %5337 = vmatpush1.msra.mxu0 0.0
      %5338 = vmatprep.subr.mxu0 0.0
      %5339 = vmatpush1.msra.mxu0 0.0
      %5340 = vmatprep.subr.mxu0 0.0
      %5341 = vmatpush1.msra.mxu0 0.0
      %5342 = vmatprep.subr.mxu0 0.0
      %5343 = vmatpush1.msra.mxu0 0.0
      %5344 = vmatprep.subr.mxu0 0.0
      %5345 = vmatpush1.msra.mxu0 0.0
      %5346 = vmatprep.subr.mxu0 0.0
      %5347 = vmatpush1.msra.mxu0 0.0
      %5348 = vmatprep.subr.mxu0 0.0
      %5349 = vmatpush1.msra.mxu0 0.0
      %5350 = vmatprep.subr.mxu0 0.0
      %5351 = vmatpush1.msra.mxu0 0.0
      %5352 = vmatprep.subr.mxu0 0.0
      %5353 = vmatpush1.msra.mxu0 0.0
      %5354 = vmatprep.subr.mxu0 0.0
      %5355 = vmatpush1.msra.mxu0 0.0
      %5356 = vmatprep.subr.mxu0 0.0
      %5357 = vmatpush1.msra.mxu0 0.0
      %5358 = vmatprep.subr.mxu0 0.0
      %5359 = vmatpush1.msra.mxu0 0.0
      %5360 = vmatprep.subr.mxu0 0.0
      %5361 = vmatpush1.msra.mxu0 0.0
      %5362 = vmatprep.subr.mxu0 0.0
      %5363 = vmatpush1.msra.mxu0 0.0
      %5364 = vmatprep.subr.mxu0 0.0
      %5365 = vmatpush1.msra.mxu0 0.0
      %5366 = vmatprep.subr.mxu0 0.0
      %5367 = vmatpush1.msra.mxu0 0.0
      %5368 = vmatprep.subr.mxu0 0.0
      %5369 = vmatpush1.msra.mxu0 0.0
      %5370 = vmatprep.mubr.f32.mxu0 0.0
      %5371 = vmatmul.mubr.f32.gmra.mrb[0].mxu0 %v5208
      %v5372 = vpop.f32.mrb[0].mxu0
      %v5373 = vadd.f32 %v5049, %v5372
      %v5374 = vpop.f32.mrb[0].mxu0
      %5375 = vmatprep.mubr.f32.mxu0 0.0
      %5376 = vmatmul.mubr.f32.gmra.mrb[0].mxu0 %v5211
      %v5377 = vpop.f32.mrb[0].mxu0
      %v5378 = vadd.f32 %v5054, %v5377
      %v5379 = vpop.f32.mrb[0].mxu0
      %5380 = vmatprep.mubr.f32.mxu0 0.0
      %5381 = vmatmul.mubr.f32.gmra.mrb[0].mxu0 %v5214
      %v5382 = vpop.f32.mrb[0].mxu0
      %v5383 = vadd.f32 %v5059, %v5382
      %v5384 = vpop.f32.mrb[0].mxu0
      %5385 = vmatprep.mubr.f32.mxu0 0.0
      %5386 = vmatmul.mubr.f32.gmra.mrb[0].mxu0 %v5217
      %v5387 = vpop.f32.mrb[0].mxu0
      %v5388 = vadd.f32 %v5064, %v5387
      %v5389 = vpop.f32.mrb[0].mxu0
      %5390 = vmatprep.mubr.f32.mxu0 0.0
      %5391 = vmatmul.mubr.f32.gmra.mrb[0].mxu0 %v5220
      %v5392 = vpop.f32.mrb[0].mxu0
      %v5393 = vadd.f32 %v5069, %v5392
      %v5394 = vpop.f32.mrb[0].mxu0
      %5395 = vmatprep.mubr.f32.mxu0 0.0
      %5396 = vmatmul.mubr.f32.gmra.mrb[0].mxu0 %v5223
      %v5397 = vpop.f32.mrb[0].mxu0
      %v5398 = vadd.f32 %v5074, %v5397
      %v5399 = vpop.f32.mrb[0].mxu0
      %5400 = vmatprep.mubr.f32.mxu0 0.0
      %5401 = vmatmul.mubr.f32.gmra.mrb[0].mxu0 %v5226
      %v5402 = vpop.f32.mrb[0].mxu0
      %v5403 = vadd.f32 %v5079, %v5402
      %v5404 = vpop.f32.mrb[0].mxu0
      %5405 = vmatprep.mubr.f32.mxu0 0.0
      %5406 = vmatmul.mubr.f32.gmra.mrb[0].mxu0 %v5229
      %v5407 = vpop.f32.mrb[0].mxu0
      %v5408 = vadd.f32 %v5084, %v5407
      %v5409 = vpop.f32.mrb[0].mxu0
      %5410 = vmatprep.mubr.f32.mxu0 0.0
      %5411 = vmatmul.mubr.f32.gmra.mrb[0].mxu0 %v5232
      %v5412 = vpop.f32.mrb[0].mxu0
      %v5413 = vadd.f32 %v5089, %v5412
      %v5414 = vpop.f32.mrb[0].mxu0
      %5415 = vmatprep.mubr.f32.mxu0 0.0
      %5416 = vmatmul.mubr.f32.gmra.mrb[0].mxu0 %v5235
      %v5417 = vpop.f32.mrb[0].mxu0
      %v5418 = vadd.f32 %v5094, %v5417
      %v5419 = vpop.f32.mrb[0].mxu0
      %5420 = vmatprep.mubr.f32.mxu0 0.0
      %5421 = vmatmul.mubr.f32.gmra.mrb[0].mxu0 %v5238
      %v5422 = vpop.f32.mrb[0].mxu0
      %v5423 = vadd.f32 %v5099, %v5422
      %v5424 = vpop.f32.mrb[0].mxu0
      %5425 = vmatprep.mubr.f32.mxu0 0.0
      %5426 = vmatmul.mubr.f32.gmra.mrb[0].mxu0 %v5241
      %v5427 = vpop.f32.mrb[0].mxu0
      %v5428 = vadd.f32 %v5104, %v5427
      %v5429 = vpop.f32.mrb[0].mxu0
      %5430 = vmatprep.mubr.f32.mxu0 0.0
      %5431 = vmatmul.mubr.f32.gmra.mrb[0].mxu0 %v5244
      %v5432 = vpop.f32.mrb[0].mxu0
      %v5433 = vadd.f32 %v5109, %v5432
      %v5434 = vpop.f32.mrb[0].mxu0
      %5435 = vmatprep.mubr.f32.mxu0 0.0
      %5436 = vmatmul.mubr.f32.gmra.mrb[0].mxu0 %v5247
      %v5437 = vpop.f32.mrb[0].mxu0
      %v5438 = vadd.f32 %v5114, %v5437
      %v5439 = vpop.f32.mrb[0].mxu0
      %5440 = vmatprep.mubr.f32.mxu0 0.0
      %5441 = vmatmul.mubr.f32.gmra.mrb[0].mxu0 %v5250
      %v5442 = vpop.f32.mrb[0].mxu0
      %v5443 = vadd.f32 %v5119, %v5442
      %v5444 = vpop.f32.mrb[0].mxu0
      %5445 = vmatprep.mubr.f32.mxu0 0.0
      %5446 = vmatmul.mubr.f32.gmra.mrb[0].mxu0 %v5253
      %v5447 = vpop.f32.mrb[0].mxu0
      %v5448 = vadd.f32 %v5124, %v5447
      %v5449 = vpop.f32.mrb[0].mxu0
      %5450 = vmatprep.mubr.f32.mxu0 0.0
      %5451 = vmatmul.mubr.f32.gmra.mrb[0].mxu0 %v5256
      %v5452 = vpop.f32.mrb[0].mxu0
      %v5453 = vadd.f32 %v5129, %v5452
      %v5454 = vpop.f32.mrb[0].mxu0
      %5455 = vmatprep.mubr.f32.mxu0 0.0
      %5456 = vmatmul.mubr.f32.gmra.mrb[0].mxu0 %v5259
      %v5457 = vpop.f32.mrb[0].mxu0
      %v5458 = vadd.f32 %v5134, %v5457
      %v5459 = vpop.f32.mrb[0].mxu0
      %5460 = vmatprep.mubr.f32.mxu0 0.0
      %5461 = vmatmul.mubr.f32.gmra.mrb[0].mxu0 %v5262
      %v5462 = vpop.f32.mrb[0].mxu0
      %v5463 = vadd.f32 %v5139, %v5462
      %v5464 = vpop.f32.mrb[0].mxu0
      %5465 = vmatprep.mubr.f32.mxu0 0.0
      %5466 = vmatmul.mubr.f32.gmra.mrb[0].mxu0 %v5265
      %v5467 = vpop.f32.mrb[0].mxu0
      %v5468 = vadd.f32 %v5144, %v5467
      %v5469 = vpop.f32.mrb[0].mxu0
      %5470 = vmatprep.mubr.f32.mxu0 0.0
      %5471 = vmatmul.mubr.f32.gmra.mrb[0].mxu0 %v5268
      %v5472 = vpop.f32.mrb[0].mxu0
      %v5473 = vadd.f32 %v5149, %v5472
      %v5474 = vpop.f32.mrb[0].mxu0
      %5475 = vmatprep.mubr.f32.mxu0 0.0
      %5476 = vmatmul.mubr.f32.gmra.mrb[0].mxu0 %v5271
      %v5477 = vpop.f32.mrb[0].mxu0
      %v5478 = vadd.f32 %v5154, %v5477
      %v5479 = vpop.f32.mrb[0].mxu0
      %5480 = vmatprep.mubr.f32.mxu0 0.0
      %5481 = vmatmul.mubr.f32.gmra.mrb[0].mxu0 %v5274
      %v5482 = vpop.f32.mrb[0].mxu0
      %v5483 = vadd.f32 %v5159, %v5482
      %v5484 = vpop.f32.mrb[0].mxu0
      %5485 = vmatprep.mubr.f32.mxu0 0.0
      %5486 = vmatmul.mubr.f32.gmra.mrb[0].mxu0 %v5277
      %v5487 = vpop.f32.mrb[0].mxu0
      %v5488 = vadd.f32 %v5164, %v5487
      %v5489 = vpop.f32.mrb[0].mxu0
      %5490 = vmatprep.mubr.f32.mxu0 0.0
      %5491 = vmatmul.mubr.f32.gmra.mrb[0].mxu0 %v5280
      %v5492 = vpop.f32.mrb[0].mxu0
      %v5493 = vadd.f32 %v5169, %v5492
      %v5494 = vpop.f32.mrb[0].mxu0
      %5495 = vmatprep.mubr.f32.mxu0 0.0
      %5496 = vmatmul.mubr.f32.gmra.mrb[0].mxu0 %v5283
      %v5497 = vpop.f32.mrb[0].mxu0
      %v5498 = vadd.f32 %v5174, %v5497
      %v5499 = vpop.f32.mrb[0].mxu0
      %5500 = vmatprep.mubr.f32.mxu0 0.0
      %5501 = vmatmul.mubr.f32.gmra.mrb[0].mxu0 %v5286
      %v5502 = vpop.f32.mrb[0].mxu0
      %v5503 = vadd.f32 %v5179, %v5502
      %v5504 = vpop.f32.mrb[0].mxu0
      %5505 = vmatprep.mubr.f32.mxu0 0.0
      %5506 = vmatmul.mubr.f32.gmra.mrb[0].mxu0 %v5289
      %v5507 = vpop.f32.mrb[0].mxu0
      %v5508 = vadd.f32 %v5184, %v5507
      %v5509 = vpop.f32.mrb[0].mxu0
      %5510 = vmatprep.mubr.f32.mxu0 0.0
      %5511 = vmatmul.mubr.f32.gmra.mrb[0].mxu0 %v5292
      %v5512 = vpop.f32.mrb[0].mxu0
      %v5513 = vadd.f32 %v5189, %v5512
      %v5514 = vpop.f32.mrb[0].mxu0
      %5515 = vmatprep.mubr.f32.mxu0 0.0
      %5516 = vmatmul.mubr.f32.gmra.mrb[0].mxu0 %v5295
      %v5517 = vpop.f32.mrb[0].mxu0
      %v5518 = vadd.f32 %v5194, %v5517
      %v5519 = vpop.f32.mrb[0].mxu0
      %5520 = vmatprep.mubr.f32.mxu0 0.0
      %5521 = vmatmul.mubr.f32.gmra.mrb[0].mxu0 %v5298
      %v5522 = vpop.f32.mrb[0].mxu0
      %v5523 = vadd.f32 %v5199, %v5522
      %v5524 = vpop.f32.mrb[0].mxu0
      %5525 = vmatprep.mubr.f32.mxu0 0.0
      %5526 = vmatmul.mubr.f32.gmra.mrb[0].mxu0 %v5301
      %v5527 = vpop.f32.mrb[0].mxu0
      %v5528 = vadd.f32 %v5204, %v5527
      %v5529 = vpop.f32.mrb[0].mxu0
      %5530 = vdwg.mxu0
      %v5531 = vld [vmem:[%s2359] sm:$0xff]
      %v5532 = vld [vmem:[%s2359 + $0x8] sm:$0xff]
      %v5533 = vld [vmem:[%s2359 + $0x10] sm:$0x3]
      %v5534 = vld [vmem:[%s2359 + $0x18] sm:$0xff]
      %v5535 = vld [vmem:[%s2359 + $0x20] sm:$0xff]
      %v5536 = vld [vmem:[%s2359 + $0x28] sm:$0x3]
      %v5537 = vld [vmem:[%s2359 + $0x30] sm:$0xff]
      %v5538 = vld [vmem:[%s2359 + $0x38] sm:$0xff]
      %v5539 = vld [vmem:[%s2359 + $0x40] sm:$0x3]
      %v5540 = vld [vmem:[%s2359 + $0x48] sm:$0xff]
      %v5541 = vld [vmem:[%s2359 + $0x50] sm:$0xff]
      %v5542 = vld [vmem:[%s2359 + $0x58] sm:$0x3]
      %v5543 = vld [vmem:[%s2359 + $0x60] sm:$0xff]
      %v5544 = vld [vmem:[%s2359 + $0x68] sm:$0xff]
      %v5545 = vld [vmem:[%s2359 + $0x70] sm:$0x3]
      %v5546 = vld [vmem:[%s2359 + $0x78] sm:$0xff]
      %v5547 = vld [vmem:[%s2359 + $0x80] sm:$0xff]
      %v5548 = vld [vmem:[%s2359 + $0x88] sm:$0x3]
      %v5549 = vld [vmem:[%s2359 + $0x90] sm:$0xff]
      %v5550 = vld [vmem:[%s2359 + $0x98] sm:$0xff]
      %v5551 = vld [vmem:[%s2359 + $0xa0] sm:$0x3]
      %v5552 = vld [vmem:[%s2359 + $0xa8] sm:$0xff]
      %v5553 = vld [vmem:[%s2359 + $0xb0] sm:$0xff]
      %v5554 = vld [vmem:[%s2359 + $0xb8] sm:$0x3]
      %v5555 = vld [vmem:[%s2359 + $0xc0] sm:$0xff]
      %v5556 = vld [vmem:[%s2359 + $0xc8] sm:$0xff]
      %v5557 = vld [vmem:[%s2359 + $0xd0] sm:$0x3]
      %v5558 = vld [vmem:[%s2359 + $0xd8] sm:$0xff]
      %v5559 = vld [vmem:[%s2359 + $0xe0] sm:$0xff]
      %v5560 = vld [vmem:[%s2359 + $0xe8] sm:$0x3]
      %v5561 = vld [vmem:[%s2359 + $0xf0] sm:$0xff]
      %v5562 = vld [vmem:[%s2359 + $0xf8] sm:$0xff]
      %v5563 = vld [vmem:[%s2359 + $0x100] sm:$0x3]
      %v5564 = vld [vmem:[%s2359 + $0x108] sm:$0xff]
      %v5565 = vld [vmem:[%s2359 + $0x110] sm:$0xff]
      %v5566 = vld [vmem:[%s2359 + $0x118] sm:$0x3]
      %v5567 = vld [vmem:[%s2359 + $0x120] sm:$0xff]
      %v5568 = vld [vmem:[%s2359 + $0x128] sm:$0xff]
      %v5569 = vld [vmem:[%s2359 + $0x130] sm:$0x3]
      %v5570 = vld [vmem:[%s2359 + $0x138] sm:$0xff]
      %v5571 = vld [vmem:[%s2359 + $0x140] sm:$0xff]
      %v5572 = vld [vmem:[%s2359 + $0x148] sm:$0x3]
      %v5573 = vld [vmem:[%s2359 + $0x150] sm:$0xff]
      %v5574 = vld [vmem:[%s2359 + $0x158] sm:$0xff]
      %v5575 = vld [vmem:[%s2359 + $0x160] sm:$0x3]
      %v5576 = vld [vmem:[%s2359 + $0x168] sm:$0xff]
      %v5577 = vld [vmem:[%s2359 + $0x170] sm:$0xff]
      %v5578 = vld [vmem:[%s2359 + $0x178] sm:$0x3]
      %v5627 = vrot.slane %v5531, 1
      %v5628 = vrot.slane %v5532, 1
      %v5629 = vsel %vm772, %v5627, %v5628
      %v5630 = vrot.slane %v5533, 1
      %v5631 = vsel %vm772, %v5628, %v5630
      %v5632 = vrot.slane %v5534, 1
      %v5633 = vrot.slane %v5535, 1
      %v5634 = vsel %vm772, %v5632, %v5633
      %v5635 = vrot.slane %v5536, 1
      %v5636 = vsel %vm772, %v5633, %v5635
      %v5637 = vrot.slane %v5537, 1
      %v5638 = vrot.slane %v5538, 1
      %v5639 = vsel %vm772, %v5637, %v5638
      %v5640 = vrot.slane %v5539, 1
      %v5641 = vsel %vm772, %v5638, %v5640
      %v5642 = vrot.slane %v5540, 1
      %v5643 = vrot.slane %v5541, 1
      %v5644 = vsel %vm772, %v5642, %v5643
      %v5645 = vrot.slane %v5542, 1
      %v5646 = vsel %vm772, %v5643, %v5645
      %v5647 = vrot.slane %v5543, 1
      %v5648 = vrot.slane %v5544, 1
      %v5649 = vsel %vm772, %v5647, %v5648
      %v5650 = vrot.slane %v5545, 1
      %v5651 = vsel %vm772, %v5648, %v5650
      %v5652 = vrot.slane %v5546, 1
      %v5653 = vrot.slane %v5547, 1
      %v5654 = vsel %vm772, %v5652, %v5653
      %v5655 = vrot.slane %v5548, 1
      %v5656 = vsel %vm772, %v5653, %v5655
      %v5657 = vrot.slane %v5549, 1
      %v5658 = vrot.slane %v5550, 1
      %v5659 = vsel %vm772, %v5657, %v5658
      %v5660 = vrot.slane %v5551, 1
      %v5661 = vsel %vm772, %v5658, %v5660
      %v5662 = vrot.slane %v5552, 1
      %v5663 = vrot.slane %v5553, 1
      %v5664 = vsel %vm772, %v5662, %v5663
      %v5665 = vrot.slane %v5554, 1
      %v5666 = vsel %vm772, %v5663, %v5665
      %v5667 = vrot.slane %v5555, 1
      %v5668 = vrot.slane %v5556, 1
      %v5669 = vsel %vm772, %v5667, %v5668
      %v5670 = vrot.slane %v5557, 1
      %v5671 = vsel %vm772, %v5668, %v5670
      %v5672 = vrot.slane %v5558, 1
      %v5673 = vrot.slane %v5559, 1
      %v5674 = vsel %vm772, %v5672, %v5673
      %v5675 = vrot.slane %v5560, 1
      %v5676 = vsel %vm772, %v5673, %v5675
      %v5677 = vrot.slane %v5561, 1
      %v5678 = vrot.slane %v5562, 1
      %v5679 = vsel %vm772, %v5677, %v5678
      %v5680 = vrot.slane %v5563, 1
      %v5681 = vsel %vm772, %v5678, %v5680
      %v5682 = vrot.slane %v5564, 1
      %v5683 = vrot.slane %v5565, 1
      %v5684 = vsel %vm772, %v5682, %v5683
      %v5685 = vrot.slane %v5566, 1
      %v5686 = vsel %vm772, %v5683, %v5685
      %v5687 = vrot.slane %v5567, 1
      %v5688 = vrot.slane %v5568, 1
      %v5689 = vsel %vm772, %v5687, %v5688
      %v5690 = vrot.slane %v5569, 1
      %v5691 = vsel %vm772, %v5688, %v5690
      %v5692 = vrot.slane %v5570, 1
      %v5693 = vrot.slane %v5571, 1
      %v5694 = vsel %vm772, %v5692, %v5693
      %v5695 = vrot.slane %v5572, 1
      %v5696 = vsel %vm772, %v5693, %v5695
      %v5697 = vrot.slane %v5573, 1
      %v5698 = vrot.slane %v5574, 1
      %v5699 = vsel %vm772, %v5697, %v5698
      %v5700 = vrot.slane %v5575, 1
      %v5701 = vsel %vm772, %v5698, %v5700
      %v5702 = vrot.slane %v5576, 1
      %v5703 = vrot.slane %v5577, 1
      %v5704 = vsel %vm772, %v5702, %v5703
      %v5705 = vrot.slane %v5578, 1
      %v5706 = vsel %vm772, %v5703, %v5705
      %5707 = vrot.lane.b32.xlu0 %v5629, 4
      %v5708 = vpop.permute.xlu0 %5707
      %5709 = vrot.lane.b32.xlu0 %v5631, 4
      %v5710 = vpop.permute.xlu0 %5709
      %5711 = vrot.lane.b32.xlu0 %v5634, 4
      %v5712 = vpop.permute.xlu0 %5711
      %5713 = vrot.lane.b32.xlu0 %v5636, 4
      %v5714 = vpop.permute.xlu0 %5713
      %5715 = vrot.lane.b32.xlu0 %v5639, 4
      %v5716 = vpop.permute.xlu0 %5715
      %5717 = vrot.lane.b32.xlu0 %v5641, 4
      %v5718 = vpop.permute.xlu0 %5717
      %5719 = vrot.lane.b32.xlu0 %v5644, 4
      %v5720 = vpop.permute.xlu0 %5719
      %5721 = vrot.lane.b32.xlu0 %v5646, 4
      %v5722 = vpop.permute.xlu0 %5721
      %5723 = vrot.lane.b32.xlu0 %v5649, 4
      %v5724 = vpop.permute.xlu0 %5723
      %5725 = vrot.lane.b32.xlu0 %v5651, 4
      %v5726 = vpop.permute.xlu0 %5725
      %5727 = vrot.lane.b32.xlu0 %v5654, 4
      %v5728 = vpop.permute.xlu0 %5727
      %5729 = vrot.lane.b32.xlu0 %v5656, 4
      %v5730 = vpop.permute.xlu0 %5729
      %5731 = vrot.lane.b32.xlu0 %v5659, 4
      %v5732 = vpop.permute.xlu0 %5731
      %5733 = vrot.lane.b32.xlu0 %v5661, 4
      %v5734 = vpop.permute.xlu0 %5733
      %5735 = vrot.lane.b32.xlu0 %v5664, 4
      %v5736 = vpop.permute.xlu0 %5735
      %5737 = vrot.lane.b32.xlu0 %v5666, 4
      %v5738 = vpop.permute.xlu0 %5737
      %5739 = vrot.lane.b32.xlu0 %v5669, 4
      %v5740 = vpop.permute.xlu0 %5739
      %5741 = vrot.lane.b32.xlu0 %v5671, 4
      %v5742 = vpop.permute.xlu0 %5741
      %5743 = vrot.lane.b32.xlu0 %v5674, 4
      %v5744 = vpop.permute.xlu0 %5743
      %5745 = vrot.lane.b32.xlu0 %v5676, 4
      %v5746 = vpop.permute.xlu0 %5745
      %5747 = vrot.lane.b32.xlu0 %v5679, 4
      %v5748 = vpop.permute.xlu0 %5747
      %5749 = vrot.lane.b32.xlu0 %v5681, 4
      %v5750 = vpop.permute.xlu0 %5749
      %5751 = vrot.lane.b32.xlu0 %v5684, 4
      %v5752 = vpop.permute.xlu0 %5751
      %5753 = vrot.lane.b32.xlu0 %v5686, 4
      %v5754 = vpop.permute.xlu0 %5753
      %5755 = vrot.lane.b32.xlu0 %v5689, 4
      %v5756 = vpop.permute.xlu0 %5755
      %5757 = vrot.lane.b32.xlu0 %v5691, 4
      %v5758 = vpop.permute.xlu0 %5757
      %5759 = vrot.lane.b32.xlu0 %v5694, 4
      %v5760 = vpop.permute.xlu0 %5759
      %5761 = vrot.lane.b32.xlu0 %v5696, 4
      %v5762 = vpop.permute.xlu0 %5761
      %5763 = vrot.lane.b32.xlu0 %v5699, 4
      %v5764 = vpop.permute.xlu0 %5763
      %5765 = vrot.lane.b32.xlu0 %v5701, 4
      %v5766 = vpop.permute.xlu0 %5765
      %5767 = vrot.lane.b32.xlu0 %v5704, 4
      %v5768 = vpop.permute.xlu0 %5767
      %5769 = vrot.lane.b32.xlu0 %v5706, 4
      %v5770 = vpop.permute.xlu0 %5769
      %v5803 = vrot.slane %v5531, 2
      %v5804 = vrot.slane %v5532, 2
      %v5805 = vsel %vm949, %v5803, %v5804
      %v5806 = vrot.slane %v5533, 2
      %v5807 = vsel %vm949, %v5804, %v5806
      %v5808 = vrot.slane %v5534, 2
      %v5809 = vrot.slane %v5535, 2
      %v5810 = vsel %vm949, %v5808, %v5809
      %v5811 = vrot.slane %v5536, 2
      %v5812 = vsel %vm949, %v5809, %v5811
      %v5813 = vrot.slane %v5537, 2
      %v5814 = vrot.slane %v5538, 2
      %v5815 = vsel %vm949, %v5813, %v5814
      %v5816 = vrot.slane %v5539, 2
      %v5817 = vsel %vm949, %v5814, %v5816
      %v5818 = vrot.slane %v5540, 2
      %v5819 = vrot.slane %v5541, 2
      %v5820 = vsel %vm949, %v5818, %v5819
      %v5821 = vrot.slane %v5542, 2
      %v5822 = vsel %vm949, %v5819, %v5821
      %v5823 = vrot.slane %v5543, 2
      %v5824 = vrot.slane %v5544, 2
      %v5825 = vsel %vm949, %v5823, %v5824
      %v5826 = vrot.slane %v5545, 2
      %v5827 = vsel %vm949, %v5824, %v5826
      %v5828 = vrot.slane %v5546, 2
      %v5829 = vrot.slane %v5547, 2
      %v5830 = vsel %vm949, %v5828, %v5829
      %v5831 = vrot.slane %v5548, 2
      %v5832 = vsel %vm949, %v5829, %v5831
      %v5833 = vrot.slane %v5549, 2
      %v5834 = vrot.slane %v5550, 2
      %v5835 = vsel %vm949, %v5833, %v5834
      %v5836 = vrot.slane %v5551, 2
      %v5837 = vsel %vm949, %v5834, %v5836
      %v5838 = vrot.slane %v5552, 2
      %v5839 = vrot.slane %v5553, 2
      %v5840 = vsel %vm949, %v5838, %v5839
      %v5841 = vrot.slane %v5554, 2
      %v5842 = vsel %vm949, %v5839, %v5841
      %v5843 = vrot.slane %v5555, 2
      %v5844 = vrot.slane %v5556, 2
      %v5845 = vsel %vm949, %v5843, %v5844
      %v5846 = vrot.slane %v5557, 2
      %v5847 = vsel %vm949, %v5844, %v5846
      %v5848 = vrot.slane %v5558, 2
      %v5849 = vrot.slane %v5559, 2
      %v5850 = vsel %vm949, %v5848, %v5849
      %v5851 = vrot.slane %v5560, 2
      %v5852 = vsel %vm949, %v5849, %v5851
      %v5853 = vrot.slane %v5561, 2
      %v5854 = vrot.slane %v5562, 2
      %v5855 = vsel %vm949, %v5853, %v5854
      %v5856 = vrot.slane %v5563, 2
      %v5857 = vsel %vm949, %v5854, %v5856
      %v5858 = vrot.slane %v5564, 2
      %v5859 = vrot.slane %v5565, 2
      %v5860 = vsel %vm949, %v5858, %v5859
      %v5861 = vrot.slane %v5566, 2
      %v5862 = vsel %vm949, %v5859, %v5861
      %v5863 = vrot.slane %v5567, 2
      %v5864 = vrot.slane %v5568, 2
      %v5865 = vsel %vm949, %v5863, %v5864
      %v5866 = vrot.slane %v5569, 2
      %v5867 = vsel %vm949, %v5864, %v5866
      %v5868 = vrot.slane %v5570, 2
      %v5869 = vrot.slane %v5571, 2
      %v5870 = vsel %vm949, %v5868, %v5869
      %v5871 = vrot.slane %v5572, 2
      %v5872 = vsel %vm949, %v5869, %v5871
      %v5873 = vrot.slane %v5573, 2
      %v5874 = vrot.slane %v5574, 2
      %v5875 = vsel %vm949, %v5873, %v5874
      %v5876 = vrot.slane %v5575, 2
      %v5877 = vsel %vm949, %v5874, %v5876
      %v5878 = vrot.slane %v5576, 2
      %v5879 = vrot.slane %v5577, 2
      %v5880 = vsel %vm949, %v5878, %v5879
      %v5881 = vrot.slane %v5578, 2
      %v5882 = vsel %vm949, %v5879, %v5881
      %5883 = vrot.lane.b32.xlu0 %v5805, 8
      %v5884 = vpop.permute.xlu0 %5883
      %5885 = vrot.lane.b32.xlu0 %v5807, 8
      %v5886 = vpop.permute.xlu0 %5885
      %5887 = vrot.lane.b32.xlu0 %v5810, 8
      %v5888 = vpop.permute.xlu0 %5887
      %5889 = vrot.lane.b32.xlu0 %v5812, 8
      %v5890 = vpop.permute.xlu0 %5889
      %5891 = vrot.lane.b32.xlu0 %v5815, 8
      %v5892 = vpop.permute.xlu0 %5891
      %5893 = vrot.lane.b32.xlu0 %v5817, 8
      %v5894 = vpop.permute.xlu0 %5893
      %5895 = vrot.lane.b32.xlu0 %v5820, 8
      %v5896 = vpop.permute.xlu0 %5895
      %5897 = vrot.lane.b32.xlu0 %v5822, 8
      %v5898 = vpop.permute.xlu0 %5897
      %5899 = vrot.lane.b32.xlu0 %v5825, 8
      %v5900 = vpop.permute.xlu0 %5899
      %5901 = vrot.lane.b32.xlu0 %v5827, 8
      %v5902 = vpop.permute.xlu0 %5901
      %5903 = vrot.lane.b32.xlu0 %v5830, 8
      %v5904 = vpop.permute.xlu0 %5903
      %5905 = vrot.lane.b32.xlu0 %v5832, 8
      %v5906 = vpop.permute.xlu0 %5905
      %5907 = vrot.lane.b32.xlu0 %v5835, 8
      %v5908 = vpop.permute.xlu0 %5907
      %5909 = vrot.lane.b32.xlu0 %v5837, 8
      %v5910 = vpop.permute.xlu0 %5909
      %5911 = vrot.lane.b32.xlu0 %v5840, 8
      %v5912 = vpop.permute.xlu0 %5911
      %5913 = vrot.lane.b32.xlu0 %v5842, 8
      %v5914 = vpop.permute.xlu0 %5913
      %5915 = vrot.lane.b32.xlu0 %v5845, 8
      %v5916 = vpop.permute.xlu0 %5915
      %5917 = vrot.lane.b32.xlu0 %v5847, 8
      %v5918 = vpop.permute.xlu0 %5917
      %5919 = vrot.lane.b32.xlu0 %v5850, 8
      %v5920 = vpop.permute.xlu0 %5919
      %5921 = vrot.lane.b32.xlu0 %v5852, 8
      %v5922 = vpop.permute.xlu0 %5921
      %5923 = vrot.lane.b32.xlu0 %v5855, 8
      %v5924 = vpop.permute.xlu0 %5923
      %5925 = vrot.lane.b32.xlu0 %v5857, 8
      %v5926 = vpop.permute.xlu0 %5925
      %5927 = vrot.lane.b32.xlu0 %v5860, 8
      %v5928 = vpop.permute.xlu0 %5927
      %5929 = vrot.lane.b32.xlu0 %v5862, 8
      %v5930 = vpop.permute.xlu0 %5929
      %5931 = vrot.lane.b32.xlu0 %v5865, 8
      %v5932 = vpop.permute.xlu0 %5931
      %5933 = vrot.lane.b32.xlu0 %v5867, 8
      %v5934 = vpop.permute.xlu0 %5933
      %5935 = vrot.lane.b32.xlu0 %v5870, 8
      %v5936 = vpop.permute.xlu0 %5935
      %5937 = vrot.lane.b32.xlu0 %v5872, 8
      %v5938 = vpop.permute.xlu0 %5937
      %5939 = vrot.lane.b32.xlu0 %v5875, 8
      %v5940 = vpop.permute.xlu0 %5939
      %5941 = vrot.lane.b32.xlu0 %v5877, 8
      %v5942 = vpop.permute.xlu0 %5941
      %5943 = vrot.lane.b32.xlu0 %v5880, 8
      %v5944 = vpop.permute.xlu0 %5943
      %5945 = vrot.lane.b32.xlu0 %v5882, 8
      %v5946 = vpop.permute.xlu0 %5945
      %v5979 = vsel %vm620, %v5531, %v5708
      %v5980 = vsel %vm620, %v5532, %v5710
      %v5981 = vsel %vm620, %v5534, %v5712
      %v5982 = vsel %vm620, %v5535, %v5714
      %v5983 = vsel %vm620, %v5537, %v5716
      %v5984 = vsel %vm620, %v5538, %v5718
      %v5985 = vsel %vm620, %v5540, %v5720
      %v5986 = vsel %vm620, %v5541, %v5722
      %v5987 = vsel %vm620, %v5543, %v5724
      %v5988 = vsel %vm620, %v5544, %v5726
      %v5989 = vsel %vm620, %v5546, %v5728
      %v5990 = vsel %vm620, %v5547, %v5730
      %v5991 = vsel %vm620, %v5549, %v5732
      %v5992 = vsel %vm620, %v5550, %v5734
      %v5993 = vsel %vm620, %v5552, %v5736
      %v5994 = vsel %vm620, %v5553, %v5738
      %v5995 = vsel %vm620, %v5555, %v5740
      %v5996 = vsel %vm620, %v5556, %v5742
      %v5997 = vsel %vm620, %v5558, %v5744
      %v5998 = vsel %vm620, %v5559, %v5746
      %v5999 = vsel %vm620, %v5561, %v5748
      %v6000 = vsel %vm620, %v5562, %v5750
      %v6001 = vsel %vm620, %v5564, %v5752
      %v6002 = vsel %vm620, %v5565, %v5754
      %v6003 = vsel %vm620, %v5567, %v5756
      %v6004 = vsel %vm620, %v5568, %v5758
      %v6005 = vsel %vm620, %v5570, %v5760
      %v6006 = vsel %vm620, %v5571, %v5762
      %v6007 = vsel %vm620, %v5573, %v5764
      %v6008 = vsel %vm620, %v5574, %v5766
      %v6009 = vsel %vm620, %v5576, %v5768
      %v6010 = vsel %vm620, %v5577, %v5770
      %v6011 = vsel %vm1158, %v5979, %v5884
      %v6012 = vsel %vm1158, %v5980, %v5886
      %v6013 = vsel %vm1158, %v5981, %v5888
      %v6014 = vsel %vm1158, %v5982, %v5890
      %v6015 = vsel %vm1158, %v5983, %v5892
      %v6016 = vsel %vm1158, %v5984, %v5894
      %v6017 = vsel %vm1158, %v5985, %v5896
      %v6018 = vsel %vm1158, %v5986, %v5898
      %v6019 = vsel %vm1158, %v5987, %v5900
      %v6020 = vsel %vm1158, %v5988, %v5902
      %v6021 = vsel %vm1158, %v5989, %v5904
      %v6022 = vsel %vm1158, %v5990, %v5906
      %v6023 = vsel %vm1158, %v5991, %v5908
      %v6024 = vsel %vm1158, %v5992, %v5910
      %v6025 = vsel %vm1158, %v5993, %v5912
      %v6026 = vsel %vm1158, %v5994, %v5914
      %v6027 = vsel %vm1158, %v5995, %v5916
      %v6028 = vsel %vm1158, %v5996, %v5918
      %v6029 = vsel %vm1158, %v5997, %v5920
      %v6030 = vsel %vm1158, %v5998, %v5922
      %v6031 = vsel %vm1158, %v5999, %v5924
      %v6032 = vsel %vm1158, %v6000, %v5926
      %v6033 = vsel %vm1158, %v6001, %v5928
      %v6034 = vsel %vm1158, %v6002, %v5930
      %v6035 = vsel %vm1158, %v6003, %v5932
      %v6036 = vsel %vm1158, %v6004, %v5934
      %v6037 = vsel %vm1158, %v6005, %v5936
      %v6038 = vsel %vm1158, %v6006, %v5938
      %v6039 = vsel %vm1158, %v6007, %v5940
      %v6040 = vsel %vm1158, %v6008, %v5942
      %v6041 = vsel %vm1158, %v6009, %v5944
      %v6042 = vsel %vm1158, %v6010, %v5946
      %s6043 = scalar_lea.vmem %s4, 32
      %v6044 = vld [vmem:[%s6043] sm:$0xff]
      %v6045 = vld [vmem:[%s6043 + $0x8] sm:$0xf]
      %v6047 = vsel %vm1709, %v6011, 0
      %v6050 = vsel %vm1709, %v6012, 0
      %v6053 = vsel %vm1709, %v6013, 0
      %v6056 = vsel %vm1709, %v6014, 0
      %v6059 = vsel %vm1709, %v6015, 0
      %v6062 = vsel %vm1709, %v6016, 0
      %v6065 = vsel %vm1709, %v6017, 0
      %v6068 = vsel %vm1709, %v6018, 0
      %v6071 = vsel %vm1709, %v6019, 0
      %v6074 = vsel %vm1709, %v6020, 0
      %v6077 = vsel %vm1709, %v6021, 0
      %v6080 = vsel %vm1709, %v6022, 0
      %v6083 = vsel %vm1709, %v6023, 0
      %v6086 = vsel %vm1709, %v6024, 0
      %v6089 = vsel %vm1709, %v6025, 0
      %v6092 = vsel %vm1709, %v6026, 0
      %v6095 = vsel %vm1709, %v6027, 0
      %v6098 = vsel %vm1709, %v6028, 0
      %v6101 = vsel %vm1709, %v6029, 0
      %v6104 = vsel %vm1709, %v6030, 0
      %v6107 = vsel %vm1709, %v6031, 0
      %v6110 = vsel %vm1709, %v6032, 0
      %v6113 = vsel %vm1709, %v6033, 0
      %v6116 = vsel %vm1709, %v6034, 0
      %v6119 = vsel %vm1709, %v6035, 0
      %v6122 = vsel %vm1709, %v6036, 0
      %v6125 = vsel %vm1709, %v6037, 0
      %v6128 = vsel %vm1709, %v6038, 0
      %v6131 = vsel %vm1709, %v6039, 0
      %v6134 = vsel %vm1709, %v6040, 0
      %v6137 = vsel %vm1709, %v6041, 0
      %v6140 = vsel %vm1709, %v6042, 0
      %v6143 = vsel %vm1806, %v6045, 0
      %6145 = vmatprep.subr.mxu0 0.0
      %6146 = vmatpush1.msra.mxu0 %v6044
      %6147 = vmatprep.subr.mxu0 0.0
      %6148 = vmatpush1.msra.mxu0 %v6143
      %6149 = vmatprep.subr.mxu0 0.0
      %6150 = vmatpush1.msra.mxu0 0.0
      %6151 = vmatprep.subr.mxu0 0.0
      %6152 = vmatpush1.msra.mxu0 0.0
      %6153 = vmatprep.subr.mxu0 0.0
      %6154 = vmatpush1.msra.mxu0 0.0
      %6155 = vmatprep.subr.mxu0 0.0
      %6156 = vmatpush1.msra.mxu0 0.0
      %6157 = vmatprep.subr.mxu0 0.0
      %6158 = vmatpush1.msra.mxu0 0.0
      %6159 = vmatprep.subr.mxu0 0.0
      %6160 = vmatpush1.msra.mxu0 0.0
      %6161 = vmatprep.subr.mxu0 0.0
      %6162 = vmatpush1.msra.mxu0 0.0
      %6163 = vmatprep.subr.mxu0 0.0
      %6164 = vmatpush1.msra.mxu0 0.0
      %6165 = vmatprep.subr.mxu0 0.0
      %6166 = vmatpush1.msra.mxu0 0.0
      %6167 = vmatprep.subr.mxu0 0.0
      %6168 = vmatpush1.msra.mxu0 0.0
      %6169 = vmatprep.subr.mxu0 0.0
      %6170 = vmatpush1.msra.mxu0 0.0
      %6171 = vmatprep.subr.mxu0 0.0
      %6172 = vmatpush1.msra.mxu0 0.0
      %6173 = vmatprep.subr.mxu0 0.0
      %6174 = vmatpush1.msra.mxu0 0.0
      %6175 = vmatprep.subr.mxu0 0.0
      %6176 = vmatpush1.msra.mxu0 0.0
      %6177 = vmatprep.subr.mxu0 0.0
      %6178 = vmatpush1.msra.mxu0 0.0
      %6179 = vmatprep.subr.mxu0 0.0
      %6180 = vmatpush1.msra.mxu0 0.0
      %6181 = vmatprep.subr.mxu0 0.0
      %6182 = vmatpush1.msra.mxu0 0.0
      %6183 = vmatprep.subr.mxu0 0.0
      %6184 = vmatpush1.msra.mxu0 0.0
      %6185 = vmatprep.subr.mxu0 0.0
      %6186 = vmatpush1.msra.mxu0 0.0
      %6187 = vmatprep.subr.mxu0 0.0
      %6188 = vmatpush1.msra.mxu0 0.0
      %6189 = vmatprep.subr.mxu0 0.0
      %6190 = vmatpush1.msra.mxu0 0.0
      %6191 = vmatprep.subr.mxu0 0.0
      %6192 = vmatpush1.msra.mxu0 0.0
      %6193 = vmatprep.subr.mxu0 0.0
      %6194 = vmatpush1.msra.mxu0 0.0
      %6195 = vmatprep.subr.mxu0 0.0
      %6196 = vmatpush1.msra.mxu0 0.0
      %6197 = vmatprep.subr.mxu0 0.0
      %6198 = vmatpush1.msra.mxu0 0.0
      %6199 = vmatprep.subr.mxu0 0.0
      %6200 = vmatpush1.msra.mxu0 0.0
      %6201 = vmatprep.subr.mxu0 0.0
      %6202 = vmatpush1.msra.mxu0 0.0
      %6203 = vmatprep.subr.mxu0 0.0
      %6204 = vmatpush1.msra.mxu0 0.0
      %6205 = vmatprep.subr.mxu0 0.0
      %6206 = vmatpush1.msra.mxu0 0.0
      %6207 = vmatprep.subr.mxu0 0.0
      %6208 = vmatpush1.msra.mxu0 0.0
      %6209 = vmatprep.mubr.f32.mxu0 0.0
      %6210 = vmatmul.mubr.f32.gmra.mrb[0].mxu0 %v6047
      %v6211 = vpop.f32.mrb[0].mxu0
      %v6212 = vadd.f32 0.0, %v6211
      %v6213 = vpop.f32.mrb[0].mxu0
      %6214 = vmatprep.mubr.f32.mxu0 0.0
      %6215 = vmatmul.mubr.f32.gmra.mrb[0].mxu0 %v6050
      %v6216 = vpop.f32.mrb[0].mxu0
      %v6217 = vadd.f32 0.0, %v6216
      %v6218 = vpop.f32.mrb[0].mxu0
      %6219 = vmatprep.mubr.f32.mxu0 0.0
      %6220 = vmatmul.mubr.f32.gmra.mrb[0].mxu0 %v6053
      %v6221 = vpop.f32.mrb[0].mxu0
      %v6222 = vadd.f32 0.0, %v6221
      %v6223 = vpop.f32.mrb[0].mxu0
      %6224 = vmatprep.mubr.f32.mxu0 0.0
      %6225 = vmatmul.mubr.f32.gmra.mrb[0].mxu0 %v6056
      %v6226 = vpop.f32.mrb[0].mxu0
      %v6227 = vadd.f32 0.0, %v6226
      %v6228 = vpop.f32.mrb[0].mxu0
      %6229 = vmatprep.mubr.f32.mxu0 0.0
      %6230 = vmatmul.mubr.f32.gmra.mrb[0].mxu0 %v6059
      %v6231 = vpop.f32.mrb[0].mxu0
      %v6232 = vadd.f32 0.0, %v6231
      %v6233 = vpop.f32.mrb[0].mxu0
      %6234 = vmatprep.mubr.f32.mxu0 0.0
      %6235 = vmatmul.mubr.f32.gmra.mrb[0].mxu0 %v6062
      %v6236 = vpop.f32.mrb[0].mxu0
      %v6237 = vadd.f32 0.0, %v6236
      %v6238 = vpop.f32.mrb[0].mxu0
      %6239 = vmatprep.mubr.f32.mxu0 0.0
      %6240 = vmatmul.mubr.f32.gmra.mrb[0].mxu0 %v6065
      %v6241 = vpop.f32.mrb[0].mxu0
      %v6242 = vadd.f32 0.0, %v6241
      %v6243 = vpop.f32.mrb[0].mxu0
      %6244 = vmatprep.mubr.f32.mxu0 0.0
      %6245 = vmatmul.mubr.f32.gmra.mrb[0].mxu0 %v6068
      %v6246 = vpop.f32.mrb[0].mxu0
      %v6247 = vadd.f32 0.0, %v6246
      %v6248 = vpop.f32.mrb[0].mxu0
      %6249 = vmatprep.mubr.f32.mxu0 0.0
      %6250 = vmatmul.mubr.f32.gmra.mrb[0].mxu0 %v6071
      %v6251 = vpop.f32.mrb[0].mxu0
      %v6252 = vadd.f32 0.0, %v6251
      %v6253 = vpop.f32.mrb[0].mxu0
      %6254 = vmatprep.mubr.f32.mxu0 0.0
      %6255 = vmatmul.mubr.f32.gmra.mrb[0].mxu0 %v6074
      %v6256 = vpop.f32.mrb[0].mxu0
      %v6257 = vadd.f32 0.0, %v6256
      %v6258 = vpop.f32.mrb[0].mxu0
      %6259 = vmatprep.mubr.f32.mxu0 0.0
      %6260 = vmatmul.mubr.f32.gmra.mrb[0].mxu0 %v6077
      %v6261 = vpop.f32.mrb[0].mxu0
      %v6262 = vadd.f32 0.0, %v6261
      %v6263 = vpop.f32.mrb[0].mxu0
      %6264 = vmatprep.mubr.f32.mxu0 0.0
      %6265 = vmatmul.mubr.f32.gmra.mrb[0].mxu0 %v6080
      %v6266 = vpop.f32.mrb[0].mxu0
      %v6267 = vadd.f32 0.0, %v6266
      %v6268 = vpop.f32.mrb[0].mxu0
      %6269 = vmatprep.mubr.f32.mxu0 0.0
      %6270 = vmatmul.mubr.f32.gmra.mrb[0].mxu0 %v6083
      %v6271 = vpop.f32.mrb[0].mxu0
      %v6272 = vadd.f32 0.0, %v6271
      %v6273 = vpop.f32.mrb[0].mxu0
      %6274 = vmatprep.mubr.f32.mxu0 0.0
      %6275 = vmatmul.mubr.f32.gmra.mrb[0].mxu0 %v6086
      %v6276 = vpop.f32.mrb[0].mxu0
      %v6277 = vadd.f32 0.0, %v6276
      %v6278 = vpop.f32.mrb[0].mxu0
      %6279 = vmatprep.mubr.f32.mxu0 0.0
      %6280 = vmatmul.mubr.f32.gmra.mrb[0].mxu0 %v6089
      %v6281 = vpop.f32.mrb[0].mxu0
      %v6282 = vadd.f32 0.0, %v6281
      %v6283 = vpop.f32.mrb[0].mxu0
      %6284 = vmatprep.mubr.f32.mxu0 0.0
      %6285 = vmatmul.mubr.f32.gmra.mrb[0].mxu0 %v6092
      %v6286 = vpop.f32.mrb[0].mxu0
      %v6287 = vadd.f32 0.0, %v6286
      %v6288 = vpop.f32.mrb[0].mxu0
      %6289 = vmatprep.mubr.f32.mxu0 0.0
      %6290 = vmatmul.mubr.f32.gmra.mrb[0].mxu0 %v6095
      %v6291 = vpop.f32.mrb[0].mxu0
      %v6292 = vadd.f32 0.0, %v6291
      %v6293 = vpop.f32.mrb[0].mxu0
      %6294 = vmatprep.mubr.f32.mxu0 0.0
      %6295 = vmatmul.mubr.f32.gmra.mrb[0].mxu0 %v6098
      %v6296 = vpop.f32.mrb[0].mxu0
      %v6297 = vadd.f32 0.0, %v6296
      %v6298 = vpop.f32.mrb[0].mxu0
      %6299 = vmatprep.mubr.f32.mxu0 0.0
      %6300 = vmatmul.mubr.f32.gmra.mrb[0].mxu0 %v6101
      %v6301 = vpop.f32.mrb[0].mxu0
      %v6302 = vadd.f32 0.0, %v6301
      %v6303 = vpop.f32.mrb[0].mxu0
      %6304 = vmatprep.mubr.f32.mxu0 0.0
      %6305 = vmatmul.mubr.f32.gmra.mrb[0].mxu0 %v6104
      %v6306 = vpop.f32.mrb[0].mxu0
      %v6307 = vadd.f32 0.0, %v6306
      %v6308 = vpop.f32.mrb[0].mxu0
      %6309 = vmatprep.mubr.f32.mxu0 0.0
      %6310 = vmatmul.mubr.f32.gmra.mrb[0].mxu0 %v6107
      %v6311 = vpop.f32.mrb[0].mxu0
      %v6312 = vadd.f32 0.0, %v6311
      %v6313 = vpop.f32.mrb[0].mxu0
      %6314 = vmatprep.mubr.f32.mxu0 0.0
      %6315 = vmatmul.mubr.f32.gmra.mrb[0].mxu0 %v6110
      %v6316 = vpop.f32.mrb[0].mxu0
      %v6317 = vadd.f32 0.0, %v6316
      %v6318 = vpop.f32.mrb[0].mxu0
      %6319 = vmatprep.mubr.f32.mxu0 0.0
      %6320 = vmatmul.mubr.f32.gmra.mrb[0].mxu0 %v6113
      %v6321 = vpop.f32.mrb[0].mxu0
      %v6322 = vadd.f32 0.0, %v6321
      %v6323 = vpop.f32.mrb[0].mxu0
      %6324 = vmatprep.mubr.f32.mxu0 0.0
      %6325 = vmatmul.mubr.f32.gmra.mrb[0].mxu0 %v6116
      %v6326 = vpop.f32.mrb[0].mxu0
      %v6327 = vadd.f32 0.0, %v6326
      %v6328 = vpop.f32.mrb[0].mxu0
      %6329 = vmatprep.mubr.f32.mxu0 0.0
      %6330 = vmatmul.mubr.f32.gmra.mrb[0].mxu0 %v6119
      %v6331 = vpop.f32.mrb[0].mxu0
      %v6332 = vadd.f32 0.0, %v6331
      %v6333 = vpop.f32.mrb[0].mxu0
      %6334 = vmatprep.mubr.f32.mxu0 0.0
      %6335 = vmatmul.mubr.f32.gmra.mrb[0].mxu0 %v6122
      %v6336 = vpop.f32.mrb[0].mxu0
      %v6337 = vadd.f32 0.0, %v6336
      %v6338 = vpop.f32.mrb[0].mxu0
      %6339 = vmatprep.mubr.f32.mxu0 0.0
      %6340 = vmatmul.mubr.f32.gmra.mrb[0].mxu0 %v6125
      %v6341 = vpop.f32.mrb[0].mxu0
      %v6342 = vadd.f32 0.0, %v6341
      %v6343 = vpop.f32.mrb[0].mxu0
      %6344 = vmatprep.mubr.f32.mxu0 0.0
      %6345 = vmatmul.mubr.f32.gmra.mrb[0].mxu0 %v6128
      %v6346 = vpop.f32.mrb[0].mxu0
      %v6347 = vadd.f32 0.0, %v6346
      %v6348 = vpop.f32.mrb[0].mxu0
      %6349 = vmatprep.mubr.f32.mxu0 0.0
      %6350 = vmatmul.mubr.f32.gmra.mrb[0].mxu0 %v6131
      %v6351 = vpop.f32.mrb[0].mxu0
      %v6352 = vadd.f32 0.0, %v6351
      %v6353 = vpop.f32.mrb[0].mxu0
      %6354 = vmatprep.mubr.f32.mxu0 0.0
      %6355 = vmatmul.mubr.f32.gmra.mrb[0].mxu0 %v6134
      %v6356 = vpop.f32.mrb[0].mxu0
      %v6357 = vadd.f32 0.0, %v6356
      %v6358 = vpop.f32.mrb[0].mxu0
      %6359 = vmatprep.mubr.f32.mxu0 0.0
      %6360 = vmatmul.mubr.f32.gmra.mrb[0].mxu0 %v6137
      %v6361 = vpop.f32.mrb[0].mxu0
      %v6362 = vadd.f32 0.0, %v6361
      %v6363 = vpop.f32.mrb[0].mxu0
      %6364 = vmatprep.mubr.f32.mxu0 0.0
      %6365 = vmatmul.mubr.f32.gmra.mrb[0].mxu0 %v6140
      %v6366 = vpop.f32.mrb[0].mxu0
      %v6367 = vadd.f32 0.0, %v6366
      %v6368 = vpop.f32.mrb[0].mxu0
      %6369 = vdwg.mxu0
      %v6370 = vadd.f32 %v5373, %v6212
      %v6371 = vadd.f32 %v5378, %v6217
      %v6372 = vadd.f32 %v5383, %v6222
      %v6373 = vadd.f32 %v5388, %v6227
      %v6374 = vadd.f32 %v5393, %v6232
      %v6375 = vadd.f32 %v5398, %v6237
      %v6376 = vadd.f32 %v5403, %v6242
      %v6377 = vadd.f32 %v5408, %v6247
      %v6378 = vadd.f32 %v5413, %v6252
      %v6379 = vadd.f32 %v5418, %v6257
      %v6380 = vadd.f32 %v5423, %v6262
      %v6381 = vadd.f32 %v5428, %v6267
      %v6382 = vadd.f32 %v5433, %v6272
      %v6383 = vadd.f32 %v5438, %v6277
      %v6384 = vadd.f32 %v5443, %v6282
      %v6385 = vadd.f32 %v5448, %v6287
      %v6386 = vadd.f32 %v5453, %v6292
      %v6387 = vadd.f32 %v5458, %v6297
      %v6388 = vadd.f32 %v5463, %v6302
      %v6389 = vadd.f32 %v5468, %v6307
      %v6390 = vadd.f32 %v5473, %v6312
      %v6391 = vadd.f32 %v5478, %v6317
      %v6392 = vadd.f32 %v5483, %v6322
      %v6393 = vadd.f32 %v5488, %v6327
      %v6394 = vadd.f32 %v5493, %v6332
      %v6395 = vadd.f32 %v5498, %v6337
      %v6396 = vadd.f32 %v5503, %v6342
      %v6397 = vadd.f32 %v5508, %v6347
      %v6398 = vadd.f32 %v5513, %v6352
      %v6399 = vadd.f32 %v5518, %v6357
      %v6400 = vadd.f32 %v5523, %v6362
      %v6401 = vadd.f32 %v5528, %v6367
      %v6402 = vld [vmem:[%s5] sm:$0x1]
      %v6403 = vld [vmem:[%s6] sm:$0x1]
      %v6404 = vsel %vm620, %v6370, 0.0
      %v6405 = vsel %vm620, %v6371, 0.0
      %v6406 = vadd.f32 %v6404, %v6405
      %v6407 = vsel %vm620, %v6372, 0.0
      %v6408 = vadd.f32 %v6406, %v6407
      %v6409 = vsel %vm620, %v6373, 0.0
      %v6410 = vadd.f32 %v6408, %v6409
      %v6411 = vsel %vm620, %v6374, 0.0
      %v6412 = vadd.f32 %v6410, %v6411
      %v6413 = vsel %vm620, %v6375, 0.0
      %v6414 = vadd.f32 %v6412, %v6413
      %v6415 = vsel %vm620, %v6376, 0.0
      %v6416 = vadd.f32 %v6414, %v6415
      %v6417 = vsel %vm620, %v6377, 0.0
      %v6418 = vadd.f32 %v6416, %v6417
      %v6419 = vsel %vm620, %v6378, 0.0
      %v6420 = vadd.f32 %v6418, %v6419
      %v6421 = vsel %vm620, %v6379, 0.0
      %v6422 = vadd.f32 %v6420, %v6421
      %v6423 = vsel %vm620, %v6380, 0.0
      %v6424 = vadd.f32 %v6422, %v6423
      %v6425 = vsel %vm620, %v6381, 0.0
      %v6426 = vadd.f32 %v6424, %v6425
      %v6427 = vsel %vm620, %v6382, 0.0
      %v6428 = vadd.f32 %v6426, %v6427
      %v6429 = vsel %vm620, %v6383, 0.0
      %v6430 = vadd.f32 %v6428, %v6429
      %v6431 = vsel %vm620, %v6384, 0.0
      %v6432 = vadd.f32 %v6430, %v6431
      %v6433 = vsel %vm620, %v6385, 0.0
      %v6434 = vadd.f32 %v6432, %v6433
      %v6435 = vsel %vm620, %v6386, 0.0
      %v6436 = vadd.f32 %v6434, %v6435
      %v6437 = vsel %vm620, %v6387, 0.0
      %v6438 = vadd.f32 %v6436, %v6437
      %v6439 = vsel %vm620, %v6388, 0.0
      %v6440 = vadd.f32 %v6438, %v6439
      %v6441 = vsel %vm620, %v6389, 0.0
      %v6442 = vadd.f32 %v6440, %v6441
      %v6443 = vsel %vm620, %v6390, 0.0
      %v6444 = vadd.f32 %v6442, %v6443
      %v6445 = vsel %vm620, %v6391, 0.0
      %v6446 = vadd.f32 %v6444, %v6445
      %v6447 = vsel %vm620, %v6392, 0.0
      %v6448 = vadd.f32 %v6446, %v6447
      %v6449 = vsel %vm620, %v6393, 0.0
      %v6450 = vadd.f32 %v6448, %v6449
      %v6451 = vsel %vm620, %v6394, 0.0
      %v6452 = vadd.f32 %v6450, %v6451
      %v6453 = vsel %vm620, %v6395, 0.0
      %v6454 = vadd.f32 %v6452, %v6453
      %v6455 = vsel %vm620, %v6396, 0.0
      %v6456 = vadd.f32 %v6454, %v6455
      %v6457 = vsel %vm620, %v6397, 0.0
      %v6458 = vadd.f32 %v6456, %v6457
      %v6459 = vsel %vm620, %v6398, 0.0
      %v6460 = vadd.f32 %v6458, %v6459
      %v6461 = vsel %vm620, %v6399, 0.0
      %v6462 = vadd.f32 %v6460, %v6461
      %v6463 = vsel %vm620, %v6400, 0.0
      %v6464 = vadd.f32 %v6462, %v6463
      %v6465 = vsel %vm620, %v6401, 0.0
      %v6466 = vadd.f32 %v6464, %v6465
      %v6467 = vrot.slane %v6466, 4
      %v6468 = vadd.f32 %v6466, %v6467
      %v6469 = vrot.slane %v6468, 2
      %v6470 = vadd.f32 %v6468, %v6469
      %v6471 = vrot.slane %v6470, 1
      %v6472 = vadd.f32 %v6470, %v6471
      %v6473 = vmul.f32 %v6472, %v3302
      %v6474 = vsub.f32 %v6370, %v6473
      %v6475 = vsub.f32 %v6371, %v6473
      %v6476 = vsub.f32 %v6372, %v6473
      %v6477 = vsub.f32 %v6373, %v6473
      %v6478 = vsub.f32 %v6374, %v6473
      %v6479 = vsub.f32 %v6375, %v6473
      %v6480 = vsub.f32 %v6376, %v6473
      %v6481 = vsub.f32 %v6377, %v6473
      %v6482 = vsub.f32 %v6378, %v6473
      %v6483 = vsub.f32 %v6379, %v6473
      %v6484 = vsub.f32 %v6380, %v6473
      %v6485 = vsub.f32 %v6381, %v6473
      %v6486 = vsub.f32 %v6382, %v6473
      %v6487 = vsub.f32 %v6383, %v6473
      %v6488 = vsub.f32 %v6384, %v6473
      %v6489 = vsub.f32 %v6385, %v6473
      %v6490 = vsub.f32 %v6386, %v6473
      %v6491 = vsub.f32 %v6387, %v6473
      %v6492 = vsub.f32 %v6388, %v6473
      %v6493 = vsub.f32 %v6389, %v6473
      %v6494 = vsub.f32 %v6390, %v6473
      %v6495 = vsub.f32 %v6391, %v6473
      %v6496 = vsub.f32 %v6392, %v6473
      %v6497 = vsub.f32 %v6393, %v6473
      %v6498 = vsub.f32 %v6394, %v6473
      %v6499 = vsub.f32 %v6395, %v6473
      %v6500 = vsub.f32 %v6396, %v6473
      %v6501 = vsub.f32 %v6397, %v6473
      %v6502 = vsub.f32 %v6398, %v6473
      %v6503 = vsub.f32 %v6399, %v6473
      %v6504 = vsub.f32 %v6400, %v6473
      %v6505 = vsub.f32 %v6401, %v6473
      %v6506 = vmul.f32 %v6474, %v6474
      %v6507 = vmul.f32 %v6475, %v6475
      %v6508 = vmul.f32 %v6476, %v6476
      %v6509 = vmul.f32 %v6477, %v6477
      %v6510 = vmul.f32 %v6478, %v6478
      %v6511 = vmul.f32 %v6479, %v6479
      %v6512 = vmul.f32 %v6480, %v6480
      %v6513 = vmul.f32 %v6481, %v6481
      %v6514 = vmul.f32 %v6482, %v6482
      %v6515 = vmul.f32 %v6483, %v6483
      %v6516 = vmul.f32 %v6484, %v6484
      %v6517 = vmul.f32 %v6485, %v6485
      %v6518 = vmul.f32 %v6486, %v6486
      %v6519 = vmul.f32 %v6487, %v6487
      %v6520 = vmul.f32 %v6488, %v6488
      %v6521 = vmul.f32 %v6489, %v6489
      %v6522 = vmul.f32 %v6490, %v6490
      %v6523 = vmul.f32 %v6491, %v6491
      %v6524 = vmul.f32 %v6492, %v6492
      %v6525 = vmul.f32 %v6493, %v6493
      %v6526 = vmul.f32 %v6494, %v6494
      %v6527 = vmul.f32 %v6495, %v6495
      %v6528 = vmul.f32 %v6496, %v6496
      %v6529 = vmul.f32 %v6497, %v6497
      %v6530 = vmul.f32 %v6498, %v6498
      %v6531 = vmul.f32 %v6499, %v6499
      %v6532 = vmul.f32 %v6500, %v6500
      %v6533 = vmul.f32 %v6501, %v6501
      %v6534 = vmul.f32 %v6502, %v6502
      %v6535 = vmul.f32 %v6503, %v6503
      %v6536 = vmul.f32 %v6504, %v6504
      %v6537 = vmul.f32 %v6505, %v6505
      %v6538 = vsel %vm620, %v6506, 0.0
      %v6539 = vsel %vm620, %v6507, 0.0
      %v6540 = vadd.f32 %v6538, %v6539
      %v6541 = vsel %vm620, %v6508, 0.0
      %v6542 = vadd.f32 %v6540, %v6541
      %v6543 = vsel %vm620, %v6509, 0.0
      %v6544 = vadd.f32 %v6542, %v6543
      %v6545 = vsel %vm620, %v6510, 0.0
      %v6546 = vadd.f32 %v6544, %v6545
      %v6547 = vsel %vm620, %v6511, 0.0
      %v6548 = vadd.f32 %v6546, %v6547
      %v6549 = vsel %vm620, %v6512, 0.0
      %v6550 = vadd.f32 %v6548, %v6549
      %v6551 = vsel %vm620, %v6513, 0.0
      %v6552 = vadd.f32 %v6550, %v6551
      %v6553 = vsel %vm620, %v6514, 0.0
      %v6554 = vadd.f32 %v6552, %v6553
      %v6555 = vsel %vm620, %v6515, 0.0
      %v6556 = vadd.f32 %v6554, %v6555
      %v6557 = vsel %vm620, %v6516, 0.0
      %v6558 = vadd.f32 %v6556, %v6557
      %v6559 = vsel %vm620, %v6517, 0.0
      %v6560 = vadd.f32 %v6558, %v6559
      %v6561 = vsel %vm620, %v6518, 0.0
      %v6562 = vadd.f32 %v6560, %v6561
      %v6563 = vsel %vm620, %v6519, 0.0
      %v6564 = vadd.f32 %v6562, %v6563
      %v6565 = vsel %vm620, %v6520, 0.0
      %v6566 = vadd.f32 %v6564, %v6565
      %v6567 = vsel %vm620, %v6521, 0.0
      %v6568 = vadd.f32 %v6566, %v6567
      %v6569 = vsel %vm620, %v6522, 0.0
      %v6570 = vadd.f32 %v6568, %v6569
      %v6571 = vsel %vm620, %v6523, 0.0
      %v6572 = vadd.f32 %v6570, %v6571
      %v6573 = vsel %vm620, %v6524, 0.0
      %v6574 = vadd.f32 %v6572, %v6573
      %v6575 = vsel %vm620, %v6525, 0.0
      %v6576 = vadd.f32 %v6574, %v6575
      %v6577 = vsel %vm620, %v6526, 0.0
      %v6578 = vadd.f32 %v6576, %v6577
      %v6579 = vsel %vm620, %v6527, 0.0
      %v6580 = vadd.f32 %v6578, %v6579
      %v6581 = vsel %vm620, %v6528, 0.0
      %v6582 = vadd.f32 %v6580, %v6581
      %v6583 = vsel %vm620, %v6529, 0.0
      %v6584 = vadd.f32 %v6582, %v6583
      %v6585 = vsel %vm620, %v6530, 0.0
      %v6586 = vadd.f32 %v6584, %v6585
      %v6587 = vsel %vm620, %v6531, 0.0
      %v6588 = vadd.f32 %v6586, %v6587
      %v6589 = vsel %vm620, %v6532, 0.0
      %v6590 = vadd.f32 %v6588, %v6589
      %v6591 = vsel %vm620, %v6533, 0.0
      %v6592 = vadd.f32 %v6590, %v6591
      %v6593 = vsel %vm620, %v6534, 0.0
      %v6594 = vadd.f32 %v6592, %v6593
      %v6595 = vsel %vm620, %v6535, 0.0
      %v6596 = vadd.f32 %v6594, %v6595
      %v6597 = vsel %vm620, %v6536, 0.0
      %v6598 = vadd.f32 %v6596, %v6597
      %v6599 = vsel %vm620, %v6537, 0.0
      %v6600 = vadd.f32 %v6598, %v6599
      %v6601 = vrot.slane %v6600, 4
      %v6602 = vadd.f32 %v6600, %v6601
      %v6603 = vrot.slane %v6602, 2
      %v6604 = vadd.f32 %v6602, %v6603
      %v6605 = vrot.slane %v6604, 1
      %v6606 = vadd.f32 %v6604, %v6605
      %v6607 = vmul.f32 %v6606, 0.003921569
      %v6608 = vadd.f32 %v6607, 1e-05
      %v6609 = vrsqrt.pop %v6608
      %v6610 = vadd.f32 %v6473, %v6402
      %v6611 = vsel %vm3441, %v6610, 0.0
      %6612 = vadd.xlane.f32.xlu0 %v6611
      %v6613 = vpop.xlane.xlu0 %6612
      %v6614 = vmul.f32 %v6613, %v3445
      %v6615 = vsub.f32 %v6610, %v6614
      %v6616 = vmul.f32 %v6615, 256.0
      %v6617 = vmul.f32 %v6616, %v6615
      %v6618 = vadd.f32 %v6606, %v6617
      %v6619 = vsel %vm3441, %v6618, 0.0
      %6620 = vadd.xlane.f32.xlu0 %v6619
      %v6621 = vpop.xlane.xlu0 %6620
      %v6622 = vmul.f32 %v6621, 0.0009775171
      %v6623 = vadd.f32 %v6622, 1e-05
      %v6624 = vrsqrt.pop %v6623
      %v6625 = vmul.f32 %v6403, %v6609
      %v6626 = vsub.f32 1.0, %v6403
      %v6627 = vmul.f32 %v6626, %v6624
      %v6628 = vadd.f32 %v6625, %v6627
      %v6629 = vmul.f32 %v361, %v6628
      %v6630 = vsub.f32 %v6402, %v6614
      %v6631 = vmul.f32 %v6627, %v6630
      %v6632 = vmul.f32 %v6625, %v6473
      %v6633 = vsub.f32 %v6631, %v6632
      %v6634 = vmul.f32 %v361, %v6633
      %v6635 = vadd.f32 %v6634, %v362
      %v6637 = vlaneseq
      %v6638 = vshrl.u32 %v6637, 7
      %v6639 = vsub.s32 0, %v6638
      %v6640 = vrot.slane %v6629, %v6639
      %v6642 = vmul.f32 %v6370, %v6640
      %v6643 = vmul.f32 %v6371, %v6640
      %v6644 = vmul.f32 %v6372, %v6640
      %v6645 = vmul.f32 %v6373, %v6640
      %v6646 = vmul.f32 %v6374, %v6640
      %v6647 = vmul.f32 %v6375, %v6640
      %v6648 = vmul.f32 %v6376, %v6640
      %v6649 = vmul.f32 %v6377, %v6640
      %v6650 = vmul.f32 %v6378, %v6640
      %v6651 = vmul.f32 %v6379, %v6640
      %v6652 = vmul.f32 %v6380, %v6640
      %v6653 = vmul.f32 %v6381, %v6640
      %v6654 = vmul.f32 %v6382, %v6640
      %v6655 = vmul.f32 %v6383, %v6640
      %v6656 = vmul.f32 %v6384, %v6640
      %v6657 = vmul.f32 %v6385, %v6640
      %v6658 = vmul.f32 %v6386, %v6640
      %v6659 = vmul.f32 %v6387, %v6640
      %v6660 = vmul.f32 %v6388, %v6640
      %v6661 = vmul.f32 %v6389, %v6640
      %v6662 = vmul.f32 %v6390, %v6640
      %v6663 = vmul.f32 %v6391, %v6640
      %v6664 = vmul.f32 %v6392, %v6640
      %v6665 = vmul.f32 %v6393, %v6640
      %v6666 = vmul.f32 %v6394, %v6640
      %v6667 = vmul.f32 %v6395, %v6640
      %v6668 = vmul.f32 %v6396, %v6640
      %v6669 = vmul.f32 %v6397, %v6640
      %v6670 = vmul.f32 %v6398, %v6640
      %v6671 = vmul.f32 %v6399, %v6640
      %v6672 = vmul.f32 %v6400, %v6640
      %v6673 = vmul.f32 %v6401, %v6640
      %v6675 = vlaneseq
      %v6676 = vshrl.u32 %v6675, 7
      %v6677 = vsub.s32 0, %v6676
      %v6678 = vrot.slane %v6635, %v6677
      %v6680 = vadd.f32 %v6642, %v6678
      %v6681 = vadd.f32 %v6643, %v6678
      %v6682 = vadd.f32 %v6644, %v6678
      %v6683 = vadd.f32 %v6645, %v6678
      %v6684 = vadd.f32 %v6646, %v6678
      %v6685 = vadd.f32 %v6647, %v6678
      %v6686 = vadd.f32 %v6648, %v6678
      %v6687 = vadd.f32 %v6649, %v6678
      %v6688 = vadd.f32 %v6650, %v6678
      %v6689 = vadd.f32 %v6651, %v6678
      %v6690 = vadd.f32 %v6652, %v6678
      %v6691 = vadd.f32 %v6653, %v6678
      %v6692 = vadd.f32 %v6654, %v6678
      %v6693 = vadd.f32 %v6655, %v6678
      %v6694 = vadd.f32 %v6656, %v6678
      %v6695 = vadd.f32 %v6657, %v6678
      %v6696 = vadd.f32 %v6658, %v6678
      %v6697 = vadd.f32 %v6659, %v6678
      %v6698 = vadd.f32 %v6660, %v6678
      %v6699 = vadd.f32 %v6661, %v6678
      %v6700 = vadd.f32 %v6662, %v6678
      %v6701 = vadd.f32 %v6663, %v6678
      %v6702 = vadd.f32 %v6664, %v6678
      %v6703 = vadd.f32 %v6665, %v6678
      %v6704 = vadd.f32 %v6666, %v6678
      %v6705 = vadd.f32 %v6667, %v6678
      %v6706 = vadd.f32 %v6668, %v6678
      %v6707 = vadd.f32 %v6669, %v6678
      %v6708 = vadd.f32 %v6670, %v6678
      %v6709 = vadd.f32 %v6671, %v6678
      %v6710 = vadd.f32 %v6672, %v6678
      %v6711 = vadd.f32 %v6673, %v6678
      %v6712 = vld [vmem:[%s349] sm:$0xff]
      %v6713 = vld [vmem:[%s349 + $0x8] sm:$0xff]
      %v6714 = vld [vmem:[%s349 + $0x10] sm:$0xff]
      %v6715 = vld [vmem:[%s349 + $0x18] sm:$0xff]
      %v6716 = vld [vmem:[%s349 + $0x20] sm:$0xff]
      %v6717 = vld [vmem:[%s349 + $0x28] sm:$0xff]
      %v6718 = vld [vmem:[%s349 + $0x30] sm:$0xff]
      %v6719 = vld [vmem:[%s349 + $0x38] sm:$0xff]
      %v6720 = vld [vmem:[%s349 + $0x40] sm:$0xff]
      %v6721 = vld [vmem:[%s349 + $0x48] sm:$0xff]
      %v6722 = vld [vmem:[%s349 + $0x50] sm:$0xff]
      %v6723 = vld [vmem:[%s349 + $0x58] sm:$0xff]
      %v6724 = vld [vmem:[%s349 + $0x60] sm:$0xff]
      %v6725 = vld [vmem:[%s349 + $0x68] sm:$0xff]
      %v6726 = vld [vmem:[%s349 + $0x70] sm:$0xff]
      %v6727 = vld [vmem:[%s349 + $0x78] sm:$0xff]
      %v6728 = vld [vmem:[%s349 + $0x80] sm:$0xff]
      %v6729 = vld [vmem:[%s349 + $0x88] sm:$0xff]
      %v6730 = vld [vmem:[%s349 + $0x90] sm:$0xff]
      %v6731 = vld [vmem:[%s349 + $0x98] sm:$0xff]
      %v6732 = vld [vmem:[%s349 + $0xa0] sm:$0xff]
      %v6733 = vld [vmem:[%s349 + $0xa8] sm:$0xff]
      %v6734 = vld [vmem:[%s349 + $0xb0] sm:$0xff]
      %v6735 = vld [vmem:[%s349 + $0xb8] sm:$0xff]
      %v6736 = vld [vmem:[%s349 + $0xc0] sm:$0xff]
      %v6737 = vld [vmem:[%s349 + $0xc8] sm:$0xff]
      %v6738 = vld [vmem:[%s349 + $0xd0] sm:$0xff]
      %v6739 = vld [vmem:[%s349 + $0xd8] sm:$0xff]
      %v6740 = vld [vmem:[%s349 + $0xe0] sm:$0xff]
      %v6741 = vld [vmem:[%s349 + $0xe8] sm:$0xff]
      %v6742 = vld [vmem:[%s349 + $0xf0] sm:$0xff]
      %v6743 = vld [vmem:[%s349 + $0xf8] sm:$0xff]
      %v6744 = vadd.f32 %v6680, %v6712
      %v6745 = vadd.f32 %v6681, %v6713
      %v6746 = vadd.f32 %v6682, %v6714
      %v6747 = vadd.f32 %v6683, %v6715
      %v6748 = vadd.f32 %v6684, %v6716
      %v6749 = vadd.f32 %v6685, %v6717
      %v6750 = vadd.f32 %v6686, %v6718
      %v6751 = vadd.f32 %v6687, %v6719
      %v6752 = vadd.f32 %v6688, %v6720
      %v6753 = vadd.f32 %v6689, %v6721
      %v6754 = vadd.f32 %v6690, %v6722
      %v6755 = vadd.f32 %v6691, %v6723
      %v6756 = vadd.f32 %v6692, %v6724
      %v6757 = vadd.f32 %v6693, %v6725
      %v6758 = vadd.f32 %v6694, %v6726
      %v6759 = vadd.f32 %v6695, %v6727
      %v6760 = vadd.f32 %v6696, %v6728
      %v6761 = vadd.f32 %v6697, %v6729
      %v6762 = vadd.f32 %v6698, %v6730
      %v6763 = vadd.f32 %v6699, %v6731
      %v6764 = vadd.f32 %v6700, %v6732
      %v6765 = vadd.f32 %v6701, %v6733
      %v6766 = vadd.f32 %v6702, %v6734
      %v6767 = vadd.f32 %v6703, %v6735
      %v6768 = vadd.f32 %v6704, %v6736
      %v6769 = vadd.f32 %v6705, %v6737
      %v6770 = vadd.f32 %v6706, %v6738
      %v6771 = vadd.f32 %v6707, %v6739
      %v6772 = vadd.f32 %v6708, %v6740
      %v6773 = vadd.f32 %v6709, %v6741
      %v6774 = vadd.f32 %v6710, %v6742
      %v6775 = vadd.f32 %v6711, %v6743
      %6776 = vst.msk [vmem:[%s360] sm:$0xff] %vm620, %v6744
      %6777 = vst.msk [vmem:[%s360 + $0x8] sm:$0xff] %vm620, %v6745
      %6778 = vst.msk [vmem:[%s360 + $0x10] sm:$0xff] %vm620, %v6746
      %6779 = vst.msk [vmem:[%s360 + $0x18] sm:$0xff] %vm620, %v6747
      %6780 = vst.msk [vmem:[%s360 + $0x20] sm:$0xff] %vm620, %v6748
      %6781 = vst.msk [vmem:[%s360 + $0x28] sm:$0xff] %vm620, %v6749
      %6782 = vst.msk [vmem:[%s360 + $0x30] sm:$0xff] %vm620, %v6750
      %6783 = vst.msk [vmem:[%s360 + $0x38] sm:$0xff] %vm620, %v6751
      %6784 = vst.msk [vmem:[%s360 + $0x40] sm:$0xff] %vm620, %v6752
      %6785 = vst.msk [vmem:[%s360 + $0x48] sm:$0xff] %vm620, %v6753
      %6786 = vst.msk [vmem:[%s360 + $0x50] sm:$0xff] %vm620, %v6754
      %6787 = vst.msk [vmem:[%s360 + $0x58] sm:$0xff] %vm620, %v6755
      %6788 = vst.msk [vmem:[%s360 + $0x60] sm:$0xff] %vm620, %v6756
      %6789 = vst.msk [vmem:[%s360 + $0x68] sm:$0xff] %vm620, %v6757
      %6790 = vst.msk [vmem:[%s360 + $0x70] sm:$0xff] %vm620, %v6758
      %6791 = vst.msk [vmem:[%s360 + $0x78] sm:$0xff] %vm620, %v6759
      %6792 = vst.msk [vmem:[%s360 + $0x80] sm:$0xff] %vm620, %v6760
      %6793 = vst.msk [vmem:[%s360 + $0x88] sm:$0xff] %vm620, %v6761
      %6794 = vst.msk [vmem:[%s360 + $0x90] sm:$0xff] %vm620, %v6762
      %6795 = vst.msk [vmem:[%s360 + $0x98] sm:$0xff] %vm620, %v6763
      %6796 = vst.msk [vmem:[%s360 + $0xa0] sm:$0xff] %vm620, %v6764
      %6797 = vst.msk [vmem:[%s360 + $0xa8] sm:$0xff] %vm620, %v6765
      %6798 = vst.msk [vmem:[%s360 + $0xb0] sm:$0xff] %vm620, %v6766
      %6799 = vst.msk [vmem:[%s360 + $0xb8] sm:$0xff] %vm620, %v6767
      %6800 = vst.msk [vmem:[%s360 + $0xc0] sm:$0xff] %vm620, %v6768
      %6801 = vst.msk [vmem:[%s360 + $0xc8] sm:$0xff] %vm620, %v6769
      %6802 = vst.msk [vmem:[%s360 + $0xd0] sm:$0xff] %vm620, %v6770
      %6803 = vst.msk [vmem:[%s360 + $0xd8] sm:$0xff] %vm620, %v6771
      %6804 = vst.msk [vmem:[%s360 + $0xe0] sm:$0xff] %vm620, %v6772
      %6805 = vst.msk [vmem:[%s360 + $0xe8] sm:$0xff] %vm620, %v6773
      %6806 = vst.msk [vmem:[%s360 + $0xf0] sm:$0xff] %vm620, %v6774
      %6807 = vst.msk [vmem:[%s360 + $0xf8] sm:$0xff] %vm620, %v6775
      %p6808 = scmp.lt.s32.totalorder %s20, 1
      %s6809 = scalar_select %p6808, %s20, 1
      %s6810 = smul.addr %s6809, 32
      %s6811 = smul.addr %s6810, 8
      %s6812 = scalar_lea.vmem %s9, %s6811
      // Predicated region
      $region57: #{resnet_adailn_block.1} parent=55 // pred_check
        %p6813 = pneg %p242
      $region58: #{resnet_adailn_block.1} parent=55 // pred_check_branch
        %6815 = sbr.rel (%p6813) target = $region60
      $region59: #{resnet_adailn_block.1} parent=55 // pred_region
        _
      $region60: #{resnet_adailn_block.1} parent=55 // pred_fallthru
        _
    $region56: #{resnet_adailn_block.1} parent=5 // pred_fallthru
      _
    %p6816 = scmp.le.s32.totalorder 2, %s15
    // Predicated region
    $region61: #{resnet_adailn_block.1} parent=5 // pred_check
      %p6817 = pneg %p6816
    $region62: #{resnet_adailn_block.1} parent=5 // pred_check_branch
      %6819 = sbr.rel (%p6817) target = $region64
    $region63: #{resnet_adailn_block.1} parent=5 // pred_region
      %s6820 = ssub.s32 %s15, 2
      // Predicated region
      $region65: #{resnet_adailn_block.1} parent=63 // pred_check
        %p6821 = pneg %p248
      $region66: #{resnet_adailn_block.1} parent=63 // pred_check_branch
        %6823 = sbr.rel (%p6821) target = $region68
      $region67: #{resnet_adailn_block.1} parent=63 // pred_region
        %p6824 = scmp.lt.s32.totalorder %s21, 1
        %s6825 = scalar_select %p6824, %s21, 1
        %s6826 = smul.addr %s6825, 32
        %s6827 = smul.addr %s6826, 8
        %s6828 = scalar_lea.vmem %s9, %s6827
      $region68: #{resnet_adailn_block.1} parent=63 // pred_fallthru
        _
    $region64: #{resnet_adailn_block.1} parent=5 // pred_fallthru
      _
  $region6: #{resnet_adailn_block.1} parent=0 // loop_footer
    %s19 = sadd.s32 1, %s15
  $region7: #{resnet_adailn_block.1} parent=0 // loop_footer_branch
    %14 = sbr.rel target = $region3
  $region8: #{resnet_adailn_block.1} parent=0 // loop_exit
    _

</llo_original>
